<compile_context>
chip_gen: v7x
topology: tpu7x:2x2x1
jax: 0.10.0
libtpu: 0.0.40
codegen_flags: <defaults>
</compile_context>

<pallas_src>
import functools

import jax
import jax.numpy as jnp
from jax.experimental import pallas as pl
from jax.experimental.pallas import tpu as pltpu


# --------------------------------------------------------------------------
# Fused kernel: conv1+bn1+relu -> conv2+bn2 -> CoordAtt -> +residual -> relu
# One grid step == one batch tile of B_TILE images, all lane-dense (rows, W*C).
# --------------------------------------------------------------------------
def _fused_block_kernel(bt, h,
                        x_ref,
                        m1_ref, bn1s_ref, bn1b_ref,
                        m2_ref, bn2s_ref, bn2b_ref,
                        wh1_ref, b1h_ref, s1h_ref, t1h_ref, whe_ref, bhe_ref,
                        ww1_ref, b1w_ref, s1w_ref, t1w_ref, wwe_ref, bwe_ref,
                        o_ref):
    f32, bf16 = jnp.float32, jnp.bfloat16
    wc = x_ref.shape[2]
    m = bt * h

    x3 = x_ref[...].astype(f32)          # (bt, h, wc) residual, f32 for VPU
    xf = x3.reshape(m, wc)               # batch folded into matmul M

    # Per-image row masks (hoisted; also the H-direction zero padding).
    row = jax.lax.broadcasted_iota(jnp.int32, (m, wc), 0) % h
    first_row = row == 0
    last_row = row == (h - 1)

    def conv3x3(a, m_ref):
        # 3x3 "SAME" conv, lane-dense:
        #  * ky (vertical) shifts on the XLU (pltpu.roll) + VPU row masks;
        #    both slots are otherwise idle, so the shifts are ~free and the
        #    MXU only sees the real contraction.
        #  * kx/Cin contraction: ONE K=3*W*Cin matmul against the stacked
        #    banded matrix (W-direction padding implicit in the band).
        a_dn = jnp.where(first_row, 0.0, pltpu.roll(a, 1, 0))       # in[r-1]
        a_up = jnp.where(last_row, 0.0, pltpu.roll(a, m - 1, 0))    # in[r+1]
        a3 = jnp.concatenate([a_dn, a, a_up], axis=1).astype(bf16)  # (m, 3wc)
        return jnp.dot(a3, m_ref[...], preferred_element_type=f32)

    # conv1 -> bn1 (folded) -> relu ; conv2 -> bn2 (folded).  f32 accumulate.
    h1 = jnp.maximum(conv3x3(xf, m1_ref) * bn1s_ref[...] + bn1b_ref[...], 0.0)
    y = conv3x3(h1, m2_ref) * bn2s_ref[...] + bn2b_ref[...]

    def h_swish(z):
        return z * (jnp.clip(z + 3.0, 0.0, 6.0) * (1.0 / 6.0))

    yb = y.astype(bf16)

    # ---- CoordAtt, h branch: 1/W pooling folded into wh1; conv_h pre-tiled
    # so the gate comes out already broadcast to (m, W*C).
    zh = jnp.dot(yb, wh1_ref[...], preferred_element_type=f32) + b1h_ref[...]
    zh = h_swish(zh * s1h_ref[...] + t1h_ref[...])
    ah = jax.nn.sigmoid(
        jnp.dot(zh.astype(bf16), whe_ref[...],
                preferred_element_type=f32) + bhe_ref[...])          # (m, wc)

    # ---- CoordAtt, w branch: per-image H-mean on a (bt, h, wc) view (sublane
    # reduce); block-diagonal matmuls keep the per-column stats lane-dense.
    y3 = y.reshape(bt, h, wc)
    xw = jnp.mean(y3, axis=1)                                        # (bt, wc)
    zw = jnp.dot(xw.astype(bf16), ww1_ref[...],
                 preferred_element_type=f32) + b1w_ref[...]          # (bt, wm)
    zw = h_swish(zw * s1w_ref[...] + t1w_ref[...])
    aw = jax.nn.sigmoid(
        jnp.dot(zw.astype(bf16), wwe_ref[...],
                preferred_element_type=f32) + bwe_ref[...])          # (bt, wc)

    out = y3 * ah.reshape(bt, h, wc) * aw[:, None, :] + x3           # residual
    o_ref[...] = jnp.maximum(out, 0.0).astype(bf16)                  # bf16 out


# --------------------------------------------------------------------------
# Wrapper: weight preprocessing + pallas_call (lane-dense bf16 in/out)
# --------------------------------------------------------------------------
def _banded_conv_mats(w_hwio, W):
    """(3,3,Cin,Cout) -> (3*W*Cin, W*Cout) stacked banded matrices (ky-major).

    M[ky*W*Cin + wi*Cin + ci, wo*Cout + co] = w[ky, wi-wo+1, ci, co] when
    |wi-wo| <= 1 else 0, so a lane-dense row (3*W*Cin,) = [row_{h-1}, row_h,
    row_{h+1}] @ M is the full kx/Cin contraction of a padded 3x3 conv.
    """
    wi = jnp.arange(W)[:, None]
    wo = jnp.arange(W)[None, :]
    kx = wi - wo + 1
    valid = ((kx >= 0) & (kx <= 2)).astype(w_hwio.dtype)
    m4 = w_hwio[:, jnp.clip(kx, 0, 2)] * valid[None, :, :, None, None]
    Cin, Cout = w_hwio.shape[2], w_hwio.shape[3]
    m = jnp.transpose(m4, (0, 1, 3, 2, 4)).reshape(3, W * Cin, W * Cout)
    return m.reshape(3 * W * Cin, W * Cout)


def _const(shape):
    nd = len(shape)
    return pl.BlockSpec(shape, lambda n, _nd=nd: (0,) * _nd)


def block_coordatt_ld(x_ld, p):
    """Fused BasicBlock+CoordAtt on lane-dense (N, H, W*C) bf16 activations.

    Chained blocks (layer1..layer4) should pass this bf16 lane-dense layout
    straight through; NCHW<->lane-dense transposes belong at the network
    entry/exit only.
    """
    N, H, WC = x_ld.shape
    C = p["w_conv1"].shape[2]
    W = WC // C
    MIP = p["ca_w1"].shape[1]
    WM = W * MIP
    assert WC % 128 == 0 and WM % 128 == 0, "demo assumes lane-dense W*C, W*MIP"
    assert (W & (W - 1)) == 0, "1/W mean fold is exact only for power-of-two W"

    f32, bf16 = jnp.float32, jnp.bfloat16

    # 2 batch tiles -> one per TensorCore on v7x (grid axis "parallel");
    # on 1-TC chips (v5e/v6e) the second step only costs ~0.35 us overhead.
    n_steps = 2 if (N >= 2 and N % 2 == 0) else 1
    bt = N // n_steps

    # Conv weights -> bf16 stacked banded matrices (cacheable across calls).
    m1 = _banded_conv_mats(p["w_conv1"].astype(bf16), W)     # (3*WC, WC)
    m2 = _banded_conv_mats(p["w_conv2"].astype(bf16), W)

    # Folded BN scale/bias tiled to the lane-dense layout (index = w*C + c).
    bn1s = jnp.tile(p["bn1_scale"], W).reshape(1, WC).astype(f32)
    bn1b = jnp.tile(p["bn1_bias"], W).reshape(1, WC).astype(f32)
    bn2s = jnp.tile(p["bn2_scale"], W).reshape(1, WC).astype(f32)
    bn2b = jnp.tile(p["bn2_bias"], W).reshape(1, WC).astype(f32)

    w1_b = p["ca_w1"].astype(bf16)     # (C, MIP)
    wh_b = p["ca_wh"].astype(bf16)     # (MIP, C)
    ww_b = p["ca_ww"].astype(bf16)     # (MIP, C)

    # h branch: 1/W mean folded into the first matmul (exact: W power of two);
    # conv_h tiled so the gate is emitted directly in the (m, W*C) layout.
    wh1 = (jnp.tile(w1_b, (W, 1)) / W).astype(bf16)          # (W*C, MIP)
    b1h = p["ca_b1"].reshape(1, MIP).astype(f32)
    s1h = p["ca_bn_scale"].reshape(1, MIP).astype(f32)
    t1h = p["ca_bn_bias"].reshape(1, MIP).astype(f32)
    whe = jnp.tile(wh_b, (1, W))                             # (MIP, W*C)
    bhe = jnp.tile(p["ca_bh"], W).reshape(1, WC).astype(f32)

    # w branch: block-diagonal matmuls keep the per-column stats lane-dense.
    eye_w = jnp.eye(W, dtype=bf16)
    ww1 = jnp.kron(eye_w, w1_b)                              # (W*C, W*MIP)
    b1w = jnp.tile(p["ca_b1"], W).reshape(1, WM).astype(f32)
    s1w = jnp.tile(p["ca_bn_scale"], W).reshape(1, WM).astype(f32)
    t1w = jnp.tile(p["ca_bn_bias"], W).reshape(1, WM).astype(f32)
    wwe = jnp.kron(eye_w, ww_b)                              # (W*MIP, W*C)
    bwe = jnp.tile(p["ca_bw"], W).reshape(1, WC).astype(f32)

    kernel = functools.partial(_fused_block_kernel, bt, H)

    return pl.pallas_call(
        kernel,
        out_shape=jax.ShapeDtypeStruct((N, H, WC), bf16),
        grid=(n_steps,),
        in_specs=[
            pl.BlockSpec((bt, H, WC), lambda n: (n, 0, 0)),          # x
            _const((3 * WC, WC)), _const((1, WC)), _const((1, WC)),  # conv1/bn1
            _const((3 * WC, WC)), _const((1, WC)), _const((1, WC)),  # conv2/bn2
            _const((WC, MIP)), _const((1, MIP)), _const((1, MIP)), _const((1, MIP)),
            _const((MIP, WC)), _const((1, WC)),                      # h branch
            _const((WC, WM)), _const((1, WM)), _const((1, WM)), _const((1, WM)),
            _const((WM, WC)), _const((1, WC)),                       # w branch
        ],
        out_specs=pl.BlockSpec((bt, H, WC), lambda n: (n, 0, 0)),
        compiler_params=pltpu.CompilerParams(
            dimension_semantics=("parallel",)),
    )(x_ld, m1, bn1s, bn1b, m2, bn2s, bn2b,
      wh1, b1h, s1h, t1h, whe, bhe,
      ww1, b1w, s1w, t1w, wwe, bwe)


# ---- Network-boundary layout plumbing (done ONCE, not per block) ----------
def nchw_to_ld(x_nchw):
    N, C, H, W = x_nchw.shape
    return jnp.transpose(x_nchw, (0, 2, 3, 1)).reshape(N, H, W * C).astype(jnp.bfloat16)


def ld_to_nchw(x_ld, C):
    N, H, WC = x_ld.shape
    W = WC // C
    return jnp.transpose(x_ld.reshape(N, H, W, C).astype(jnp.float32), (0, 3, 1, 2))


# --------------------------------------------------------------------------
# Deterministic synthetic parameters (inference-mode folded BN)
# --------------------------------------------------------------------------
def fold_bn(gamma, beta, mean, var, eps=1e-5):
    scale = gamma * jax.lax.rsqrt(var + eps)
    return scale, beta - mean * scale


def make_params(key, C, reduction=32):
    MIP = max(8, C // reduction)
    ks = jax.random.split(key, 24)
    nrm = lambda k, shape: 0.1 * jax.random.normal(k, shape, jnp.float32)
    p = {"w_conv1": nrm(ks[0], (3, 3, C, C)),
         "w_conv2": nrm(ks[1], (3, 3, C, C))}
    for i, name in enumerate(("bn1", "bn2")):
        g = 1.0 + nrm(ks[2 + 4 * i], (C,))
        b = nrm(ks[3 + 4 * i], (C,))
        m = nrm(ks[4 + 4 * i], (C,))
        v = 0.5 + jnp.abs(jax.random.normal(ks[5 + 4 * i], (C,), jnp.float32))
        p[name + "_scale"], p[name + "_bias"] = fold_bn(g, b, m, v)
    p["ca_w1"] = nrm(ks[10], (C, MIP))
    p["ca_b1"] = nrm(ks[11], (MIP,))
    g = 1.0 + nrm(ks[12], (MIP,))
    b = nrm(ks[13], (MIP,))
    m = nrm(ks[14], (MIP,))
    v = 0.5 + jnp.abs(jax.random.normal(ks[15], (MIP,), jnp.float32))
    p["ca_bn_scale"], p["ca_bn_bias"] = fold_bn(g, b, m, v)
    p["ca_wh"] = nrm(ks[16], (MIP, C))
    p["ca_bh"] = nrm(ks[17], (C,))
    p["ca_ww"] = nrm(ks[18], (MIP, C))
    p["ca_bw"] = nrm(ks[19], (C,))
    return p


# --------------------------------------------------------------------------
# Pure-JAX reference (independent: lax.conv + einsum), mirroring bf16 casts
# --------------------------------------------------------------------------
def reference(x_nchw, p):
    f32, bf16 = jnp.float32, jnp.bfloat16
    hi = jax.lax.Precision.HIGHEST
    b16 = lambda a: a.astype(bf16).astype(f32)

    x = jnp.transpose(x_nchw, (0, 2, 3, 1)).astype(bf16)          # NHWC bf16
    dn = jax.lax.conv_dimension_numbers(x.shape, p["w_conv1"].shape,
                                        ("NHWC", "HWIO", "NHWC"))
    conv = lambda a, w: jax.lax.conv_general_dilated(
        a, w.astype(bf16), (1, 1), "SAME", dimension_numbers=dn,
        preferred_element_type=f32)

    h1 = jnp.maximum(conv(x, p["w_conv1"]) * p["bn1_scale"] + p["bn1_bias"], 0.0)
    y = conv(h1.astype(bf16), p["w_conv2"]) * p["bn2_scale"] + p["bn2_bias"]

    hsw = lambda z: z * (jnp.clip(z + 3.0, 0.0, 6.0) * (1.0 / 6.0))
    w1, wh, ww = b16(p["ca_w1"]), b16(p["ca_wh"]), b16(p["ca_ww"])

    xh = jnp.mean(y, axis=2)                                      # (N, H, C)
    xw = jnp.mean(y, axis=1)                                      # (N, W, C)
    zh = jnp.einsum("nhc,cm->nhm", b16(xh), w1, precision=hi) + p["ca_b1"]
    zh = hsw(zh * p["ca_bn_scale"] + p["ca_bn_bias"])
    zw = jnp.einsum("nwc,cm->nwm", b16(xw), w1, precision=hi) + p["ca_b1"]
    zw = hsw(zw * p["ca_bn_scale"] + p["ca_bn_bias"])
    ah = jax.nn.sigmoid(jnp.einsum("nhm,mc->nhc", b16(zh), wh, precision=hi)
                        + p["ca_bh"])
    aw = jax.nn.sigmoid(jnp.einsum("nwm,mc->nwc", b16(zw), ww, precision=hi)
                        + p["ca_bw"])
    out = y * ah[:, :, None, :] * aw[:, None, :, :] + x.astype(f32)
    return jnp.transpose(jnp.maximum(out, 0.0), (0, 3, 1, 2))


if __name__ == "__main__":
    # inplanes == planes == 8; W*C = 128 lanes; N=8 folds 4 images per grid step
    N, C, H, W = 8, 8, 16, 16
    key = jax.random.PRNGKey(0)
    kx, kp = jax.random.split(key)
    x = jax.random.normal(kx, (N, C, H, W), jnp.float32)
    params = make_params(kp, C)

    @jax.jit
    def fwd(x_nchw, p):
        # NCHW <-> lane-dense only at the network boundary; chained blocks
        # would pass the bf16 lane-dense activations straight through.
        return ld_to_nchw(block_coordatt_ld(nchw_to_ld(x_nchw), p), C)

    out = jax.block_until_ready(fwd(x, params))
    ref = jax.block_until_ready(jax.jit(reference)(x, params))

    assert out.shape == (N, C, H, W)
    diff = jnp.abs(out - ref)
    max_err = float(jnp.max(diff))
    mean_err = float(jnp.mean(diff))
    # Kernel output is bf16 at the block boundary -> compare at bf16 accuracy.
    assert max_err < 5e-2, f"max abs err {max_err}"
    assert mean_err < 1e-2, f"mean abs err {mean_err}"
    print("KERNEL_OK")
</pallas_src>

<mosaic_0001>
module attributes {stable_mosaic.version = 11 : i64} {
  func.func @_fused_block_kernel(%arg0: i32, %arg1: memref<4x16x128xbf16, #tpu.memory_space<vmem>>, %arg2: memref<384x128xbf16, #tpu.memory_space<vmem>>, %arg3: memref<1x128xf32, #tpu.memory_space<vmem>>, %arg4: memref<1x128xf32, #tpu.memory_space<vmem>>, %arg5: memref<384x128xbf16, #tpu.memory_space<vmem>>, %arg6: memref<1x128xf32, #tpu.memory_space<vmem>>, %arg7: memref<1x128xf32, #tpu.memory_space<vmem>>, %arg8: memref<128x8xbf16, #tpu.memory_space<vmem>>, %arg9: memref<1x8xf32, #tpu.memory_space<vmem>>, %arg10: memref<1x8xf32, #tpu.memory_space<vmem>>, %arg11: memref<1x8xf32, #tpu.memory_space<vmem>>, %arg12: memref<8x128xbf16, #tpu.memory_space<vmem>>, %arg13: memref<1x128xf32, #tpu.memory_space<vmem>>, %arg14: memref<128x128xbf16, #tpu.memory_space<vmem>>, %arg15: memref<1x128xf32, #tpu.memory_space<vmem>>, %arg16: memref<1x128xf32, #tpu.memory_space<vmem>>, %arg17: memref<1x128xf32, #tpu.memory_space<vmem>>, %arg18: memref<128x128xbf16, #tpu.memory_space<vmem>>, %arg19: memref<1x128xf32, #tpu.memory_space<vmem>>, %arg20: memref<4x16x128xbf16, #tpu.memory_space<vmem>>) attributes {dimension_semantics = [#tpu.dimension_semantics<parallel>], iteration_bounds = array<i64: 2>, scalar_prefetch = 0 : i64, scratch_operands = 0 : i64, tpu.core_type = #tpu.core_type<tc>, window_params = [{transform_indices = @transform_0, window_bounds = array<i64: 4, 16, 128>}, {pipeline_mode = #tpu.pipeline_mode<synchronous>, transform_indices = @transform_1, window_bounds = array<i64: 384, 128>}, {pipeline_mode = #tpu.pipeline_mode<synchronous>, transform_indices = @transform_2, window_bounds = array<i64: 1, 128>}, {pipeline_mode = #tpu.pipeline_mode<synchronous>, transform_indices = @transform_3, window_bounds = array<i64: 1, 128>}, {pipeline_mode = #tpu.pipeline_mode<synchronous>, transform_indices = @transform_4, window_bounds = array<i64: 384, 128>}, {pipeline_mode = #tpu.pipeline_mode<synchronous>, transform_indices = @transform_5, window_bounds = array<i64: 1, 128>}, {pipeline_mode = #tpu.pipeline_mode<synchronous>, transform_indices = @transform_6, window_bounds = array<i64: 1, 128>}, {pipeline_mode = #tpu.pipeline_mode<synchronous>, transform_indices = @transform_7, window_bounds = array<i64: 128, 8>}, {pipeline_mode = #tpu.pipeline_mode<synchronous>, transform_indices = @transform_8, window_bounds = array<i64: 1, 8>}, {pipeline_mode = #tpu.pipeline_mode<synchronous>, transform_indices = @transform_9, window_bounds = array<i64: 1, 8>}, {pipeline_mode = #tpu.pipeline_mode<synchronous>, transform_indices = @transform_10, window_bounds = array<i64: 1, 8>}, {pipeline_mode = #tpu.pipeline_mode<synchronous>, transform_indices = @transform_11, window_bounds = array<i64: 8, 128>}, {pipeline_mode = #tpu.pipeline_mode<synchronous>, transform_indices = @transform_12, window_bounds = array<i64: 1, 128>}, {pipeline_mode = #tpu.pipeline_mode<synchronous>, transform_indices = @transform_13, window_bounds = array<i64: 128, 128>}, {pipeline_mode = #tpu.pipeline_mode<synchronous>, transform_indices = @transform_14, window_bounds = array<i64: 1, 128>}, {pipeline_mode = #tpu.pipeline_mode<synchronous>, transform_indices = @transform_15, window_bounds = array<i64: 1, 128>}, {pipeline_mode = #tpu.pipeline_mode<synchronous>, transform_indices = @transform_16, window_bounds = array<i64: 1, 128>}, {pipeline_mode = #tpu.pipeline_mode<synchronous>, transform_indices = @transform_17, window_bounds = array<i64: 128, 128>}, {pipeline_mode = #tpu.pipeline_mode<synchronous>, transform_indices = @transform_18, window_bounds = array<i64: 1, 128>}, {transform_indices = @transform_19, window_bounds = array<i64: 4, 16, 128>}]} {
    %c0 = arith.constant 0 : index
    %c0_0 = arith.constant 0 : index
    %c0_1 = arith.constant 0 : index
    %0 = vector.load %arg1[%c0, %c0_0, %c0_1] : memref<4x16x128xbf16, #tpu.memory_space<vmem>>, vector<4x16x128xbf16>
    %1 = arith.extf %0 : vector<4x16x128xbf16> to vector<4x16x128xf32>
    %2 = vector.shape_cast %1 : vector<4x16x128xf32> to vector<64x128xf32>
    %3 = tpu.iota {dimensions = array<i32: 0>} : vector<64x128xi32>
    %c16_i32 = arith.constant 16 : i32
    %c0_i32 = arith.constant 0 : i32
    %4 = arith.cmpi eq, %c16_i32, %c0_i32 : i32
    %c1_i32 = arith.constant 1 : i32
    %5 = arith.select %4, %c1_i32, %c16_i32 : i32
    %6 = vector.broadcast %5 : i32 to vector<64x128xi32>
    %7 = arith.remsi %3, %6 : vector<64x128xi32>
    %c0_i32_2 = arith.constant 0 : i32
    %8 = vector.broadcast %c0_i32_2 : i32 to vector<64x128xi32>
    %9 = arith.cmpi ne, %7, %8 : vector<64x128xi32>
    %c0_i32_3 = arith.constant 0 : i32
    %10 = vector.broadcast %c0_i32_3 : i32 to vector<64x128xi32>
    %11 = arith.cmpi slt, %7, %10 : vector<64x128xi32>
    %c0_i32_4 = arith.constant 0 : i32
    %12 = arith.cmpi slt, %5, %c0_i32_4 : i32
    %13 = vector.broadcast %12 : i1 to vector<64x128xi1>
    %14 = vector.broadcast %13 : vector<64x128xi1> to vector<64x128xi1>
    %15 = arith.xori %11, %14 : vector<64x128xi1>
    %16 = arith.andi %15, %9 : vector<64x128xi1>
    %17 = vector.broadcast %5 : i32 to vector<64x128xi32>
    %18 = arith.addi %7, %17 : vector<64x128xi32>
    %19 = arith.select %16, %18, %7 : vector<64x128xi1>, vector<64x128xi32>
    %c0_i32_5 = arith.constant 0 : i32
    %20 = vector.broadcast %c0_i32_5 : i32 to vector<64x128xi32>
    %21 = arith.cmpi eq, %19, %20 : vector<64x128xi32>
    %c15_i32 = arith.constant 15 : i32
    %22 = vector.broadcast %c15_i32 : i32 to vector<64x128xi32>
    %23 = arith.cmpi eq, %19, %22 : vector<64x128xi32>
    %c1_i32_6 = arith.constant 1 : i32
    %24 = tpu.dynamic_rotate %2 by %c1_i32_6 dim 0 : vector<64x128xf32>, i32 -> vector<64x128xf32>
    %cst = arith.constant 0.000000e+00 : f32
    %25 = vector.broadcast %cst : f32 to vector<64x128xf32>
    %26 = arith.select %21, %25, %24 : vector<64x128xi1>, vector<64x128xf32>
    %c63_i32 = arith.constant 63 : i32
    %27 = tpu.dynamic_rotate %2 by %c63_i32 dim 0 : vector<64x128xf32>, i32 -> vector<64x128xf32>
    %cst_7 = arith.constant 0.000000e+00 : f32
    %28 = vector.broadcast %cst_7 : f32 to vector<64x128xf32>
    %29 = arith.select %23, %28, %27 : vector<64x128xi1>, vector<64x128xf32>
    %30 = tpu.concatenate %26, %2, %29 in 1 : vector<64x128xf32>, vector<64x128xf32>, vector<64x128xf32> -> vector<64x384xf32>
    %31 = arith.truncf %30 : vector<64x384xf32> to vector<64x384xbf16>
    %c0_8 = arith.constant 0 : index
    %c0_9 = arith.constant 0 : index
    %32 = vector.load %arg2[%c0_8, %c0_9] : memref<384x128xbf16, #tpu.memory_space<vmem>>, vector<384x128xbf16>
    %cst_10 = arith.constant dense<0.000000e+00> : vector<64x128xf32>
    %33 = tpu.matmul %31, %32, %cst_10 {dimension_numbers = #tpu.dot_dimension_numbers<[1], [0], [0], [1], [0, 0, 1, 1], [], []>} : vector<64x384xbf16>, vector<384x128xbf16>, vector<64x128xf32> -> vector<64x128xf32>
    %c0_11 = arith.constant 0 : index
    %c0_12 = arith.constant 0 : index
    %34 = vector.load %arg3[%c0_11, %c0_12] : memref<1x128xf32, #tpu.memory_space<vmem>>, vector<1x128xf32>
    %35 = vector.broadcast %34 : vector<1x128xf32> to vector<64x128xf32>
    %36 = arith.mulf %33, %35 : vector<64x128xf32>
    %c0_13 = arith.constant 0 : index
    %c0_14 = arith.constant 0 : index
    %37 = vector.load %arg4[%c0_13, %c0_14] : memref<1x128xf32, #tpu.memory_space<vmem>>, vector<1x128xf32>
    %38 = vector.broadcast %37 : vector<1x128xf32> to vector<64x128xf32>
    %39 = arith.addf %36, %38 : vector<64x128xf32>
    %cst_15 = arith.constant 0.000000e+00 : f32
    %40 = vector.broadcast %cst_15 : f32 to vector<64x128xf32>
    %41 = arith.maximumf %39, %40 : vector<64x128xf32>
    %c1_i32_16 = arith.constant 1 : i32
    %42 = tpu.dynamic_rotate %41 by %c1_i32_16 dim 0 : vector<64x128xf32>, i32 -> vector<64x128xf32>
    %cst_17 = arith.constant 0.000000e+00 : f32
    %43 = vector.broadcast %cst_17 : f32 to vector<64x128xf32>
    %44 = arith.select %21, %43, %42 : vector<64x128xi1>, vector<64x128xf32>
    %c63_i32_18 = arith.constant 63 : i32
    %45 = tpu.dynamic_rotate %41 by %c63_i32_18 dim 0 : vector<64x128xf32>, i32 -> vector<64x128xf32>
    %cst_19 = arith.constant 0.000000e+00 : f32
    %46 = vector.broadcast %cst_19 : f32 to vector<64x128xf32>
    %47 = arith.select %23, %46, %45 : vector<64x128xi1>, vector<64x128xf32>
    %48 = tpu.concatenate %44, %41, %47 in 1 : vector<64x128xf32>, vector<64x128xf32>, vector<64x128xf32> -> vector<64x384xf32>
    %49 = arith.truncf %48 : vector<64x384xf32> to vector<64x384xbf16>
    %c0_20 = arith.constant 0 : index
    %c0_21 = arith.constant 0 : index
    %50 = vector.load %arg5[%c0_20, %c0_21] : memref<384x128xbf16, #tpu.memory_space<vmem>>, vector<384x128xbf16>
    %cst_22 = arith.constant dense<0.000000e+00> : vector<64x128xf32>
    %51 = tpu.matmul %49, %50, %cst_22 {dimension_numbers = #tpu.dot_dimension_numbers<[1], [0], [0], [1], [0, 0, 1, 1], [], []>} : vector<64x384xbf16>, vector<384x128xbf16>, vector<64x128xf32> -> vector<64x128xf32>
    %c0_23 = arith.constant 0 : index
    %c0_24 = arith.constant 0 : index
    %52 = vector.load %arg6[%c0_23, %c0_24] : memref<1x128xf32, #tpu.memory_space<vmem>>, vector<1x128xf32>
    %53 = vector.broadcast %52 : vector<1x128xf32> to vector<64x128xf32>
    %54 = arith.mulf %51, %53 : vector<64x128xf32>
    %c0_25 = arith.constant 0 : index
    %c0_26 = arith.constant 0 : index
    %55 = vector.load %arg7[%c0_25, %c0_26] : memref<1x128xf32, #tpu.memory_space<vmem>>, vector<1x128xf32>
    %56 = vector.broadcast %55 : vector<1x128xf32> to vector<64x128xf32>
    %57 = arith.addf %54, %56 : vector<64x128xf32>
    %58 = arith.truncf %57 : vector<64x128xf32> to vector<64x128xbf16>
    %c0_27 = arith.constant 0 : index
    %c0_28 = arith.constant 0 : index
    %59 = vector.load %arg8[%c0_27, %c0_28] : memref<128x8xbf16, #tpu.memory_space<vmem>>, vector<128x8xbf16>
    %cst_29 = arith.constant dense<0.000000e+00> : vector<64x8xf32>
    %60 = tpu.matmul %58, %59, %cst_29 {dimension_numbers = #tpu.dot_dimension_numbers<[1], [0], [0], [1], [0, 0, 1, 1], [], []>} : vector<64x128xbf16>, vector<128x8xbf16>, vector<64x8xf32> -> vector<64x8xf32>
    %c0_30 = arith.constant 0 : index
    %c0_31 = arith.constant 0 : index
    %61 = vector.load %arg9[%c0_30, %c0_31] : memref<1x8xf32, #tpu.memory_space<vmem>>, vector<1x8xf32>
    %62 = vector.broadcast %61 : vector<1x8xf32> to vector<64x8xf32>
    %63 = arith.addf %60, %62 : vector<64x8xf32>
    %c0_32 = arith.constant 0 : index
    %c0_33 = arith.constant 0 : index
    %64 = vector.load %arg10[%c0_32, %c0_33] : memref<1x8xf32, #tpu.memory_space<vmem>>, vector<1x8xf32>
    %65 = vector.broadcast %64 : vector<1x8xf32> to vector<64x8xf32>
    %66 = arith.mulf %63, %65 : vector<64x8xf32>
    %c0_34 = arith.constant 0 : index
    %c0_35 = arith.constant 0 : index
    %67 = vector.load %arg11[%c0_34, %c0_35] : memref<1x8xf32, #tpu.memory_space<vmem>>, vector<1x8xf32>
    %68 = vector.broadcast %67 : vector<1x8xf32> to vector<64x8xf32>
    %69 = arith.addf %66, %68 : vector<64x8xf32>
    %cst_36 = arith.constant 3.000000e+00 : f32
    %70 = vector.broadcast %cst_36 : f32 to vector<64x8xf32>
    %71 = arith.addf %69, %70 : vector<64x8xf32>
    %cst_37 = arith.constant 0.000000e+00 : f32
    %cst_38 = arith.constant 6.000000e+00 : f32
    %72 = vector.broadcast %cst_37 : f32 to vector<64x8xf32>
    %73 = arith.maximumf %72, %71 : vector<64x8xf32>
    %74 = vector.broadcast %cst_38 : f32 to vector<64x8xf32>
    %75 = arith.minimumf %74, %73 : vector<64x8xf32>
    %cst_39 = arith.constant 0.166666672 : f32
    %76 = vector.broadcast %cst_39 : f32 to vector<64x8xf32>
    %77 = arith.mulf %75, %76 : vector<64x8xf32>
    %78 = arith.mulf %69, %77 : vector<64x8xf32>
    %79 = arith.truncf %78 : vector<64x8xf32> to vector<64x8xbf16>
    %c0_40 = arith.constant 0 : index
    %c0_41 = arith.constant 0 : index
    %80 = vector.load %arg12[%c0_40, %c0_41] : memref<8x128xbf16, #tpu.memory_space<vmem>>, vector<8x128xbf16>
    %cst_42 = arith.constant dense<0.000000e+00> : vector<64x128xf32>
    %81 = tpu.matmul %79, %80, %cst_42 {dimension_numbers = #tpu.dot_dimension_numbers<[1], [0], [0], [1], [0, 0, 1, 1], [], []>} : vector<64x8xbf16>, vector<8x128xbf16>, vector<64x128xf32> -> vector<64x128xf32>
    %c0_43 = arith.constant 0 : index
    %c0_44 = arith.constant 0 : index
    %82 = vector.load %arg13[%c0_43, %c0_44] : memref<1x128xf32, #tpu.memory_space<vmem>>, vector<1x128xf32>
    %83 = vector.broadcast %82 : vector<1x128xf32> to vector<64x128xf32>
    %84 = arith.addf %81, %83 : vector<64x128xf32>
    %85 = arith.negf %84 : vector<64x128xf32>
    %86 = math.exp %85 : vector<64x128xf32>
    %cst_45 = arith.constant 1.000000e+00 : f32
    %87 = vector.broadcast %cst_45 : f32 to vector<64x128xf32>
    %88 = arith.addf %87, %86 : vector<64x128xf32>
    %89 = arith.divf %87, %88 : vector<64x128xf32>
    %90 = vector.shape_cast %57 : vector<64x128xf32> to vector<4x16x128xf32>
    %cst_46 = arith.constant dense<0.000000e+00> : vector<4x128xf32>
    %91 = vector.multi_reduction <add>, %90, %cst_46 [1] : vector<4x16x128xf32> to vector<4x128xf32>
    %cst_47 = arith.constant 1.600000e+01 : f32
    %92 = vector.broadcast %cst_47 : f32 to vector<4x128xf32>
    %93 = arith.divf %91, %92 : vector<4x128xf32>
    %94 = arith.truncf %93 : vector<4x128xf32> to vector<4x128xbf16>
    %c0_48 = arith.constant 0 : index
    %c0_49 = arith.constant 0 : index
    %95 = vector.load %arg14[%c0_48, %c0_49] : memref<128x128xbf16, #tpu.memory_space<vmem>>, vector<128x128xbf16>
    %cst_50 = arith.constant dense<0.000000e+00> : vector<4x128xf32>
    %96 = tpu.matmul %94, %95, %cst_50 {dimension_numbers = #tpu.dot_dimension_numbers<[1], [0], [0], [1], [0, 0, 1, 1], [], []>} : vector<4x128xbf16>, vector<128x128xbf16>, vector<4x128xf32> -> vector<4x128xf32>
    %c0_51 = arith.constant 0 : index
    %c0_52 = arith.constant 0 : index
    %97 = vector.load %arg15[%c0_51, %c0_52] : memref<1x128xf32, #tpu.memory_space<vmem>>, vector<1x128xf32>
    %98 = vector.broadcast %97 : vector<1x128xf32> to vector<4x128xf32>
    %99 = arith.addf %96, %98 : vector<4x128xf32>
    %c0_53 = arith.constant 0 : index
    %c0_54 = arith.constant 0 : index
    %100 = vector.load %arg16[%c0_53, %c0_54] : memref<1x128xf32, #tpu.memory_space<vmem>>, vector<1x128xf32>
    %101 = vector.broadcast %100 : vector<1x128xf32> to vector<4x128xf32>
    %102 = arith.mulf %99, %101 : vector<4x128xf32>
    %c0_55 = arith.constant 0 : index
    %c0_56 = arith.constant 0 : index
    %103 = vector.load %arg17[%c0_55, %c0_56] : memref<1x128xf32, #tpu.memory_space<vmem>>, vector<1x128xf32>
    %104 = vector.broadcast %103 : vector<1x128xf32> to vector<4x128xf32>
    %105 = arith.addf %102, %104 : vector<4x128xf32>
    %cst_57 = arith.constant 3.000000e+00 : f32
    %106 = vector.broadcast %cst_57 : f32 to vector<4x128xf32>
    %107 = arith.addf %105, %106 : vector<4x128xf32>
    %cst_58 = arith.constant 0.000000e+00 : f32
    %cst_59 = arith.constant 6.000000e+00 : f32
    %108 = vector.broadcast %cst_58 : f32 to vector<4x128xf32>
    %109 = arith.maximumf %108, %107 : vector<4x128xf32>
    %110 = vector.broadcast %cst_59 : f32 to vector<4x128xf32>
    %111 = arith.minimumf %110, %109 : vector<4x128xf32>
    %cst_60 = arith.constant 0.166666672 : f32
    %112 = vector.broadcast %cst_60 : f32 to vector<4x128xf32>
    %113 = arith.mulf %111, %112 : vector<4x128xf32>
    %114 = arith.mulf %105, %113 : vector<4x128xf32>
    %115 = arith.truncf %114 : vector<4x128xf32> to vector<4x128xbf16>
    %c0_61 = arith.constant 0 : index
    %c0_62 = arith.constant 0 : index
    %116 = vector.load %arg18[%c0_61, %c0_62] : memref<128x128xbf16, #tpu.memory_space<vmem>>, vector<128x128xbf16>
    %cst_63 = arith.constant dense<0.000000e+00> : vector<4x128xf32>
    %117 = tpu.matmul %115, %116, %cst_63 {dimension_numbers = #tpu.dot_dimension_numbers<[1], [0], [0], [1], [0, 0, 1, 1], [], []>} : vector<4x128xbf16>, vector<128x128xbf16>, vector<4x128xf32> -> vector<4x128xf32>
    %c0_64 = arith.constant 0 : index
    %c0_65 = arith.constant 0 : index
    %118 = vector.load %arg19[%c0_64, %c0_65] : memref<1x128xf32, #tpu.memory_space<vmem>>, vector<1x128xf32>
    %119 = vector.broadcast %118 : vector<1x128xf32> to vector<4x128xf32>
    %120 = arith.addf %117, %119 : vector<4x128xf32>
    %121 = arith.negf %120 : vector<4x128xf32>
    %122 = math.exp %121 : vector<4x128xf32>
    %cst_66 = arith.constant 1.000000e+00 : f32
    %123 = vector.broadcast %cst_66 : f32 to vector<4x128xf32>
    %124 = arith.addf %123, %122 : vector<4x128xf32>
    %125 = arith.divf %123, %124 : vector<4x128xf32>
    %126 = vector.shape_cast %89 : vector<64x128xf32> to vector<4x16x128xf32>
    %127 = arith.mulf %90, %126 : vector<4x16x128xf32>
    %128 = vector.shape_cast %125 : vector<4x128xf32> to vector<4x1x128xf32>
    %129 = vector.broadcast %128 : vector<4x1x128xf32> to vector<4x16x128xf32>
    %130 = arith.mulf %127, %129 : vector<4x16x128xf32>
    %131 = arith.addf %130, %1 : vector<4x16x128xf32>
    %cst_67 = arith.constant 0.000000e+00 : f32
    %132 = vector.broadcast %cst_67 : f32 to vector<4x16x128xf32>
    %133 = arith.maximumf %131, %132 : vector<4x16x128xf32>
    %134 = arith.truncf %133 : vector<4x16x128xf32> to vector<4x16x128xbf16>
    %c0_68 = arith.constant 0 : index
    %c0_69 = arith.constant 0 : index
    %c0_70 = arith.constant 0 : index
    %135 = vector.load %arg20[%c0_68, %c0_69, %c0_70] : memref<4x16x128xbf16, #tpu.memory_space<vmem>>, vector<4x16x128xbf16>
    tpu.vector_store %arg20[%c0_68, %c0_69, %c0_70], %134 {strides = array<i32>} : memref<4x16x128xbf16, #tpu.memory_space<vmem>>, vector<4x16x128xbf16>,
    return
  }
  func.func @transform_0(%arg0: i32) -> (i32, i32, i32) {
    %c0_i32 = arith.constant 0 : i32
    %c0_i32_0 = arith.constant 0 : i32
    %c0_i32_1 = arith.constant 0 : i32
    return %arg0, %c0_i32, %c0_i32_0 : i32, i32, i32
  }
  func.func @transform_1(%arg0: i32) -> (i32, i32) {
    %c0_i32 = arith.constant 0 : i32
    %c0_i32_0 = arith.constant 0 : i32
    %c0_i32_1 = arith.constant 0 : i32
    return %c0_i32, %c0_i32_0 : i32, i32
  }
  func.func @transform_2(%arg0: i32) -> (i32, i32) {
    %c0_i32 = arith.constant 0 : i32
    %c0_i32_0 = arith.constant 0 : i32
    %c0_i32_1 = arith.constant 0 : i32
    return %c0_i32, %c0_i32_0 : i32, i32
  }
  func.func @transform_3(%arg0: i32) -> (i32, i32) {
    %c0_i32 = arith.constant 0 : i32
    %c0_i32_0 = arith.constant 0 : i32
    %c0_i32_1 = arith.constant 0 : i32
    return %c0_i32, %c0_i32_0 : i32, i32
  }
  func.func @transform_4(%arg0: i32) -> (i32, i32) {
    %c0_i32 = arith.constant 0 : i32
    %c0_i32_0 = arith.constant 0 : i32
    %c0_i32_1 = arith.constant 0 : i32
    return %c0_i32, %c0_i32_0 : i32, i32
  }
  func.func @transform_5(%arg0: i32) -> (i32, i32) {
    %c0_i32 = arith.constant 0 : i32
    %c0_i32_0 = arith.constant 0 : i32
    %c0_i32_1 = arith.constant 0 : i32
    return %c0_i32, %c0_i32_0 : i32, i32
  }
  func.func @transform_6(%arg0: i32) -> (i32, i32) {
    %c0_i32 = arith.constant 0 : i32
    %c0_i32_0 = arith.constant 0 : i32
    %c0_i32_1 = arith.constant 0 : i32
    return %c0_i32, %c0_i32_0 : i32, i32
  }
  func.func @transform_7(%arg0: i32) -> (i32, i32) {
    %c0_i32 = arith.constant 0 : i32
    %c0_i32_0 = arith.constant 0 : i32
    %c0_i32_1 = arith.constant 0 : i32
    return %c0_i32, %c0_i32_0 : i32, i32
  }
  func.func @transform_8(%arg0: i32) -> (i32, i32) {
    %c0_i32 = arith.constant 0 : i32
    %c0_i32_0 = arith.constant 0 : i32
    %c0_i32_1 = arith.constant 0 : i32
    return %c0_i32, %c0_i32_0 : i32, i32
  }
  func.func @transform_9(%arg0: i32) -> (i32, i32) {
    %c0_i32 = arith.constant 0 : i32
    %c0_i32_0 = arith.constant 0 : i32
    %c0_i32_1 = arith.constant 0 : i32
    return %c0_i32, %c0_i32_0 : i32, i32
  }
  func.func @transform_10(%arg0: i32) -> (i32, i32) {
    %c0_i32 = arith.constant 0 : i32
    %c0_i32_0 = arith.constant 0 : i32
    %c0_i32_1 = arith.constant 0 : i32
    return %c0_i32, %c0_i32_0 : i32, i32
  }
  func.func @transform_11(%arg0: i32) -> (i32, i32) {
    %c0_i32 = arith.constant 0 : i32
    %c0_i32_0 = arith.constant 0 : i32
    %c0_i32_1 = arith.constant 0 : i32
    return %c0_i32, %c0_i32_0 : i32, i32
  }
  func.func @transform_12(%arg0: i32) -> (i32, i32) {
    %c0_i32 = arith.constant 0 : i32
    %c0_i32_0 = arith.constant 0 : i32
    %c0_i32_1 = arith.constant 0 : i32
    return %c0_i32, %c0_i32_0 : i32, i32
  }
  func.func @transform_13(%arg0: i32) -> (i32, i32) {
    %c0_i32 = arith.constant 0 : i32
    %c0_i32_0 = arith.constant 0 : i32
    %c0_i32_1 = arith.constant 0 : i32
    return %c0_i32, %c0_i32_0 : i32, i32
  }
  func.func @transform_14(%arg0: i32) -> (i32, i32) {
    %c0_i32 = arith.constant 0 : i32
    %c0_i32_0 = arith.constant 0 : i32
    %c0_i32_1 = arith.constant 0 : i32
    return %c0_i32, %c0_i32_0 : i32, i32
  }
  func.func @transform_15(%arg0: i32) -> (i32, i32) {
    %c0_i32 = arith.constant 0 : i32
    %c0_i32_0 = arith.constant 0 : i32
    %c0_i32_1 = arith.constant 0 : i32
    return %c0_i32, %c0_i32_0 : i32, i32
  }
  func.func @transform_16(%arg0: i32) -> (i32, i32) {
    %c0_i32 = arith.constant 0 : i32
    %c0_i32_0 = arith.constant 0 : i32
    %c0_i32_1 = arith.constant 0 : i32
    return %c0_i32, %c0_i32_0 : i32, i32
  }
  func.func @transform_17(%arg0: i32) -> (i32, i32) {
    %c0_i32 = arith.constant 0 : i32
    %c0_i32_0 = arith.constant 0 : i32
    %c0_i32_1 = arith.constant 0 : i32
    return %c0_i32, %c0_i32_0 : i32, i32
  }
  func.func @transform_18(%arg0: i32) -> (i32, i32) {
    %c0_i32 = arith.constant 0 : i32
    %c0_i32_0 = arith.constant 0 : i32
    %c0_i32_1 = arith.constant 0 : i32
    return %c0_i32, %c0_i32_0 : i32, i32
  }
  func.func @transform_19(%arg0: i32) -> (i32, i32, i32) {
    %c0_i32 = arith.constant 0 : i32
    %c0_i32_0 = arith.constant 0 : i32
    %c0_i32_1 = arith.constant 0 : i32
    return %arg0, %c0_i32, %c0_i32_0 : i32, i32, i32
  }
}

</mosaic_0001>

<llo_original>
// kernel: tile.84
$region0: #{tile.84}
  %s0 = inlined_call_operand.vmem [shape: bf16[8,16,8], index: 0, kind: input, shape index: {}]
  %s1 = inlined_call_operand.vmem [shape: bf16[8,128], index: 1, kind: output, shape index: {}]
  $region1: #{tile.84} parent=0
    #allocation0 [shape = 'u8[4096]{0}', space=vmem, size = 0x1000, scoped, tag = 'scoped mem for output reshape']
    #allocation1 [shape = 'u8[65536]{0}', space=vmem, size = 0x10000, scoped, tag = 'scoped mem for input reshape']
    %s3 = smul.u32 4, 2
    %s4 = sshllo.u32 0, %s3
    %s5 = smul.addr 4, 15
    %s6 = scalar_lea.vmem %s0, %s5
    %s7 = sshrl.u32 %s4, 1
    %s8 = sor.u32 %s4, %s7
    %s9 = sand.u32 %s8, 85
    %s10 = sshrl.u32 %s9, 1
    %s11 = sor.u32 %s9, %s10
    %s12 = sand.u32 51, %s11
    %s13 = sshrl.u32 %s12, 2
    %s14 = sor.u32 %s12, %s13
    %s15 = sand.u32 15, %s14
    %v16 = vld [vmem:[%s6] sm:%s15]
    %v17 = vunpack.c.l.bf16 %v16
    %v18 = vunpack.c.h.bf16 %v16
    %s19 = scalar_lea.vmem [#allocation1], 120
    %20 = vst [vmem:[%s19] sm:%s4] %v17
    %s21 = smul.addr 4, 14
    %s22 = scalar_lea.vmem %s0, %s21
    %s23 = sshrl.u32 %s4, 1
    %s24 = sor.u32 %s4, %s23
    %s25 = sand.u32 %s24, 85
    %s26 = sshrl.u32 %s25, 1
    %s27 = sor.u32 %s25, %s26
    %s28 = sand.u32 51, %s27
    %s29 = sshrl.u32 %s28, 2
    %s30 = sor.u32 %s28, %s29
    %s31 = sand.u32 15, %s30
    %v32 = vld [vmem:[%s22] sm:%s31]
    %v33 = vunpack.c.l.bf16 %v32
    %v34 = vunpack.c.h.bf16 %v32
    %s35 = scalar_lea.vmem [#allocation1], 112
    %36 = vst [vmem:[%s35] sm:%s4] %v33
    %s37 = smul.addr 4, 13
    %s38 = scalar_lea.vmem %s0, %s37
    %s39 = sshrl.u32 %s4, 1
    %s40 = sor.u32 %s4, %s39
    %s41 = sand.u32 %s40, 85
    %s42 = sshrl.u32 %s41, 1
    %s43 = sor.u32 %s41, %s42
    %s44 = sand.u32 51, %s43
    %s45 = sshrl.u32 %s44, 2
    %s46 = sor.u32 %s44, %s45
    %s47 = sand.u32 15, %s46
    %v48 = vld [vmem:[%s38] sm:%s47]
    %v49 = vunpack.c.l.bf16 %v48
    %v50 = vunpack.c.h.bf16 %v48
    %s51 = scalar_lea.vmem [#allocation1], 104
    %52 = vst [vmem:[%s51] sm:%s4] %v49
    %s53 = smul.addr 4, 12
    %s54 = scalar_lea.vmem %s0, %s53
    %s55 = sshrl.u32 %s4, 1
    %s56 = sor.u32 %s4, %s55
    %s57 = sand.u32 %s56, 85
    %s58 = sshrl.u32 %s57, 1
    %s59 = sor.u32 %s57, %s58
    %s60 = sand.u32 51, %s59
    %s61 = sshrl.u32 %s60, 2
    %s62 = sor.u32 %s60, %s61
    %s63 = sand.u32 15, %s62
    %v64 = vld [vmem:[%s54] sm:%s63]
    %v65 = vunpack.c.l.bf16 %v64
    %v66 = vunpack.c.h.bf16 %v64
    %s67 = scalar_lea.vmem [#allocation1], 96
    %68 = vst [vmem:[%s67] sm:%s4] %v65
    %s69 = smul.addr 4, 11
    %s70 = scalar_lea.vmem %s0, %s69
    %s71 = sshrl.u32 %s4, 1
    %s72 = sor.u32 %s4, %s71
    %s73 = sand.u32 %s72, 85
    %s74 = sshrl.u32 %s73, 1
    %s75 = sor.u32 %s73, %s74
    %s76 = sand.u32 51, %s75
    %s77 = sshrl.u32 %s76, 2
    %s78 = sor.u32 %s76, %s77
    %s79 = sand.u32 15, %s78
    %v80 = vld [vmem:[%s70] sm:%s79]
    %v81 = vunpack.c.l.bf16 %v80
    %v82 = vunpack.c.h.bf16 %v80
    %s83 = scalar_lea.vmem [#allocation1], 88
    %84 = vst [vmem:[%s83] sm:%s4] %v81
    %s85 = smul.addr 4, 10
    %s86 = scalar_lea.vmem %s0, %s85
    %s87 = sshrl.u32 %s4, 1
    %s88 = sor.u32 %s4, %s87
    %s89 = sand.u32 %s88, 85
    %s90 = sshrl.u32 %s89, 1
    %s91 = sor.u32 %s89, %s90
    %s92 = sand.u32 51, %s91
    %s93 = sshrl.u32 %s92, 2
    %s94 = sor.u32 %s92, %s93
    %s95 = sand.u32 15, %s94
    %v96 = vld [vmem:[%s86] sm:%s95]
    %v97 = vunpack.c.l.bf16 %v96
    %v98 = vunpack.c.h.bf16 %v96
    %s99 = scalar_lea.vmem [#allocation1], 80
    %100 = vst [vmem:[%s99] sm:%s4] %v97
    %s101 = smul.addr 4, 9
    %s102 = scalar_lea.vmem %s0, %s101
    %s103 = sshrl.u32 %s4, 1
    %s104 = sor.u32 %s4, %s103
    %s105 = sand.u32 %s104, 85
    %s106 = sshrl.u32 %s105, 1
    %s107 = sor.u32 %s105, %s106
    %s108 = sand.u32 51, %s107
    %s109 = sshrl.u32 %s108, 2
    %s110 = sor.u32 %s108, %s109
    %s111 = sand.u32 15, %s110
    %v112 = vld [vmem:[%s102] sm:%s111]
    %v113 = vunpack.c.l.bf16 %v112
    %v114 = vunpack.c.h.bf16 %v112
    %s115 = scalar_lea.vmem [#allocation1], 72
    %116 = vst [vmem:[%s115] sm:%s4] %v113
    %s117 = smul.addr 4, 8
    %s118 = scalar_lea.vmem %s0, %s117
    %s119 = sshrl.u32 %s4, 1
    %s120 = sor.u32 %s4, %s119
    %s121 = sand.u32 %s120, 85
    %s122 = sshrl.u32 %s121, 1
    %s123 = sor.u32 %s121, %s122
    %s124 = sand.u32 51, %s123
    %s125 = sshrl.u32 %s124, 2
    %s126 = sor.u32 %s124, %s125
    %s127 = sand.u32 15, %s126
    %v128 = vld [vmem:[%s118] sm:%s127]
    %v129 = vunpack.c.l.bf16 %v128
    %v130 = vunpack.c.h.bf16 %v128
    %s131 = scalar_lea.vmem [#allocation1], 64
    %132 = vst [vmem:[%s131] sm:%s4] %v129
    %s133 = smul.addr 4, 7
    %s134 = scalar_lea.vmem %s0, %s133
    %s135 = sshrl.u32 %s4, 1
    %s136 = sor.u32 %s4, %s135
    %s137 = sand.u32 %s136, 85
    %s138 = sshrl.u32 %s137, 1
    %s139 = sor.u32 %s137, %s138
    %s140 = sand.u32 51, %s139
    %s141 = sshrl.u32 %s140, 2
    %s142 = sor.u32 %s140, %s141
    %s143 = sand.u32 15, %s142
    %v144 = vld [vmem:[%s134] sm:%s143]
    %v145 = vunpack.c.l.bf16 %v144
    %v146 = vunpack.c.h.bf16 %v144
    %s147 = scalar_lea.vmem [#allocation1], 56
    %148 = vst [vmem:[%s147] sm:%s4] %v145
    %s149 = smul.addr 4, 6
    %s150 = scalar_lea.vmem %s0, %s149
    %s151 = sshrl.u32 %s4, 1
    %s152 = sor.u32 %s4, %s151
    %s153 = sand.u32 %s152, 85
    %s154 = sshrl.u32 %s153, 1
    %s155 = sor.u32 %s153, %s154
    %s156 = sand.u32 51, %s155
    %s157 = sshrl.u32 %s156, 2
    %s158 = sor.u32 %s156, %s157
    %s159 = sand.u32 15, %s158
    %v160 = vld [vmem:[%s150] sm:%s159]
    %v161 = vunpack.c.l.bf16 %v160
    %v162 = vunpack.c.h.bf16 %v160
    %s163 = scalar_lea.vmem [#allocation1], 48
    %164 = vst [vmem:[%s163] sm:%s4] %v161
    %s165 = smul.addr 4, 5
    %s166 = scalar_lea.vmem %s0, %s165
    %s167 = sshrl.u32 %s4, 1
    %s168 = sor.u32 %s4, %s167
    %s169 = sand.u32 %s168, 85
    %s170 = sshrl.u32 %s169, 1
    %s171 = sor.u32 %s169, %s170
    %s172 = sand.u32 51, %s171
    %s173 = sshrl.u32 %s172, 2
    %s174 = sor.u32 %s172, %s173
    %s175 = sand.u32 15, %s174
    %v176 = vld [vmem:[%s166] sm:%s175]
    %v177 = vunpack.c.l.bf16 %v176
    %v178 = vunpack.c.h.bf16 %v176
    %s179 = scalar_lea.vmem [#allocation1], 40
    %180 = vst [vmem:[%s179] sm:%s4] %v177
    %s181 = smul.addr 4, 4
    %s182 = scalar_lea.vmem %s0, %s181
    %s183 = sshrl.u32 %s4, 1
    %s184 = sor.u32 %s4, %s183
    %s185 = sand.u32 %s184, 85
    %s186 = sshrl.u32 %s185, 1
    %s187 = sor.u32 %s185, %s186
    %s188 = sand.u32 51, %s187
    %s189 = sshrl.u32 %s188, 2
    %s190 = sor.u32 %s188, %s189
    %s191 = sand.u32 15, %s190
    %v192 = vld [vmem:[%s182] sm:%s191]
    %v193 = vunpack.c.l.bf16 %v192
    %v194 = vunpack.c.h.bf16 %v192
    %s195 = scalar_lea.vmem [#allocation1], 32
    %196 = vst [vmem:[%s195] sm:%s4] %v193
    %s197 = smul.addr 4, 3
    %s198 = scalar_lea.vmem %s0, %s197
    %s199 = sshrl.u32 %s4, 1
    %s200 = sor.u32 %s4, %s199
    %s201 = sand.u32 %s200, 85
    %s202 = sshrl.u32 %s201, 1
    %s203 = sor.u32 %s201, %s202
    %s204 = sand.u32 51, %s203
    %s205 = sshrl.u32 %s204, 2
    %s206 = sor.u32 %s204, %s205
    %s207 = sand.u32 15, %s206
    %v208 = vld [vmem:[%s198] sm:%s207]
    %v209 = vunpack.c.l.bf16 %v208
    %v210 = vunpack.c.h.bf16 %v208
    %s211 = scalar_lea.vmem [#allocation1], 24
    %212 = vst [vmem:[%s211] sm:%s4] %v209
    %s213 = smul.addr 4, 2
    %s214 = scalar_lea.vmem %s0, %s213
    %s215 = sshrl.u32 %s4, 1
    %s216 = sor.u32 %s4, %s215
    %s217 = sand.u32 %s216, 85
    %s218 = sshrl.u32 %s217, 1
    %s219 = sor.u32 %s217, %s218
    %s220 = sand.u32 51, %s219
    %s221 = sshrl.u32 %s220, 2
    %s222 = sor.u32 %s220, %s221
    %s223 = sand.u32 15, %s222
    %v224 = vld [vmem:[%s214] sm:%s223]
    %v225 = vunpack.c.l.bf16 %v224
    %v226 = vunpack.c.h.bf16 %v224
    %s227 = scalar_lea.vmem [#allocation1], 16
    %228 = vst [vmem:[%s227] sm:%s4] %v225
    %s229 = scalar_lea.vmem %s0, 4
    %s230 = sshrl.u32 %s4, 1
    %s231 = sor.u32 %s4, %s230
    %s232 = sand.u32 %s231, 85
    %s233 = sshrl.u32 %s232, 1
    %s234 = sor.u32 %s232, %s233
    %s235 = sand.u32 51, %s234
    %s236 = sshrl.u32 %s235, 2
    %s237 = sor.u32 %s235, %s236
    %s238 = sand.u32 15, %s237
    %v239 = vld [vmem:[%s229] sm:%s238]
    %v240 = vunpack.c.l.bf16 %v239
    %v241 = vunpack.c.h.bf16 %v239
    %s242 = scalar_lea.vmem [#allocation1], 8
    %243 = vst [vmem:[%s242] sm:%s4] %v240
    %s244 = sshrl.u32 %s4, 1
    %s245 = sor.u32 %s4, %s244
    %s246 = sand.u32 %s245, 85
    %s247 = sshrl.u32 %s246, 1
    %s248 = sor.u32 %s246, %s247
    %s249 = sand.u32 51, %s248
    %s250 = sshrl.u32 %s249, 2
    %s251 = sor.u32 %s249, %s250
    %s252 = sand.u32 15, %s251
    %v253 = vld [vmem:[%s0] sm:%s252]
    %v254 = vunpack.c.l.bf16 %v253
    %v255 = vunpack.c.h.bf16 %v253
    %256 = vst [vmem:[#allocation1] sm:%s4] %v254
    %s257 = smov 3
    %v258 = vld [vmem:[#allocation1] ss:$16 sm:%s257]
    %s259 = smov 12
    %v260 = vld [vmem:[#allocation1] ss:$16 sm:%s259]
    %vm261 = vcmask 1043458
    %v262 = vsel %vm261, %v260, %v258
    %s263 = smov 48
    %v264 = vld [vmem:[#allocation1] ss:$16 sm:%s263]
    %vm265 = vcmask 1045508
    %v266 = vsel %vm265, %v264, %v262
    %s267 = smov 192
    %v268 = vld [vmem:[#allocation1] ss:$16 sm:%s267]
    %vm269 = vcmask 1047558
    %v270 = vsel %vm269, %v268, %v266
    %vm271 = vcmask 64512
    %272 = vst.msk [vmem:[#allocation0] sm:$0xff] %vm271, %v270
    %s273 = scalar_lea.vmem [#allocation1], 15
    %s274 = smov 3
    %v275 = vld [vmem:[%s273] ss:$16 sm:%s274]
    %s276 = scalar_lea.vmem [#allocation1], 15
    %s277 = smov 12
    %v278 = vld [vmem:[%s276] ss:$16 sm:%s277]
    %vm279 = vcmask 1043458
    %v280 = vsel %vm279, %v278, %v275
    %s281 = scalar_lea.vmem [#allocation1], 15
    %s282 = smov 48
    %v283 = vld [vmem:[%s281] ss:$16 sm:%s282]
    %vm284 = vcmask 1045508
    %v285 = vsel %vm284, %v283, %v280
    %s286 = scalar_lea.vmem [#allocation1], 15
    %s287 = smov 192
    %v288 = vld [vmem:[%s286] ss:$16 sm:%s287]
    %vm289 = vcmask 1047558
    %v290 = vsel %vm289, %v288, %v285
    %291 = vrot.lane.b32.xlu0 %v290, 120
    %v292 = vpop.permute.xlu0 %291
    %vm293 = vcmask 1048512
    %294 = vst.msk [vmem:[#allocation0] sm:$0xff] %vm293, %v292
    %s295 = scalar_lea.vmem [#allocation1], 14
    %s296 = smov 3
    %v297 = vld [vmem:[%s295] ss:$16 sm:%s296]
    %s298 = scalar_lea.vmem [#allocation1], 14
    %s299 = smov 12
    %v300 = vld [vmem:[%s298] ss:$16 sm:%s299]
    %vm301 = vcmask 1043458
    %v302 = vsel %vm301, %v300, %v297
    %s303 = scalar_lea.vmem [#allocation1], 14
    %s304 = smov 48
    %v305 = vld [vmem:[%s303] ss:$16 sm:%s304]
    %vm306 = vcmask 1045508
    %v307 = vsel %vm306, %v305, %v302
    %s308 = scalar_lea.vmem [#allocation1], 14
    %s309 = smov 192
    %v310 = vld [vmem:[%s308] ss:$16 sm:%s309]
    %vm311 = vcmask 1047558
    %v312 = vsel %vm311, %v310, %v307
    %313 = vrot.lane.b32.xlu0 %v312, 112
    %v314 = vpop.permute.xlu0 %313
    %vm315 = vcmask 982912
    %316 = vst.msk [vmem:[#allocation0] sm:$0xff] %vm315, %v314
    %s317 = scalar_lea.vmem [#allocation1], 13
    %s318 = smov 3
    %v319 = vld [vmem:[%s317] ss:$16 sm:%s318]
    %s320 = scalar_lea.vmem [#allocation1], 13
    %s321 = smov 12
    %v322 = vld [vmem:[%s320] ss:$16 sm:%s321]
    %vm323 = vcmask 1043458
    %v324 = vsel %vm323, %v322, %v319
    %s325 = scalar_lea.vmem [#allocation1], 13
    %s326 = smov 48
    %v327 = vld [vmem:[%s325] ss:$16 sm:%s326]
    %vm328 = vcmask 1045508
    %v329 = vsel %vm328, %v327, %v324
    %s330 = scalar_lea.vmem [#allocation1], 13
    %s331 = smov 192
    %v332 = vld [vmem:[%s330] ss:$16 sm:%s331]
    %vm333 = vcmask 1047558
    %v334 = vsel %vm333, %v332, %v329
    %335 = vrot.lane.b32.xlu0 %v334, 104
    %v336 = vpop.permute.xlu0 %335
    %vm337 = vcmask 917312
    %338 = vst.msk [vmem:[#allocation0] sm:$0xff] %vm337, %v336
    %s339 = scalar_lea.vmem [#allocation1], 12
    %s340 = smov 3
    %v341 = vld [vmem:[%s339] ss:$16 sm:%s340]
    %s342 = scalar_lea.vmem [#allocation1], 12
    %s343 = smov 12
    %v344 = vld [vmem:[%s342] ss:$16 sm:%s343]
    %vm345 = vcmask 1043458
    %v346 = vsel %vm345, %v344, %v341
    %s347 = scalar_lea.vmem [#allocation1], 12
    %s348 = smov 48
    %v349 = vld [vmem:[%s347] ss:$16 sm:%s348]
    %vm350 = vcmask 1045508
    %v351 = vsel %vm350, %v349, %v346
    %s352 = scalar_lea.vmem [#allocation1], 12
    %s353 = smov 192
    %v354 = vld [vmem:[%s352] ss:$16 sm:%s353]
    %vm355 = vcmask 1047558
    %v356 = vsel %vm355, %v354, %v351
    %357 = vrot.lane.b32.xlu0 %v356, 96
    %v358 = vpop.permute.xlu0 %357
    %vm359 = vcmask 851712
    %360 = vst.msk [vmem:[#allocation0] sm:$0xff] %vm359, %v358
    %s361 = scalar_lea.vmem [#allocation1], 11
    %s362 = smov 3
    %v363 = vld [vmem:[%s361] ss:$16 sm:%s362]
    %s364 = scalar_lea.vmem [#allocation1], 11
    %s365 = smov 12
    %v366 = vld [vmem:[%s364] ss:$16 sm:%s365]
    %vm367 = vcmask 1043458
    %v368 = vsel %vm367, %v366, %v363
    %s369 = scalar_lea.vmem [#allocation1], 11
    %s370 = smov 48
    %v371 = vld [vmem:[%s369] ss:$16 sm:%s370]
    %vm372 = vcmask 1045508
    %v373 = vsel %vm372, %v371, %v368
    %s374 = scalar_lea.vmem [#allocation1], 11
    %s375 = smov 192
    %v376 = vld [vmem:[%s374] ss:$16 sm:%s375]
    %vm377 = vcmask 1047558
    %v378 = vsel %vm377, %v376, %v373
    %379 = vrot.lane.b32.xlu0 %v378, 88
    %v380 = vpop.permute.xlu0 %379
    %vm381 = vcmask 786112
    %382 = vst.msk [vmem:[#allocation0] sm:$0xff] %vm381, %v380
    %s383 = scalar_lea.vmem [#allocation1], 10
    %s384 = smov 3
    %v385 = vld [vmem:[%s383] ss:$16 sm:%s384]
    %s386 = scalar_lea.vmem [#allocation1], 10
    %s387 = smov 12
    %v388 = vld [vmem:[%s386] ss:$16 sm:%s387]
    %vm389 = vcmask 1043458
    %v390 = vsel %vm389, %v388, %v385
    %s391 = scalar_lea.vmem [#allocation1], 10
    %s392 = smov 48
    %v393 = vld [vmem:[%s391] ss:$16 sm:%s392]
    %vm394 = vcmask 1045508
    %v395 = vsel %vm394, %v393, %v390
    %s396 = scalar_lea.vmem [#allocation1], 10
    %s397 = smov 192
    %v398 = vld [vmem:[%s396] ss:$16 sm:%s397]
    %vm399 = vcmask 1047558
    %v400 = vsel %vm399, %v398, %v395
    %401 = vrot.lane.b32.xlu0 %v400, 80
    %v402 = vpop.permute.xlu0 %401
    %vm403 = vcmask 720512
    %404 = vst.msk [vmem:[#allocation0] sm:$0xff] %vm403, %v402
    %s405 = scalar_lea.vmem [#allocation1], 9
    %s406 = smov 3
    %v407 = vld [vmem:[%s405] ss:$16 sm:%s406]
    %s408 = scalar_lea.vmem [#allocation1], 9
    %s409 = smov 12
    %v410 = vld [vmem:[%s408] ss:$16 sm:%s409]
    %vm411 = vcmask 1043458
    %v412 = vsel %vm411, %v410, %v407
    %s413 = scalar_lea.vmem [#allocation1], 9
    %s414 = smov 48
    %v415 = vld [vmem:[%s413] ss:$16 sm:%s414]
    %vm416 = vcmask 1045508
    %v417 = vsel %vm416, %v415, %v412
    %s418 = scalar_lea.vmem [#allocation1], 9
    %s419 = smov 192
    %v420 = vld [vmem:[%s418] ss:$16 sm:%s419]
    %vm421 = vcmask 1047558
    %v422 = vsel %vm421, %v420, %v417
    %423 = vrot.lane.b32.xlu0 %v422, 72
    %v424 = vpop.permute.xlu0 %423
    %vm425 = vcmask 654912
    %426 = vst.msk [vmem:[#allocation0] sm:$0xff] %vm425, %v424
    %s427 = scalar_lea.vmem [#allocation1], 8
    %s428 = smov 3
    %v429 = vld [vmem:[%s427] ss:$16 sm:%s428]
    %s430 = scalar_lea.vmem [#allocation1], 8
    %s431 = smov 12
    %v432 = vld [vmem:[%s430] ss:$16 sm:%s431]
    %vm433 = vcmask 1043458
    %v434 = vsel %vm433, %v432, %v429
    %s435 = scalar_lea.vmem [#allocation1], 8
    %s436 = smov 48
    %v437 = vld [vmem:[%s435] ss:$16 sm:%s436]
    %vm438 = vcmask 1045508
    %v439 = vsel %vm438, %v437, %v434
    %s440 = scalar_lea.vmem [#allocation1], 8
    %s441 = smov 192
    %v442 = vld [vmem:[%s440] ss:$16 sm:%s441]
    %vm443 = vcmask 1047558
    %v444 = vsel %vm443, %v442, %v439
    %445 = vrot.lane.b32.xlu0 %v444, 64
    %v446 = vpop.permute.xlu0 %445
    %vm447 = vcmask 589312
    %448 = vst.msk [vmem:[#allocation0] sm:$0xff] %vm447, %v446
    %s449 = scalar_lea.vmem [#allocation1], 7
    %s450 = smov 3
    %v451 = vld [vmem:[%s449] ss:$16 sm:%s450]
    %s452 = scalar_lea.vmem [#allocation1], 7
    %s453 = smov 12
    %v454 = vld [vmem:[%s452] ss:$16 sm:%s453]
    %vm455 = vcmask 1043458
    %v456 = vsel %vm455, %v454, %v451
    %s457 = scalar_lea.vmem [#allocation1], 7
    %s458 = smov 48
    %v459 = vld [vmem:[%s457] ss:$16 sm:%s458]
    %vm460 = vcmask 1045508
    %v461 = vsel %vm460, %v459, %v456
    %s462 = scalar_lea.vmem [#allocation1], 7
    %s463 = smov 192
    %v464 = vld [vmem:[%s462] ss:$16 sm:%s463]
    %vm465 = vcmask 1047558
    %v466 = vsel %vm465, %v464, %v461
    %467 = vrot.lane.b32.xlu0 %v466, 56
    %v468 = vpop.permute.xlu0 %467
    %vm469 = vcmask 523712
    %470 = vst.msk [vmem:[#allocation0] sm:$0xff] %vm469, %v468
    %s471 = scalar_lea.vmem [#allocation1], 6
    %s472 = smov 3
    %v473 = vld [vmem:[%s471] ss:$16 sm:%s472]
    %s474 = scalar_lea.vmem [#allocation1], 6
    %s475 = smov 12
    %v476 = vld [vmem:[%s474] ss:$16 sm:%s475]
    %vm477 = vcmask 1043458
    %v478 = vsel %vm477, %v476, %v473
    %s479 = scalar_lea.vmem [#allocation1], 6
    %s480 = smov 48
    %v481 = vld [vmem:[%s479] ss:$16 sm:%s480]
    %vm482 = vcmask 1045508
    %v483 = vsel %vm482, %v481, %v478
    %s484 = scalar_lea.vmem [#allocation1], 6
    %s485 = smov 192
    %v486 = vld [vmem:[%s484] ss:$16 sm:%s485]
    %vm487 = vcmask 1047558
    %v488 = vsel %vm487, %v486, %v483
    %489 = vrot.lane.b32.xlu0 %v488, 48
    %v490 = vpop.permute.xlu0 %489
    %vm491 = vcmask 458112
    %492 = vst.msk [vmem:[#allocation0] sm:$0xff] %vm491, %v490
    %s493 = scalar_lea.vmem [#allocation1], 5
    %s494 = smov 3
    %v495 = vld [vmem:[%s493] ss:$16 sm:%s494]
    %s496 = scalar_lea.vmem [#allocation1], 5
    %s497 = smov 12
    %v498 = vld [vmem:[%s496] ss:$16 sm:%s497]
    %vm499 = vcmask 1043458
    %v500 = vsel %vm499, %v498, %v495
    %s501 = scalar_lea.vmem [#allocation1], 5
    %s502 = smov 48
    %v503 = vld [vmem:[%s501] ss:$16 sm:%s502]
    %vm504 = vcmask 1045508
    %v505 = vsel %vm504, %v503, %v500
    %s506 = scalar_lea.vmem [#allocation1], 5
    %s507 = smov 192
    %v508 = vld [vmem:[%s506] ss:$16 sm:%s507]
    %vm509 = vcmask 1047558
    %v510 = vsel %vm509, %v508, %v505
    %511 = vrot.lane.b32.xlu0 %v510, 40
    %v512 = vpop.permute.xlu0 %511
    %vm513 = vcmask 392512
    %514 = vst.msk [vmem:[#allocation0] sm:$0xff] %vm513, %v512
    %s515 = scalar_lea.vmem [#allocation1], 4
    %s516 = smov 3
    %v517 = vld [vmem:[%s515] ss:$16 sm:%s516]
    %s518 = scalar_lea.vmem [#allocation1], 4
    %s519 = smov 12
    %v520 = vld [vmem:[%s518] ss:$16 sm:%s519]
    %vm521 = vcmask 1043458
    %v522 = vsel %vm521, %v520, %v517
    %s523 = scalar_lea.vmem [#allocation1], 4
    %s524 = smov 48
    %v525 = vld [vmem:[%s523] ss:$16 sm:%s524]
    %vm526 = vcmask 1045508
    %v527 = vsel %vm526, %v525, %v522
    %s528 = scalar_lea.vmem [#allocation1], 4
    %s529 = smov 192
    %v530 = vld [vmem:[%s528] ss:$16 sm:%s529]
    %vm531 = vcmask 1047558
    %v532 = vsel %vm531, %v530, %v527
    %533 = vrot.lane.b32.xlu0 %v532, 32
    %v534 = vpop.permute.xlu0 %533
    %vm535 = vcmask 326912
    %536 = vst.msk [vmem:[#allocation0] sm:$0xff] %vm535, %v534
    %s537 = scalar_lea.vmem [#allocation1], 3
    %s538 = smov 3
    %v539 = vld [vmem:[%s537] ss:$16 sm:%s538]
    %s540 = scalar_lea.vmem [#allocation1], 3
    %s541 = smov 12
    %v542 = vld [vmem:[%s540] ss:$16 sm:%s541]
    %vm543 = vcmask 1043458
    %v544 = vsel %vm543, %v542, %v539
    %s545 = scalar_lea.vmem [#allocation1], 3
    %s546 = smov 48
    %v547 = vld [vmem:[%s545] ss:$16 sm:%s546]
    %vm548 = vcmask 1045508
    %v549 = vsel %vm548, %v547, %v544
    %s550 = scalar_lea.vmem [#allocation1], 3
    %s551 = smov 192
    %v552 = vld [vmem:[%s550] ss:$16 sm:%s551]
    %vm553 = vcmask 1047558
    %v554 = vsel %vm553, %v552, %v549
    %555 = vrot.lane.b32.xlu0 %v554, 24
    %v556 = vpop.permute.xlu0 %555
    %vm557 = vcmask 261312
    %558 = vst.msk [vmem:[#allocation0] sm:$0xff] %vm557, %v556
    %s559 = scalar_lea.vmem [#allocation1], 2
    %s560 = smov 3
    %v561 = vld [vmem:[%s559] ss:$16 sm:%s560]
    %s562 = scalar_lea.vmem [#allocation1], 2
    %s563 = smov 12
    %v564 = vld [vmem:[%s562] ss:$16 sm:%s563]
    %vm565 = vcmask 1043458
    %v566 = vsel %vm565, %v564, %v561
    %s567 = scalar_lea.vmem [#allocation1], 2
    %s568 = smov 48
    %v569 = vld [vmem:[%s567] ss:$16 sm:%s568]
    %vm570 = vcmask 1045508
    %v571 = vsel %vm570, %v569, %v566
    %s572 = scalar_lea.vmem [#allocation1], 2
    %s573 = smov 192
    %v574 = vld [vmem:[%s572] ss:$16 sm:%s573]
    %vm575 = vcmask 1047558
    %v576 = vsel %vm575, %v574, %v571
    %577 = vrot.lane.b32.xlu0 %v576, 16
    %v578 = vpop.permute.xlu0 %577
    %vm579 = vcmask 195712
    %580 = vst.msk [vmem:[#allocation0] sm:$0xff] %vm579, %v578
    %s581 = scalar_lea.vmem [#allocation1], 1
    %s582 = smov 3
    %v583 = vld [vmem:[%s581] ss:$16 sm:%s582]
    %s584 = scalar_lea.vmem [#allocation1], 1
    %s585 = smov 12
    %v586 = vld [vmem:[%s584] ss:$16 sm:%s585]
    %vm587 = vcmask 1043458
    %v588 = vsel %vm587, %v586, %v583
    %s589 = scalar_lea.vmem [#allocation1], 1
    %s590 = smov 48
    %v591 = vld [vmem:[%s589] ss:$16 sm:%s590]
    %vm592 = vcmask 1045508
    %v593 = vsel %vm592, %v591, %v588
    %s594 = scalar_lea.vmem [#allocation1], 1
    %s595 = smov 192
    %v596 = vld [vmem:[%s594] ss:$16 sm:%s595]
    %vm597 = vcmask 1047558
    %v598 = vsel %vm597, %v596, %v593
    %599 = vrot.lane.b32.xlu0 %v598, 8
    %v600 = vpop.permute.xlu0 %599
    %vm601 = vcmask 130112
    %602 = vst.msk [vmem:[#allocation0] sm:$0xff] %vm601, %v600
    %s604 = smul.u32 4, 2
    %s605 = sshllo.u32 0, %s604
    %s606 = sshrl.u32 %s604, 1
    %v607 = vld [vmem:[#allocation0] sm:%s605]
    %v608 = vpack.c.bf16 0.0, %v607
    %s609 = sshllo.u32 0, %s606
    %610 = vst [vmem:[%s1] sm:%s609] %v608

// kernel: tile.103
$region0: #{tile.103}
  #allocation0 [shape = 's32[1]{0}', space=sflag, size = 0x4, scoped, tag = 'scoped memory for tile.103']
  %s0 = inlined_call_operand.vmem [shape: f32[8], index: 0, kind: input, shape index: {}]
  %s1 = inlined_call_operand.vmem [shape: f32[16,8], index: 1, kind: output, shape index: {}]
  // Predicated region
  $region2: #{tile.103} parent=0 // pred_check
    _
  $region3: #{tile.103} parent=0 // pred_check_branch
    %3 = sbr.rel (0) target = $region5
  $region4: #{tile.103} parent=0 // pred_region
    _
  $region5: #{tile.103} parent=0 // pred_fallthru
    _
  %v4 = vld [vmem:[%s0] ss:$0 sm:$0xff]
  %5 = vst [vmem:[%s1] sm:$0xff] %v4
  %s6 = scalar_lea.vmem %s1, 8
  %7 = vst [vmem:[%s6] sm:$0xff] %v4

// kernel: tile.104
$region0: #{tile.104}
  %s0 = inlined_call_operand.vmem [shape: f32[16,8], index: 0, kind: input, shape index: {}]
  %s1 = inlined_call_operand.vmem [shape: f32[1,128], index: 1, kind: output, shape index: {}]
  $region1: #{tile.104} parent=0
    #allocation0 [shape = 'u8[4096]{0}', space=vmem, size = 0x1000, scoped, tag = 'scoped mem for output reshape']
    %v2 = vld [vmem:[%s0] sm:$0x1]
    %vm3 = vcmask 64512
    %4 = vst.msk [vmem:[#allocation0] sm:$0x1] %vm3, %v2
    %s5 = scalar_lea.vmem %s0, 15
    %v6 = vld [vmem:[%s5] sm:$0x1]
    %7 = vrot.lane.b32.xlu0 %v6, 120
    %v8 = vpop.permute.xlu0 %7
    %vm9 = vcmask 1048512
    %10 = vst.msk [vmem:[#allocation0] sm:$0x1] %vm9, %v8
    %s11 = scalar_lea.vmem %s0, 14
    %v12 = vld [vmem:[%s11] sm:$0x1]
    %13 = vrot.lane.b32.xlu0 %v12, 112
    %v14 = vpop.permute.xlu0 %13
    %vm15 = vcmask 982912
    %16 = vst.msk [vmem:[#allocation0] sm:$0x1] %vm15, %v14
    %s17 = scalar_lea.vmem %s0, 13
    %v18 = vld [vmem:[%s17] sm:$0x1]
    %19 = vrot.lane.b32.xlu0 %v18, 104
    %v20 = vpop.permute.xlu0 %19
    %vm21 = vcmask 917312
    %22 = vst.msk [vmem:[#allocation0] sm:$0x1] %vm21, %v20
    %s23 = scalar_lea.vmem %s0, 12
    %v24 = vld [vmem:[%s23] sm:$0x1]
    %25 = vrot.lane.b32.xlu0 %v24, 96
    %v26 = vpop.permute.xlu0 %25
    %vm27 = vcmask 851712
    %28 = vst.msk [vmem:[#allocation0] sm:$0x1] %vm27, %v26
    %s29 = scalar_lea.vmem %s0, 11
    %v30 = vld [vmem:[%s29] sm:$0x1]
    %31 = vrot.lane.b32.xlu0 %v30, 88
    %v32 = vpop.permute.xlu0 %31
    %vm33 = vcmask 786112
    %34 = vst.msk [vmem:[#allocation0] sm:$0x1] %vm33, %v32
    %s35 = scalar_lea.vmem %s0, 10
    %v36 = vld [vmem:[%s35] sm:$0x1]
    %37 = vrot.lane.b32.xlu0 %v36, 80
    %v38 = vpop.permute.xlu0 %37
    %vm39 = vcmask 720512
    %40 = vst.msk [vmem:[#allocation0] sm:$0x1] %vm39, %v38
    %s41 = scalar_lea.vmem %s0, 9
    %v42 = vld [vmem:[%s41] sm:$0x1]
    %43 = vrot.lane.b32.xlu0 %v42, 72
    %v44 = vpop.permute.xlu0 %43
    %vm45 = vcmask 654912
    %46 = vst.msk [vmem:[#allocation0] sm:$0x1] %vm45, %v44
    %s47 = scalar_lea.vmem %s0, 8
    %v48 = vld [vmem:[%s47] sm:$0x1]
    %49 = vrot.lane.b32.xlu0 %v48, 64
    %v50 = vpop.permute.xlu0 %49
    %vm51 = vcmask 589312
    %52 = vst.msk [vmem:[#allocation0] sm:$0x1] %vm51, %v50
    %s53 = scalar_lea.vmem %s0, 7
    %v54 = vld [vmem:[%s53] sm:$0x1]
    %55 = vrot.lane.b32.xlu0 %v54, 56
    %v56 = vpop.permute.xlu0 %55
    %vm57 = vcmask 523712
    %58 = vst.msk [vmem:[#allocation0] sm:$0x1] %vm57, %v56
    %s59 = scalar_lea.vmem %s0, 6
    %v60 = vld [vmem:[%s59] sm:$0x1]
    %61 = vrot.lane.b32.xlu0 %v60, 48
    %v62 = vpop.permute.xlu0 %61
    %vm63 = vcmask 458112
    %64 = vst.msk [vmem:[#allocation0] sm:$0x1] %vm63, %v62
    %s65 = scalar_lea.vmem %s0, 5
    %v66 = vld [vmem:[%s65] sm:$0x1]
    %67 = vrot.lane.b32.xlu0 %v66, 40
    %v68 = vpop.permute.xlu0 %67
    %vm69 = vcmask 392512
    %70 = vst.msk [vmem:[#allocation0] sm:$0x1] %vm69, %v68
    %s71 = scalar_lea.vmem %s0, 4
    %v72 = vld [vmem:[%s71] sm:$0x1]
    %73 = vrot.lane.b32.xlu0 %v72, 32
    %v74 = vpop.permute.xlu0 %73
    %vm75 = vcmask 326912
    %76 = vst.msk [vmem:[#allocation0] sm:$0x1] %vm75, %v74
    %s77 = scalar_lea.vmem %s0, 3
    %v78 = vld [vmem:[%s77] sm:$0x1]
    %79 = vrot.lane.b32.xlu0 %v78, 24
    %v80 = vpop.permute.xlu0 %79
    %vm81 = vcmask 261312
    %82 = vst.msk [vmem:[#allocation0] sm:$0x1] %vm81, %v80
    %s83 = scalar_lea.vmem %s0, 2
    %v84 = vld [vmem:[%s83] sm:$0x1]
    %85 = vrot.lane.b32.xlu0 %v84, 16
    %v86 = vpop.permute.xlu0 %85
    %vm87 = vcmask 195712
    %88 = vst.msk [vmem:[#allocation0] sm:$0x1] %vm87, %v86
    %s89 = scalar_lea.vmem %s0, 1
    %v90 = vld [vmem:[%s89] sm:$0x1]
    %91 = vrot.lane.b32.xlu0 %v90, 8
    %v92 = vpop.permute.xlu0 %91
    %vm93 = vcmask 130112
    %94 = vst.msk [vmem:[#allocation0] sm:$0x1] %vm93, %v92
    %s96 = sshllo.u32 0, 1
    %v98 = vld [vmem:[#allocation0] sm:%s96]
    %s99 = sshllo.u32 0, 1
    %100 = vst [vmem:[%s1] sm:%s99] %v98

// kernel: fwd.1
$region0: #{fwd.1}
  #allocation0 [shape = 'u32[]', space=smem, size = 0x4, offset = 0x4, fixed_abs, tag = 'smem constant byte address 0x4 - core index']
  #allocation1 [shape = 'u32[144,128]{1,0:T(1,128)}', space=vmem, size = 0x12000, scoped, tag = 'internal scratch']
  %s0 = inlined_call_operand.vmem [shape: bf16[8,16,128], index: 0, kind: input, shape index: {}]
  %s1 = inlined_call_operand.vmem [shape: bf16[384,128], index: 1, kind: input, shape index: {}]
  %s2 = inlined_call_operand.vmem [shape: f32[1,128], index: 2, kind: input, shape index: {}]
  %s3 = inlined_call_operand.vmem [shape: f32[1,128], index: 3, kind: input, shape index: {}]
  %s4 = inlined_call_operand.vmem [shape: bf16[384,128], index: 4, kind: input, shape index: {}]
  %s5 = inlined_call_operand.vmem [shape: f32[1,128], index: 5, kind: input, shape index: {}]
  %s6 = inlined_call_operand.vmem [shape: f32[1,128], index: 6, kind: input, shape index: {}]
  %s7 = inlined_call_operand.vmem [shape: bf16[128,8], index: 7, kind: input, shape index: {}]
  %s8 = inlined_call_operand.vmem [shape: f32[1,8], index: 8, kind: input, shape index: {}]
  %s9 = inlined_call_operand.vmem [shape: f32[1,8], index: 9, kind: input, shape index: {}]
  %s10 = inlined_call_operand.vmem [shape: f32[1,8], index: 10, kind: input, shape index: {}]
  %s11 = inlined_call_operand.vmem [shape: bf16[8,128], index: 11, kind: input, shape index: {}]
  %s12 = inlined_call_operand.vmem [shape: f32[1,128], index: 12, kind: input, shape index: {}]
  %s13 = inlined_call_operand.vmem [shape: bf16[128,128], index: 13, kind: input, shape index: {}]
  %s14 = inlined_call_operand.vmem [shape: f32[1,128], index: 14, kind: input, shape index: {}]
  %s15 = inlined_call_operand.vmem [shape: f32[1,128], index: 15, kind: input, shape index: {}]
  %s16 = inlined_call_operand.vmem [shape: f32[1,128], index: 16, kind: input, shape index: {}]
  %s17 = inlined_call_operand.vmem [shape: bf16[128,128], index: 17, kind: input, shape index: {}]
  %s18 = inlined_call_operand.vmem [shape: f32[1,128], index: 18, kind: input, shape index: {}]
  %s19 = inlined_call_operand.vmem [shape: bf16[8,16,128], index: 19, kind: output, shape index: {}]
  %s20 = sld [smem:[#allocation0]]
  $region109: #{fwd.1} parent=0
    _
  %s22 = ssub.s32 1, %s20
  %s23 = scalar_select 0, %s22, %s20
  loop: start=0, step=1, limit=4
  $region2: #{fwd.1} parent=0 // loop_pre_header
    _
  $region3: #{fwd.1} parent=0 // loop_header
    %s25 = sphi 0, %s29
    %p26 = scmp.ge.s32.totalorder %s25, 4
    %s35 = sphi 0, %s37
    %s38 = sphi 0, %s35
    %s39 = sphi 0, %s38
    %s55 = sphi 0, %s39
    %s59 = sphi 0, %s59
    %s61 = sphi 0, %s59
    %s62 = sphi 0, %s61
    %s76 = sphi 0, %s62
    %s80 = sphi 0, %s80
    %s82 = sphi 0, %s80
    %s83 = sphi 0, %s82
    %s97 = sphi 0, %s83
    %s101 = sphi 0, %s101
    %s103 = sphi 0, %s101
    %s104 = sphi 0, %s103
    %s118 = sphi 0, %s104
    %s122 = sphi 0, %s122
    %s124 = sphi 0, %s122
    %s125 = sphi 0, %s124
    %s139 = sphi 0, %s125
    %s143 = sphi 0, %s143
    %s145 = sphi 0, %s143
    %s146 = sphi 0, %s145
    %s160 = sphi 0, %s146
    %s164 = sphi 0, %s164
    %s166 = sphi 0, %s164
    %s167 = sphi 0, %s166
    %s181 = sphi 0, %s167
    %s185 = sphi 0, %s185
    %s187 = sphi 0, %s185
    %s188 = sphi 0, %s187
    %s202 = sphi 0, %s188
    %s206 = sphi 0, %s206
    %s208 = sphi 0, %s206
    %s209 = sphi 0, %s208
    %s223 = sphi 0, %s209
    %s227 = sphi 0, %s227
    %s229 = sphi 0, %s227
    %s230 = sphi 0, %s229
    %s244 = sphi 0, %s230
    %s248 = sphi 0, %s248
    %s250 = sphi 0, %s248
    %s251 = sphi 0, %s250
    %s265 = sphi 0, %s251
    %s269 = sphi 0, %s269
    %s271 = sphi 0, %s269
    %s272 = sphi 0, %s271
    %s286 = sphi 0, %s272
    %s290 = sphi 0, %s290
    %s292 = sphi 0, %s290
    %s293 = sphi 0, %s292
    %s307 = sphi 0, %s293
    %s311 = sphi 0, %s311
    %s313 = sphi 0, %s311
    %s314 = sphi 0, %s313
    %s328 = sphi 0, %s314
    %s332 = sphi 0, %s332
    %s334 = sphi 0, %s332
    %s335 = sphi 0, %s334
    %s349 = sphi 0, %s335
    %s353 = sphi 0, %s353
    %s355 = sphi 0, %s353
    %s356 = sphi 0, %s355
    %s370 = sphi 0, %s356
    %s374 = sphi 0, %s374
    %s376 = sphi 0, %s374
    %s377 = sphi 0, %s376
    %s391 = sphi 0, %s377
    %s395 = sphi 0, %s395
    %s397 = sphi 0, %s395
    %s398 = sphi 0, %s397
    %s412 = sphi 0, %s398
    %s416 = sphi 0, %s416
    %s418 = sphi 0, %s416
    %s419 = sphi 0, %s418
    %s433 = sphi 0, %s419
    %s439 = sphi 0, %s441
    %s442 = sphi 0, %s439
    %s443 = sphi 0, %s442
    %s459 = sphi 0, %s443
  $region4: #{fwd.1} parent=0 // loop_header_branch
    %28 = sbr.rel (%p26) target = $region8
  $region5: #{fwd.1} parent=0 // loop_body
    %s30 = ssub.s32 %s25, 1
    %s31 = ssub.s32 %s25, 2
    %s32 = sadd.s32 %s25, 1
    %s33 = ssub.s32 %s25, %s32
    %p34 = scmp.eq.s32.totalorder %s33, 0
    %s36 = sadd.s32 %s35, 1
    %s37 = scalar_select %p34, %s35, %s36
    %p40 = pneg %p34
    %p41 = scmp.eq.s32.totalorder %s25, 1
    %p42 = por %p40, %p41
    %p43 = scmp.ne.s32.totalorder %s35, %s38
    %p44 = scmp.eq.s32.totalorder %s25, 0
    %p45 = por %p43, %p44
    %p46 = scmp.ne.s32.totalorder %s35, %s38
    %p47 = scmp.eq.s32.totalorder %s30, 1
    %p48 = por %p46, %p47
    %p49 = scmp.ne.s32.totalorder %s38, %s39
    %p50 = scmp.eq.s32.totalorder %s30, 0
    %p51 = por %p49, %p50
    %p52 = scmp.ne.s32.totalorder %s38, %s39
    %p53 = scmp.eq.s32.totalorder %s31, 1
    %p54 = por %p52, %p53
    %p56 = scmp.ne.s32.totalorder %s39, %s55
    %p57 = scmp.eq.s32.totalorder %s31, 0
    %p58 = por %p56, %p57
    %s60 = sadd.s32 %s59, 1
    %p63 = scmp.eq.s32.totalorder %s25, 1
    %p64 = scmp.ne.s32.totalorder %s59, %s61
    %p65 = scmp.eq.s32.totalorder %s25, 0
    %p66 = por %p64, %p65
    %p67 = scmp.ne.s32.totalorder %s59, %s61
    %p68 = scmp.eq.s32.totalorder %s30, 1
    %p69 = por %p67, %p68
    %p70 = scmp.ne.s32.totalorder %s61, %s62
    %p71 = scmp.eq.s32.totalorder %s30, 0
    %p72 = por %p70, %p71
    %p73 = scmp.ne.s32.totalorder %s61, %s62
    %p74 = scmp.eq.s32.totalorder %s31, 1
    %p75 = por %p73, %p74
    %p77 = scmp.ne.s32.totalorder %s62, %s76
    %p78 = scmp.eq.s32.totalorder %s31, 0
    %p79 = por %p77, %p78
    %s81 = sadd.s32 %s80, 1
    %p84 = scmp.eq.s32.totalorder %s25, 1
    %p85 = scmp.ne.s32.totalorder %s80, %s82
    %p86 = scmp.eq.s32.totalorder %s25, 0
    %p87 = por %p85, %p86
    %p88 = scmp.ne.s32.totalorder %s80, %s82
    %p89 = scmp.eq.s32.totalorder %s30, 1
    %p90 = por %p88, %p89
    %p91 = scmp.ne.s32.totalorder %s82, %s83
    %p92 = scmp.eq.s32.totalorder %s30, 0
    %p93 = por %p91, %p92
    %p94 = scmp.ne.s32.totalorder %s82, %s83
    %p95 = scmp.eq.s32.totalorder %s31, 1
    %p96 = por %p94, %p95
    %p98 = scmp.ne.s32.totalorder %s83, %s97
    %p99 = scmp.eq.s32.totalorder %s31, 0
    %p100 = por %p98, %p99
    %s102 = sadd.s32 %s101, 1
    %p105 = scmp.eq.s32.totalorder %s25, 1
    %p106 = scmp.ne.s32.totalorder %s101, %s103
    %p107 = scmp.eq.s32.totalorder %s25, 0
    %p108 = por %p106, %p107
    %p109 = scmp.ne.s32.totalorder %s101, %s103
    %p110 = scmp.eq.s32.totalorder %s30, 1
    %p111 = por %p109, %p110
    %p112 = scmp.ne.s32.totalorder %s103, %s104
    %p113 = scmp.eq.s32.totalorder %s30, 0
    %p114 = por %p112, %p113
    %p115 = scmp.ne.s32.totalorder %s103, %s104
    %p116 = scmp.eq.s32.totalorder %s31, 1
    %p117 = por %p115, %p116
    %p119 = scmp.ne.s32.totalorder %s104, %s118
    %p120 = scmp.eq.s32.totalorder %s31, 0
    %p121 = por %p119, %p120
    %s123 = sadd.s32 %s122, 1
    %p126 = scmp.eq.s32.totalorder %s25, 1
    %p127 = scmp.ne.s32.totalorder %s122, %s124
    %p128 = scmp.eq.s32.totalorder %s25, 0
    %p129 = por %p127, %p128
    %p130 = scmp.ne.s32.totalorder %s122, %s124
    %p131 = scmp.eq.s32.totalorder %s30, 1
    %p132 = por %p130, %p131
    %p133 = scmp.ne.s32.totalorder %s124, %s125
    %p134 = scmp.eq.s32.totalorder %s30, 0
    %p135 = por %p133, %p134
    %p136 = scmp.ne.s32.totalorder %s124, %s125
    %p137 = scmp.eq.s32.totalorder %s31, 1
    %p138 = por %p136, %p137
    %p140 = scmp.ne.s32.totalorder %s125, %s139
    %p141 = scmp.eq.s32.totalorder %s31, 0
    %p142 = por %p140, %p141
    %s144 = sadd.s32 %s143, 1
    %p147 = scmp.eq.s32.totalorder %s25, 1
    %p148 = scmp.ne.s32.totalorder %s143, %s145
    %p149 = scmp.eq.s32.totalorder %s25, 0
    %p150 = por %p148, %p149
    %p151 = scmp.ne.s32.totalorder %s143, %s145
    %p152 = scmp.eq.s32.totalorder %s30, 1
    %p153 = por %p151, %p152
    %p154 = scmp.ne.s32.totalorder %s145, %s146
    %p155 = scmp.eq.s32.totalorder %s30, 0
    %p156 = por %p154, %p155
    %p157 = scmp.ne.s32.totalorder %s145, %s146
    %p158 = scmp.eq.s32.totalorder %s31, 1
    %p159 = por %p157, %p158
    %p161 = scmp.ne.s32.totalorder %s146, %s160
    %p162 = scmp.eq.s32.totalorder %s31, 0
    %p163 = por %p161, %p162
    %s165 = sadd.s32 %s164, 1
    %p168 = scmp.eq.s32.totalorder %s25, 1
    %p169 = scmp.ne.s32.totalorder %s164, %s166
    %p170 = scmp.eq.s32.totalorder %s25, 0
    %p171 = por %p169, %p170
    %p172 = scmp.ne.s32.totalorder %s164, %s166
    %p173 = scmp.eq.s32.totalorder %s30, 1
    %p174 = por %p172, %p173
    %p175 = scmp.ne.s32.totalorder %s166, %s167
    %p176 = scmp.eq.s32.totalorder %s30, 0
    %p177 = por %p175, %p176
    %p178 = scmp.ne.s32.totalorder %s166, %s167
    %p179 = scmp.eq.s32.totalorder %s31, 1
    %p180 = por %p178, %p179
    %p182 = scmp.ne.s32.totalorder %s167, %s181
    %p183 = scmp.eq.s32.totalorder %s31, 0
    %p184 = por %p182, %p183
    %s186 = sadd.s32 %s185, 1
    %p189 = scmp.eq.s32.totalorder %s25, 1
    %p190 = scmp.ne.s32.totalorder %s185, %s187
    %p191 = scmp.eq.s32.totalorder %s25, 0
    %p192 = por %p190, %p191
    %p193 = scmp.ne.s32.totalorder %s185, %s187
    %p194 = scmp.eq.s32.totalorder %s30, 1
    %p195 = por %p193, %p194
    %p196 = scmp.ne.s32.totalorder %s187, %s188
    %p197 = scmp.eq.s32.totalorder %s30, 0
    %p198 = por %p196, %p197
    %p199 = scmp.ne.s32.totalorder %s187, %s188
    %p200 = scmp.eq.s32.totalorder %s31, 1
    %p201 = por %p199, %p200
    %p203 = scmp.ne.s32.totalorder %s188, %s202
    %p204 = scmp.eq.s32.totalorder %s31, 0
    %p205 = por %p203, %p204
    %s207 = sadd.s32 %s206, 1
    %p210 = scmp.eq.s32.totalorder %s25, 1
    %p211 = scmp.ne.s32.totalorder %s206, %s208
    %p212 = scmp.eq.s32.totalorder %s25, 0
    %p213 = por %p211, %p212
    %p214 = scmp.ne.s32.totalorder %s206, %s208
    %p215 = scmp.eq.s32.totalorder %s30, 1
    %p216 = por %p214, %p215
    %p217 = scmp.ne.s32.totalorder %s208, %s209
    %p218 = scmp.eq.s32.totalorder %s30, 0
    %p219 = por %p217, %p218
    %p220 = scmp.ne.s32.totalorder %s208, %s209
    %p221 = scmp.eq.s32.totalorder %s31, 1
    %p222 = por %p220, %p221
    %p224 = scmp.ne.s32.totalorder %s209, %s223
    %p225 = scmp.eq.s32.totalorder %s31, 0
    %p226 = por %p224, %p225
    %s228 = sadd.s32 %s227, 1
    %p231 = scmp.eq.s32.totalorder %s25, 1
    %p232 = scmp.ne.s32.totalorder %s227, %s229
    %p233 = scmp.eq.s32.totalorder %s25, 0
    %p234 = por %p232, %p233
    %p235 = scmp.ne.s32.totalorder %s227, %s229
    %p236 = scmp.eq.s32.totalorder %s30, 1
    %p237 = por %p235, %p236
    %p238 = scmp.ne.s32.totalorder %s229, %s230
    %p239 = scmp.eq.s32.totalorder %s30, 0
    %p240 = por %p238, %p239
    %p241 = scmp.ne.s32.totalorder %s229, %s230
    %p242 = scmp.eq.s32.totalorder %s31, 1
    %p243 = por %p241, %p242
    %p245 = scmp.ne.s32.totalorder %s230, %s244
    %p246 = scmp.eq.s32.totalorder %s31, 0
    %p247 = por %p245, %p246
    %s249 = sadd.s32 %s248, 1
    %p252 = scmp.eq.s32.totalorder %s25, 1
    %p253 = scmp.ne.s32.totalorder %s248, %s250
    %p254 = scmp.eq.s32.totalorder %s25, 0
    %p255 = por %p253, %p254
    %p256 = scmp.ne.s32.totalorder %s248, %s250
    %p257 = scmp.eq.s32.totalorder %s30, 1
    %p258 = por %p256, %p257
    %p259 = scmp.ne.s32.totalorder %s250, %s251
    %p260 = scmp.eq.s32.totalorder %s30, 0
    %p261 = por %p259, %p260
    %p262 = scmp.ne.s32.totalorder %s250, %s251
    %p263 = scmp.eq.s32.totalorder %s31, 1
    %p264 = por %p262, %p263
    %p266 = scmp.ne.s32.totalorder %s251, %s265
    %p267 = scmp.eq.s32.totalorder %s31, 0
    %p268 = por %p266, %p267
    %s270 = sadd.s32 %s269, 1
    %p273 = scmp.eq.s32.totalorder %s25, 1
    %p274 = scmp.ne.s32.totalorder %s269, %s271
    %p275 = scmp.eq.s32.totalorder %s25, 0
    %p276 = por %p274, %p275
    %p277 = scmp.ne.s32.totalorder %s269, %s271
    %p278 = scmp.eq.s32.totalorder %s30, 1
    %p279 = por %p277, %p278
    %p280 = scmp.ne.s32.totalorder %s271, %s272
    %p281 = scmp.eq.s32.totalorder %s30, 0
    %p282 = por %p280, %p281
    %p283 = scmp.ne.s32.totalorder %s271, %s272
    %p284 = scmp.eq.s32.totalorder %s31, 1
    %p285 = por %p283, %p284
    %p287 = scmp.ne.s32.totalorder %s272, %s286
    %p288 = scmp.eq.s32.totalorder %s31, 0
    %p289 = por %p287, %p288
    %s291 = sadd.s32 %s290, 1
    %p294 = scmp.eq.s32.totalorder %s25, 1
    %p295 = scmp.ne.s32.totalorder %s290, %s292
    %p296 = scmp.eq.s32.totalorder %s25, 0
    %p297 = por %p295, %p296
    %p298 = scmp.ne.s32.totalorder %s290, %s292
    %p299 = scmp.eq.s32.totalorder %s30, 1
    %p300 = por %p298, %p299
    %p301 = scmp.ne.s32.totalorder %s292, %s293
    %p302 = scmp.eq.s32.totalorder %s30, 0
    %p303 = por %p301, %p302
    %p304 = scmp.ne.s32.totalorder %s292, %s293
    %p305 = scmp.eq.s32.totalorder %s31, 1
    %p306 = por %p304, %p305
    %p308 = scmp.ne.s32.totalorder %s293, %s307
    %p309 = scmp.eq.s32.totalorder %s31, 0
    %p310 = por %p308, %p309
    %s312 = sadd.s32 %s311, 1
    %p315 = scmp.eq.s32.totalorder %s25, 1
    %p316 = scmp.ne.s32.totalorder %s311, %s313
    %p317 = scmp.eq.s32.totalorder %s25, 0
    %p318 = por %p316, %p317
    %p319 = scmp.ne.s32.totalorder %s311, %s313
    %p320 = scmp.eq.s32.totalorder %s30, 1
    %p321 = por %p319, %p320
    %p322 = scmp.ne.s32.totalorder %s313, %s314
    %p323 = scmp.eq.s32.totalorder %s30, 0
    %p324 = por %p322, %p323
    %p325 = scmp.ne.s32.totalorder %s313, %s314
    %p326 = scmp.eq.s32.totalorder %s31, 1
    %p327 = por %p325, %p326
    %p329 = scmp.ne.s32.totalorder %s314, %s328
    %p330 = scmp.eq.s32.totalorder %s31, 0
    %p331 = por %p329, %p330
    %s333 = sadd.s32 %s332, 1
    %p336 = scmp.eq.s32.totalorder %s25, 1
    %p337 = scmp.ne.s32.totalorder %s332, %s334
    %p338 = scmp.eq.s32.totalorder %s25, 0
    %p339 = por %p337, %p338
    %p340 = scmp.ne.s32.totalorder %s332, %s334
    %p341 = scmp.eq.s32.totalorder %s30, 1
    %p342 = por %p340, %p341
    %p343 = scmp.ne.s32.totalorder %s334, %s335
    %p344 = scmp.eq.s32.totalorder %s30, 0
    %p345 = por %p343, %p344
    %p346 = scmp.ne.s32.totalorder %s334, %s335
    %p347 = scmp.eq.s32.totalorder %s31, 1
    %p348 = por %p346, %p347
    %p350 = scmp.ne.s32.totalorder %s335, %s349
    %p351 = scmp.eq.s32.totalorder %s31, 0
    %p352 = por %p350, %p351
    %s354 = sadd.s32 %s353, 1
    %p357 = scmp.eq.s32.totalorder %s25, 1
    %p358 = scmp.ne.s32.totalorder %s353, %s355
    %p359 = scmp.eq.s32.totalorder %s25, 0
    %p360 = por %p358, %p359
    %p361 = scmp.ne.s32.totalorder %s353, %s355
    %p362 = scmp.eq.s32.totalorder %s30, 1
    %p363 = por %p361, %p362
    %p364 = scmp.ne.s32.totalorder %s355, %s356
    %p365 = scmp.eq.s32.totalorder %s30, 0
    %p366 = por %p364, %p365
    %p367 = scmp.ne.s32.totalorder %s355, %s356
    %p368 = scmp.eq.s32.totalorder %s31, 1
    %p369 = por %p367, %p368
    %p371 = scmp.ne.s32.totalorder %s356, %s370
    %p372 = scmp.eq.s32.totalorder %s31, 0
    %p373 = por %p371, %p372
    %s375 = sadd.s32 %s374, 1
    %p378 = scmp.eq.s32.totalorder %s25, 1
    %p379 = scmp.ne.s32.totalorder %s374, %s376
    %p380 = scmp.eq.s32.totalorder %s25, 0
    %p381 = por %p379, %p380
    %p382 = scmp.ne.s32.totalorder %s374, %s376
    %p383 = scmp.eq.s32.totalorder %s30, 1
    %p384 = por %p382, %p383
    %p385 = scmp.ne.s32.totalorder %s376, %s377
    %p386 = scmp.eq.s32.totalorder %s30, 0
    %p387 = por %p385, %p386
    %p388 = scmp.ne.s32.totalorder %s376, %s377
    %p389 = scmp.eq.s32.totalorder %s31, 1
    %p390 = por %p388, %p389
    %p392 = scmp.ne.s32.totalorder %s377, %s391
    %p393 = scmp.eq.s32.totalorder %s31, 0
    %p394 = por %p392, %p393
    %s396 = sadd.s32 %s395, 1
    %p399 = scmp.eq.s32.totalorder %s25, 1
    %p400 = scmp.ne.s32.totalorder %s395, %s397
    %p401 = scmp.eq.s32.totalorder %s25, 0
    %p402 = por %p400, %p401
    %p403 = scmp.ne.s32.totalorder %s395, %s397
    %p404 = scmp.eq.s32.totalorder %s30, 1
    %p405 = por %p403, %p404
    %p406 = scmp.ne.s32.totalorder %s397, %s398
    %p407 = scmp.eq.s32.totalorder %s30, 0
    %p408 = por %p406, %p407
    %p409 = scmp.ne.s32.totalorder %s397, %s398
    %p410 = scmp.eq.s32.totalorder %s31, 1
    %p411 = por %p409, %p410
    %p413 = scmp.ne.s32.totalorder %s398, %s412
    %p414 = scmp.eq.s32.totalorder %s31, 0
    %p415 = por %p413, %p414
    %s417 = sadd.s32 %s416, 1
    %p420 = scmp.eq.s32.totalorder %s25, 1
    %p421 = scmp.ne.s32.totalorder %s416, %s418
    %p422 = scmp.eq.s32.totalorder %s25, 0
    %p423 = por %p421, %p422
    %p424 = scmp.ne.s32.totalorder %s416, %s418
    %p425 = scmp.eq.s32.totalorder %s30, 1
    %p426 = por %p424, %p425
    %p427 = scmp.ne.s32.totalorder %s418, %s419
    %p428 = scmp.eq.s32.totalorder %s30, 0
    %p429 = por %p427, %p428
    %p430 = scmp.ne.s32.totalorder %s418, %s419
    %p431 = scmp.eq.s32.totalorder %s31, 1
    %p432 = por %p430, %p431
    %p434 = scmp.ne.s32.totalorder %s419, %s433
    %p435 = scmp.eq.s32.totalorder %s31, 0
    %p436 = por %p434, %p435
    %s437 = ssub.s32 %s25, %s32
    %p438 = scmp.eq.s32.totalorder %s437, 0
    %s440 = sadd.s32 %s439, 1
    %s441 = scalar_select %p438, %s439, %s440
    %p444 = pneg %p438
    %p445 = scmp.eq.s32.totalorder %s25, 1
    %p446 = por %p444, %p445
    %p447 = scmp.ne.s32.totalorder %s439, %s442
    %p448 = scmp.eq.s32.totalorder %s25, 0
    %p449 = por %p447, %p448
    %p450 = scmp.ne.s32.totalorder %s439, %s442
    %p451 = scmp.eq.s32.totalorder %s30, 1
    %p452 = por %p450, %p451
    %p453 = scmp.ne.s32.totalorder %s442, %s443
    %p454 = scmp.eq.s32.totalorder %s30, 0
    %p455 = por %p453, %p454
    %p456 = scmp.ne.s32.totalorder %s442, %s443
    %p457 = scmp.eq.s32.totalorder %s31, 1
    %p458 = por %p456, %p457
    %p460 = scmp.ne.s32.totalorder %s443, %s459
    %p461 = scmp.eq.s32.totalorder %s31, 0
    %p462 = por %p460, %p461
    %p463 = scmp.le.s32.totalorder 1, %s25
    %p464 = scmp.lt.s32.totalorder %s25, 3
    %p465 = pnand %p463, %p464
    %p466 = pneg %p465
    // Predicated region
    $region9: #{fwd.1} parent=5 // pred_check
      _
    $region10: #{fwd.1} parent=5 // pred_check_branch
      %468 = sbr.rel (%p465) target = $region12
    $region11: #{fwd.1} parent=5 // pred_region
      %s469 = ssub.s32 %s25, 1
      // Predicated region
      $region13: #{fwd.1} parent=11 // pred_check
        %p470 = pneg %p72
      $region14: #{fwd.1} parent=11 // pred_check_branch
        %472 = sbr.rel (%p470) target = $region16
      $region15: #{fwd.1} parent=11 // pred_region
        _
      $region16: #{fwd.1} parent=11 // pred_fallthru
        _
      // Predicated region
      $region17: #{fwd.1} parent=11 // pred_check
        %p473 = pneg %p93
      $region18: #{fwd.1} parent=11 // pred_check_branch
        %475 = sbr.rel (%p473) target = $region20
      $region19: #{fwd.1} parent=11 // pred_region
        _
      $region20: #{fwd.1} parent=11 // pred_fallthru
        _
      // Predicated region
      $region21: #{fwd.1} parent=11 // pred_check
        %p476 = pneg %p114
      $region22: #{fwd.1} parent=11 // pred_check_branch
        %478 = sbr.rel (%p476) target = $region24
      $region23: #{fwd.1} parent=11 // pred_region
        _
      $region24: #{fwd.1} parent=11 // pred_fallthru
        _
      // Predicated region
      $region25: #{fwd.1} parent=11 // pred_check
        %p479 = pneg %p135
      $region26: #{fwd.1} parent=11 // pred_check_branch
        %481 = sbr.rel (%p479) target = $region28
      $region27: #{fwd.1} parent=11 // pred_region
        _
      $region28: #{fwd.1} parent=11 // pred_fallthru
        _
      // Predicated region
      $region29: #{fwd.1} parent=11 // pred_check
        %p482 = pneg %p156
      $region30: #{fwd.1} parent=11 // pred_check_branch
        %484 = sbr.rel (%p482) target = $region32
      $region31: #{fwd.1} parent=11 // pred_region
        _
      $region32: #{fwd.1} parent=11 // pred_fallthru
        _
      // Predicated region
      $region33: #{fwd.1} parent=11 // pred_check
        %p485 = pneg %p177
      $region34: #{fwd.1} parent=11 // pred_check_branch
        %487 = sbr.rel (%p485) target = $region36
      $region35: #{fwd.1} parent=11 // pred_region
        _
      $region36: #{fwd.1} parent=11 // pred_fallthru
        _
      // Predicated region
      $region37: #{fwd.1} parent=11 // pred_check
        %p488 = pneg %p198
      $region38: #{fwd.1} parent=11 // pred_check_branch
        %490 = sbr.rel (%p488) target = $region40
      $region39: #{fwd.1} parent=11 // pred_region
        _
      $region40: #{fwd.1} parent=11 // pred_fallthru
        _
      // Predicated region
      $region41: #{fwd.1} parent=11 // pred_check
        %p491 = pneg %p219
      $region42: #{fwd.1} parent=11 // pred_check_branch
        %493 = sbr.rel (%p491) target = $region44
      $region43: #{fwd.1} parent=11 // pred_region
        _
      $region44: #{fwd.1} parent=11 // pred_fallthru
        _
      // Predicated region
      $region45: #{fwd.1} parent=11 // pred_check
        %p494 = pneg %p240
      $region46: #{fwd.1} parent=11 // pred_check_branch
        %496 = sbr.rel (%p494) target = $region48
      $region47: #{fwd.1} parent=11 // pred_region
        _
      $region48: #{fwd.1} parent=11 // pred_fallthru
        _
      // Predicated region
      $region49: #{fwd.1} parent=11 // pred_check
        %p497 = pneg %p261
      $region50: #{fwd.1} parent=11 // pred_check_branch
        %499 = sbr.rel (%p497) target = $region52
      $region51: #{fwd.1} parent=11 // pred_region
        _
      $region52: #{fwd.1} parent=11 // pred_fallthru
        _
      // Predicated region
      $region53: #{fwd.1} parent=11 // pred_check
        %p500 = pneg %p282
      $region54: #{fwd.1} parent=11 // pred_check_branch
        %502 = sbr.rel (%p500) target = $region56
      $region55: #{fwd.1} parent=11 // pred_region
        _
      $region56: #{fwd.1} parent=11 // pred_fallthru
        _
      // Predicated region
      $region57: #{fwd.1} parent=11 // pred_check
        %p503 = pneg %p303
      $region58: #{fwd.1} parent=11 // pred_check_branch
        %505 = sbr.rel (%p503) target = $region60
      $region59: #{fwd.1} parent=11 // pred_region
        _
      $region60: #{fwd.1} parent=11 // pred_fallthru
        _
      // Predicated region
      $region61: #{fwd.1} parent=11 // pred_check
        %p506 = pneg %p324
      $region62: #{fwd.1} parent=11 // pred_check_branch
        %508 = sbr.rel (%p506) target = $region64
      $region63: #{fwd.1} parent=11 // pred_region
        _
      $region64: #{fwd.1} parent=11 // pred_fallthru
        _
      // Predicated region
      $region65: #{fwd.1} parent=11 // pred_check
        %p509 = pneg %p345
      $region66: #{fwd.1} parent=11 // pred_check_branch
        %511 = sbr.rel (%p509) target = $region68
      $region67: #{fwd.1} parent=11 // pred_region
        _
      $region68: #{fwd.1} parent=11 // pred_fallthru
        _
      // Predicated region
      $region69: #{fwd.1} parent=11 // pred_check
        %p512 = pneg %p366
      $region70: #{fwd.1} parent=11 // pred_check_branch
        %514 = sbr.rel (%p512) target = $region72
      $region71: #{fwd.1} parent=11 // pred_region
        _
      $region72: #{fwd.1} parent=11 // pred_fallthru
        _
      // Predicated region
      $region73: #{fwd.1} parent=11 // pred_check
        %p515 = pneg %p387
      $region74: #{fwd.1} parent=11 // pred_check_branch
        %517 = sbr.rel (%p515) target = $region76
      $region75: #{fwd.1} parent=11 // pred_region
        _
      $region76: #{fwd.1} parent=11 // pred_fallthru
        _
      // Predicated region
      $region77: #{fwd.1} parent=11 // pred_check
        %p518 = pneg %p408
      $region78: #{fwd.1} parent=11 // pred_check_branch
        %520 = sbr.rel (%p518) target = $region80
      $region79: #{fwd.1} parent=11 // pred_region
        _
      $region80: #{fwd.1} parent=11 // pred_fallthru
        _
      // Predicated region
      $region81: #{fwd.1} parent=11 // pred_check
        %p521 = pneg %p429
      $region82: #{fwd.1} parent=11 // pred_check_branch
        %523 = sbr.rel (%p521) target = $region84
      $region83: #{fwd.1} parent=11 // pred_region
        _
      $region84: #{fwd.1} parent=11 // pred_fallthru
        _
    $region12: #{fwd.1} parent=5 // pred_fallthru
      _
    %p524 = scmp.lt.s32.totalorder %s25, 2
    // Predicated region
    $region85: #{fwd.1} parent=5 // pred_check
      %p525 = pneg %p524
    $region86: #{fwd.1} parent=5 // pred_check_branch
      %527 = sbr.rel (%p525) target = $region88
    $region87: #{fwd.1} parent=5 // pred_region
      // Predicated region
      $region89: #{fwd.1} parent=87 // pred_check
        %p528 = pneg %p45
      $region90: #{fwd.1} parent=87 // pred_check_branch
        %530 = sbr.rel (%p528) target = $region92
      $region91: #{fwd.1} parent=87 // pred_region
        %s531 = smul.u32 4, %s25
        %p532 = scmp.lt.s32.totalorder %s531, 7
        %s533 = scalar_select %p532, %s531, 7
        %s534 = smul.addr %s533, 2
        %s535 = smul.addr %s534, 4
        %s536 = scalar_lea.vmem %s0, %s535
        %s537 = smul.u32 4, %s25
      $region92: #{fwd.1} parent=87 // pred_fallthru
        _
    $region88: #{fwd.1} parent=5 // pred_fallthru
      _
    %p538 = scmp.le.s32.totalorder 1, %s25
    %p539 = scmp.lt.s32.totalorder %s25, 3
    %p540 = pnand %p538, %p539
    %p541 = pneg %p540
    // Predicated region
    $region93: #{fwd.1} parent=5 // pred_check
      _
    $region94: #{fwd.1} parent=5 // pred_check_branch
      %543 = sbr.rel (%p540) target = $region96
    $region95: #{fwd.1} parent=5 // pred_region
      %s544 = ssub.s32 %s25, 1
      %s545 = smul.u32 4, %s30
      %p546 = scmp.lt.s32.totalorder %s545, 7
      %s547 = scalar_select %p546, %s545, 7
      %s548 = smul.addr %s547, 2
      %s549 = smul.addr %s548, 4
      %s550 = scalar_lea.vmem %s0, %s549
      %p551 = pneg %p51
      %p552 = pneg %p48
      %p553 = pneg %p72
      %p554 = pneg %p69
      %p555 = pneg %p93
      %p556 = pneg %p90
      %p557 = pneg %p114
      %p558 = pneg %p111
      %p559 = pneg %p135
      %p560 = pneg %p132
      %p561 = pneg %p156
      %p562 = pneg %p153
      %p563 = pneg %p177
      %p564 = pneg %p174
      %p565 = pneg %p198
      %p566 = pneg %p195
      %p567 = pneg %p219
      %p568 = pneg %p216
      %p569 = pneg %p240
      %p570 = pneg %p237
      %p571 = pneg %p261
      %p572 = pneg %p258
      %p573 = pneg %p282
      %p574 = pneg %p279
      %p575 = pneg %p303
      %p576 = pneg %p300
      %p577 = pneg %p324
      %p578 = pneg %p321
      %p579 = pneg %p345
      %p580 = pneg %p342
      %p581 = pneg %p366
      %p582 = pneg %p363
      %p583 = pneg %p387
      %p584 = pneg %p384
      %p585 = pneg %p408
      %p586 = pneg %p405
      %p587 = pneg %p429
      %p588 = pneg %p426
      %p589 = pneg %p455
      %p590 = pneg %p452
      %s591 = smul.u32 4, %s30
      %p592 = scmp.lt.s32.totalorder %s591, 7
      %s593 = scalar_select %p592, %s591, 7
      %s594 = smul.addr %s593, 2
      %s595 = smul.addr %s594, 4
      %s596 = scalar_lea.vmem %s19, %s595
      %s597 = smul.u32 4, %s30
      %p598 = scmp.lt.s32.totalorder %s597, 7
      %s599 = scalar_select %p598, %s597, 7
      %s600 = smul.addr %s599, 2
      %s601 = smul.addr %s600, 4
      %s602 = scalar_lea.vmem %s0, %s601
      %s603 = smul.u32 4, %s30
      %s604 = smul.u32 4, %s30
      %p605 = scmp.lt.s32.totalorder %s604, 7
      %s606 = scalar_select %p605, %s604, 7
      %s607 = smul.addr %s606, 2
      %s608 = smul.addr %s607, 4
      %s609 = scalar_lea.vmem %s19, %s608
      %s610 = smul.u32 4, %s30
      %v612 = vld [vmem:[%s602] sm:$0xf]
      %v613 = vld [vmem:[%s602 + $0x4] sm:$0xf]
      %v614 = vld [vmem:[%s602 + $0x8] sm:$0xf]
      %v615 = vld [vmem:[%s602 + $0xc] sm:$0xf]
      %v616 = vld [vmem:[%s602 + $0x10] sm:$0xf]
      %v617 = vld [vmem:[%s602 + $0x14] sm:$0xf]
      %v618 = vld [vmem:[%s602 + $0x18] sm:$0xf]
      %v619 = vld [vmem:[%s602 + $0x1c] sm:$0xf]
      %v620 = vunpack.c.l.bf16 %v612
      %v621 = vunpack.c.l.bf16 %v613
      %v622 = vunpack.c.l.bf16 %v614
      %v623 = vunpack.c.l.bf16 %v615
      %v624 = vunpack.c.l.bf16 %v616
      %v625 = vunpack.c.l.bf16 %v617
      %v626 = vunpack.c.l.bf16 %v618
      %v627 = vunpack.c.l.bf16 %v619
      %v628 = vlaneseq
      %v629 = vshrl.u32 %v628, 7
      %v630 = vadd.s32 %v629, 8
      %v631 = vadd.s32 %v629, 16
      %v632 = vadd.s32 %v629, 24
      %v633 = vadd.s32 %v629, 32
      %v634 = vadd.s32 %v629, 40
      %v635 = vadd.s32 %v629, 48
      %v636 = vadd.s32 %v629, 56
      %vm637 = vcmp.lt.s32.totalorder %v629, 0
      %v638 = vsub.s32 0, %v629
      %v639 = vsel %vm637, %v638, %v629
      %v640 = vshrl.u32 %v639, 4
      %v641 = vand.u32 %v639, 15
      %v642 = vsub.s32 0, %v641
      %v643 = vsel %vm637, %v642, %v641
      %vm644 = vcmp.lt.s32.totalorder %v630, 0
      %v645 = vsub.s32 0, %v630
      %v646 = vsel %vm644, %v645, %v630
      %v647 = vshrl.u32 %v646, 4
      %v648 = vand.u32 %v646, 15
      %v649 = vsub.s32 0, %v648
      %v650 = vsel %vm644, %v649, %v648
      %vm651 = vcmp.lt.s32.totalorder %v631, 0
      %v652 = vsub.s32 0, %v631
      %v653 = vsel %vm651, %v652, %v631
      %v654 = vshrl.u32 %v653, 4
      %v655 = vand.u32 %v653, 15
      %v656 = vsub.s32 0, %v655
      %v657 = vsel %vm651, %v656, %v655
      %vm658 = vcmp.lt.s32.totalorder %v632, 0
      %v659 = vsub.s32 0, %v632
      %v660 = vsel %vm658, %v659, %v632
      %v661 = vshrl.u32 %v660, 4
      %v662 = vand.u32 %v660, 15
      %v663 = vsub.s32 0, %v662
      %v664 = vsel %vm658, %v663, %v662
      %vm665 = vcmp.lt.s32.totalorder %v633, 0
      %v666 = vsub.s32 0, %v633
      %v667 = vsel %vm665, %v666, %v633
      %v668 = vshrl.u32 %v667, 4
      %v669 = vand.u32 %v667, 15
      %v670 = vsub.s32 0, %v669
      %v671 = vsel %vm665, %v670, %v669
      %vm672 = vcmp.lt.s32.totalorder %v634, 0
      %v673 = vsub.s32 0, %v634
      %v674 = vsel %vm672, %v673, %v634
      %v675 = vshrl.u32 %v674, 4
      %v676 = vand.u32 %v674, 15
      %v677 = vsub.s32 0, %v676
      %v678 = vsel %vm672, %v677, %v676
      %vm679 = vcmp.lt.s32.totalorder %v635, 0
      %v680 = vsub.s32 0, %v635
      %v681 = vsel %vm679, %v680, %v635
      %v682 = vshrl.u32 %v681, 4
      %v683 = vand.u32 %v681, 15
      %v684 = vsub.s32 0, %v683
      %v685 = vsel %vm679, %v684, %v683
      %vm686 = vcmp.lt.s32.totalorder %v636, 0
      %v687 = vsub.s32 0, %v636
      %v688 = vsel %vm686, %v687, %v636
      %v689 = vshrl.u32 %v688, 4
      %v690 = vand.u32 %v688, 15
      %v691 = vsub.s32 0, %v690
      %v692 = vsel %vm686, %v691, %v690
      %vm693 = vcmp.ne.s32.totalorder %v643, 0
      %vm694 = vcmp.ne.s32.totalorder %v650, 0
      %vm695 = vcmp.ne.s32.totalorder %v657, 0
      %vm696 = vcmp.ne.s32.totalorder %v664, 0
      %vm697 = vcmp.ne.s32.totalorder %v671, 0
      %vm698 = vcmp.ne.s32.totalorder %v678, 0
      %vm699 = vcmp.ne.s32.totalorder %v685, 0
      %vm700 = vcmp.ne.s32.totalorder %v692, 0
      %vm701 = vcmp.lt.s32.totalorder %v643, 0
      %vm702 = vcmp.lt.s32.totalorder %v650, 0
      %vm703 = vcmp.lt.s32.totalorder %v657, 0
      %vm704 = vcmp.lt.s32.totalorder %v664, 0
      %vm705 = vcmp.lt.s32.totalorder %v671, 0
      %vm706 = vcmp.lt.s32.totalorder %v678, 0
      %vm707 = vcmp.lt.s32.totalorder %v685, 0
      %vm708 = vcmp.lt.s32.totalorder %v692, 0
      %vm709 = vmand %vm701, %vm693
      %vm710 = vmand %vm702, %vm694
      %vm711 = vmand %vm703, %vm695
      %vm712 = vmand %vm704, %vm696
      %vm713 = vmand %vm705, %vm697
      %vm714 = vmand %vm706, %vm698
      %vm715 = vmand %vm707, %vm699
      %vm716 = vmand %vm708, %vm700
      %v717 = vadd.s32 %v643, 16
      %v718 = vadd.s32 %v650, 16
      %v719 = vadd.s32 %v657, 16
      %v720 = vadd.s32 %v664, 16
      %v721 = vadd.s32 %v671, 16
      %v722 = vadd.s32 %v678, 16
      %v723 = vadd.s32 %v685, 16
      %v724 = vadd.s32 %v692, 16
      %v725 = vsel %vm709, %v717, %v643
      %v726 = vsel %vm710, %v718, %v650
      %v727 = vsel %vm711, %v719, %v657
      %v728 = vsel %vm712, %v720, %v664
      %v729 = vsel %vm713, %v721, %v671
      %v730 = vsel %vm714, %v722, %v678
      %v731 = vsel %vm715, %v723, %v685
      %v732 = vsel %vm716, %v724, %v692
      %vm733 = vcmp.eq.s32.totalorder %v725, 0
      %vm734 = vcmp.eq.s32.totalorder %v726, 0
      %vm735 = vcmp.eq.s32.totalorder %v727, 0
      %vm736 = vcmp.eq.s32.totalorder %v728, 0
      %vm737 = vcmp.eq.s32.totalorder %v729, 0
      %vm738 = vcmp.eq.s32.totalorder %v730, 0
      %vm739 = vcmp.eq.s32.totalorder %v731, 0
      %vm740 = vcmp.eq.s32.totalorder %v732, 0
      %vm741 = vcmp.eq.s32.totalorder %v725, 15
      %vm742 = vcmp.eq.s32.totalorder %v726, 15
      %vm743 = vcmp.eq.s32.totalorder %v727, 15
      %vm744 = vcmp.eq.s32.totalorder %v728, 15
      %vm745 = vcmp.eq.s32.totalorder %v729, 15
      %vm746 = vcmp.eq.s32.totalorder %v730, 15
      %vm747 = vcmp.eq.s32.totalorder %v731, 15
      %vm748 = vcmp.eq.s32.totalorder %v732, 15
      %v749 = vrot.slane %v620, 7
      %v750 = vrot.slane %v621, 7
      %v751 = vrot.slane %v622, 7
      %v752 = vrot.slane %v623, 7
      %v753 = vrot.slane %v624, 7
      %v754 = vrot.slane %v625, 7
      %v755 = vrot.slane %v626, 7
      %v756 = vrot.slane %v627, 7
      %vm757 = vcmp.lt.s32.totalorder %v629, 1
      %v758 = vsel %vm757, %v755, %v756
      %v759 = vsel %vm757, %v754, %v755
      %v760 = vsel %vm757, %v753, %v754
      %v761 = vsel %vm757, %v752, %v753
      %v762 = vsel %vm757, %v751, %v752
      %v763 = vsel %vm757, %v750, %v751
      %v764 = vsel %vm757, %v749, %v750
      %v765 = vsel %vm757, %v756, %v749
      %v766 = vsel %vm733, 0.0, %v765
      %v767 = vsel %vm734, 0.0, %v764
      %v768 = vsel %vm735, 0.0, %v763
      %v769 = vsel %vm736, 0.0, %v762
      %v770 = vsel %vm737, 0.0, %v761
      %v771 = vsel %vm738, 0.0, %v760
      %v772 = vsel %vm739, 0.0, %v759
      %v773 = vsel %vm740, 0.0, %v758
      %v774 = vrot.slane %v620, 1
      %v775 = vrot.slane %v621, 1
      %v776 = vrot.slane %v622, 1
      %v777 = vrot.slane %v623, 1
      %v778 = vrot.slane %v624, 1
      %v779 = vrot.slane %v625, 1
      %v780 = vrot.slane %v626, 1
      %v781 = vrot.slane %v627, 1
      %vm782 = vcmp.lt.s32.totalorder %v629, 7
      %v783 = vsel %vm782, %v780, %v781
      %v784 = vsel %vm782, %v779, %v780
      %v785 = vsel %vm782, %v778, %v779
      %v786 = vsel %vm782, %v777, %v778
      %v787 = vsel %vm782, %v776, %v777
      %v788 = vsel %vm782, %v775, %v776
      %v789 = vsel %vm782, %v774, %v775
      %v790 = vsel %vm782, %v781, %v774
      %v791 = vsel %vm741, 0.0, %v789
      %v792 = vsel %vm742, 0.0, %v788
      %v793 = vsel %vm743, 0.0, %v787
      %v794 = vsel %vm744, 0.0, %v786
      %v795 = vsel %vm745, 0.0, %v785
      %v796 = vsel %vm746, 0.0, %v784
      %v797 = vsel %vm747, 0.0, %v783
      %v798 = vsel %vm748, 0.0, %v790
      %v799 = vpack.c.bf16 %v767, %v766
      %v800 = vpack.c.bf16 %v621, %v620
      %v801 = vpack.c.bf16 %v792, %v791
      %v802 = vpack.c.bf16 %v769, %v768
      %v803 = vpack.c.bf16 %v623, %v622
      %v804 = vpack.c.bf16 %v794, %v793
      %v805 = vpack.c.bf16 %v771, %v770
      %v806 = vpack.c.bf16 %v625, %v624
      %v807 = vpack.c.bf16 %v796, %v795
      %v808 = vpack.c.bf16 %v773, %v772
      %v809 = vpack.c.bf16 %v627, %v626
      %v810 = vpack.c.bf16 %v798, %v797
      %v811 = vld [vmem:[%s1] sm:$0xf]
      %v812 = vld [vmem:[%s1 + $0x4] sm:$0xf]
      %v813 = vld [vmem:[%s1 + $0x8] sm:$0xf]
      %v814 = vld [vmem:[%s1 + $0xc] sm:$0xf]
      %v815 = vld [vmem:[%s1 + $0x10] sm:$0xf]
      %v816 = vld [vmem:[%s1 + $0x14] sm:$0xf]
      %v817 = vld [vmem:[%s1 + $0x18] sm:$0xf]
      %v818 = vld [vmem:[%s1 + $0x1c] sm:$0xf]
      %v819 = vld [vmem:[%s1 + $0x20] sm:$0xf]
      %v820 = vld [vmem:[%s1 + $0x24] sm:$0xf]
      %v821 = vld [vmem:[%s1 + $0x28] sm:$0xf]
      %v822 = vld [vmem:[%s1 + $0x2c] sm:$0xf]
      %v823 = vld [vmem:[%s1 + $0x30] sm:$0xf]
      %v824 = vld [vmem:[%s1 + $0x34] sm:$0xf]
      %v825 = vld [vmem:[%s1 + $0x38] sm:$0xf]
      %v826 = vld [vmem:[%s1 + $0x3c] sm:$0xf]
      %v827 = vld [vmem:[%s1 + $0x40] sm:$0xf]
      %v828 = vld [vmem:[%s1 + $0x44] sm:$0xf]
      %v829 = vld [vmem:[%s1 + $0x48] sm:$0xf]
      %v830 = vld [vmem:[%s1 + $0x4c] sm:$0xf]
      %v831 = vld [vmem:[%s1 + $0x50] sm:$0xf]
      %v832 = vld [vmem:[%s1 + $0x54] sm:$0xf]
      %v833 = vld [vmem:[%s1 + $0x58] sm:$0xf]
      %v834 = vld [vmem:[%s1 + $0x5c] sm:$0xf]
      %v835 = vld [vmem:[%s1 + $0x60] sm:$0xf]
      %v836 = vld [vmem:[%s1 + $0x64] sm:$0xf]
      %v837 = vld [vmem:[%s1 + $0x68] sm:$0xf]
      %v838 = vld [vmem:[%s1 + $0x6c] sm:$0xf]
      %v839 = vld [vmem:[%s1 + $0x70] sm:$0xf]
      %v840 = vld [vmem:[%s1 + $0x74] sm:$0xf]
      %v841 = vld [vmem:[%s1 + $0x78] sm:$0xf]
      %v842 = vld [vmem:[%s1 + $0x7c] sm:$0xf]
      %v843 = vld [vmem:[%s1 + $0x80] sm:$0xf]
      %v844 = vld [vmem:[%s1 + $0x84] sm:$0xf]
      %v845 = vld [vmem:[%s1 + $0x88] sm:$0xf]
      %v846 = vld [vmem:[%s1 + $0x8c] sm:$0xf]
      %v847 = vld [vmem:[%s1 + $0x90] sm:$0xf]
      %v848 = vld [vmem:[%s1 + $0x94] sm:$0xf]
      %v849 = vld [vmem:[%s1 + $0x98] sm:$0xf]
      %v850 = vld [vmem:[%s1 + $0x9c] sm:$0xf]
      %v851 = vld [vmem:[%s1 + $0xa0] sm:$0xf]
      %v852 = vld [vmem:[%s1 + $0xa4] sm:$0xf]
      %v853 = vld [vmem:[%s1 + $0xa8] sm:$0xf]
      %v854 = vld [vmem:[%s1 + $0xac] sm:$0xf]
      %v855 = vld [vmem:[%s1 + $0xb0] sm:$0xf]
      %v856 = vld [vmem:[%s1 + $0xb4] sm:$0xf]
      %v857 = vld [vmem:[%s1 + $0xb8] sm:$0xf]
      %v858 = vld [vmem:[%s1 + $0xbc] sm:$0xf]
      %v907 = vunpack.c.l.b16 %v811
      %v908 = vunpack.c.l.b16 %v812
      %v909 = vunpack.c.l.b16 %v813
      %v910 = vunpack.c.l.b16 %v814
      %v911 = vunpack.c.l.b16 %v815
      %v912 = vunpack.c.l.b16 %v816
      %v913 = vunpack.c.l.b16 %v817
      %v914 = vunpack.c.l.b16 %v818
      %v915 = vunpack.c.l.b16 %v819
      %v916 = vunpack.c.l.b16 %v820
      %v917 = vunpack.c.l.b16 %v821
      %v918 = vunpack.c.l.b16 %v822
      %v919 = vunpack.c.l.b16 %v823
      %v920 = vunpack.c.l.b16 %v824
      %v921 = vunpack.c.l.b16 %v825
      %v922 = vunpack.c.l.b16 %v826
      %v923 = vunpack.c.l.b16 %v827
      %v924 = vunpack.c.l.b16 %v828
      %v925 = vunpack.c.l.b16 %v829
      %v926 = vunpack.c.l.b16 %v830
      %v927 = vunpack.c.l.b16 %v831
      %v928 = vunpack.c.l.b16 %v832
      %v929 = vunpack.c.l.b16 %v833
      %v930 = vunpack.c.l.b16 %v834
      %v931 = vunpack.c.l.b16 %v835
      %v932 = vunpack.c.l.b16 %v836
      %v933 = vunpack.c.l.b16 %v837
      %v934 = vunpack.c.l.b16 %v838
      %v935 = vunpack.c.l.b16 %v839
      %v936 = vunpack.c.l.b16 %v840
      %v937 = vunpack.c.l.b16 %v841
      %v938 = vunpack.c.l.b16 %v842
      %v939 = vunpack.c.l.b16 %v843
      %v940 = vunpack.c.l.b16 %v844
      %v941 = vunpack.c.l.b16 %v845
      %v942 = vunpack.c.l.b16 %v846
      %v943 = vunpack.c.l.b16 %v847
      %v944 = vunpack.c.l.b16 %v848
      %v945 = vunpack.c.l.b16 %v849
      %v946 = vunpack.c.l.b16 %v850
      %v947 = vunpack.c.l.b16 %v851
      %v948 = vunpack.c.l.b16 %v852
      %v949 = vunpack.c.l.b16 %v853
      %v950 = vunpack.c.l.b16 %v854
      %v951 = vunpack.c.l.b16 %v855
      %v952 = vunpack.c.l.b16 %v856
      %v953 = vunpack.c.l.b16 %v857
      %v954 = vunpack.c.l.b16 %v858
      %v955 = vpack.c.b16 %v908, %v907
      %v956 = vpack.c.b16 %v910, %v909
      %v957 = vpack.c.b16 %v912, %v911
      %v958 = vpack.c.b16 %v914, %v913
      %v959 = vpack.c.b16 %v916, %v915
      %v960 = vpack.c.b16 %v918, %v917
      %v961 = vpack.c.b16 %v920, %v919
      %v962 = vpack.c.b16 %v922, %v921
      %v963 = vpack.c.b16 %v924, %v923
      %v964 = vpack.c.b16 %v926, %v925
      %v965 = vpack.c.b16 %v928, %v927
      %v966 = vpack.c.b16 %v930, %v929
      %v967 = vpack.c.b16 %v932, %v931
      %v968 = vpack.c.b16 %v934, %v933
      %v969 = vpack.c.b16 %v936, %v935
      %v970 = vpack.c.b16 %v938, %v937
      %v971 = vpack.c.b16 %v940, %v939
      %v972 = vpack.c.b16 %v942, %v941
      %v973 = vpack.c.b16 %v944, %v943
      %v974 = vpack.c.b16 %v946, %v945
      %v975 = vpack.c.b16 %v948, %v947
      %v976 = vpack.c.b16 %v950, %v949
      %v977 = vpack.c.b16 %v952, %v951
      %v978 = vpack.c.b16 %v954, %v953
      %1003 = vmatprep.subr.bf16.mxu0 0
      %1004 = vmatpush1.bf16.msra.mxu0 %v955
      %1005 = vmatprep.subr.bf16.mxu0 0
      %1006 = vmatpush1.bf16.msra.mxu0 %v956
      %1007 = vmatprep.subr.bf16.mxu0 0
      %1008 = vmatpush1.bf16.msra.mxu0 %v957
      %1009 = vmatprep.subr.bf16.mxu0 0
      %1010 = vmatpush1.bf16.msra.mxu0 %v958
      %1011 = vmatprep.subr.bf16.mxu0 0
      %1012 = vmatpush1.bf16.msra.mxu0 %v959
      %1013 = vmatprep.subr.bf16.mxu0 0
      %1014 = vmatpush1.bf16.msra.mxu0 %v960
      %1015 = vmatprep.subr.bf16.mxu0 0
      %1016 = vmatpush1.bf16.msra.mxu0 %v961
      %1017 = vmatprep.subr.bf16.mxu0 0
      %1018 = vmatpush1.bf16.msra.mxu0 %v962
      %1019 = vmatprep.subr.bf16.mxu0 0
      %1020 = vmatpush1.bf16.msra.mxu0 %v963
      %1021 = vmatprep.subr.bf16.mxu0 0
      %1022 = vmatpush1.bf16.msra.mxu0 %v964
      %1023 = vmatprep.subr.bf16.mxu0 0
      %1024 = vmatpush1.bf16.msra.mxu0 %v965
      %1025 = vmatprep.subr.bf16.mxu0 0
      %1026 = vmatpush1.bf16.msra.mxu0 %v966
      %1027 = vmatprep.subr.bf16.mxu0 0
      %1028 = vmatpush1.bf16.msra.mxu0 %v967
      %1029 = vmatprep.subr.bf16.mxu0 0
      %1030 = vmatpush1.bf16.msra.mxu0 %v968
      %1031 = vmatprep.subr.bf16.mxu0 0
      %1032 = vmatpush1.bf16.msra.mxu0 %v969
      %1033 = vmatprep.subr.bf16.mxu0 0
      %1034 = vmatpush1.bf16.msra.mxu0 %v970
      %1035 = vmatprep.mubr.bf16.mxu0 %v800
      %1036 = vmatmul.mubr.bf16.gmra.mrb[0].mxu0 %v799
      %v1037 = vpop.f32.mrb[0].mxu0
      %v1038 = vadd.f32 0.0, %v1037
      %v1039 = vpop.f32.mrb[0].mxu0
      %v1040 = vpop.f32.mrb[0].mxu0
      %v1041 = vadd.f32 0.0, %v1040
      %v1042 = vpop.f32.mrb[0].mxu0
      %1043 = vmatprep.mubr.bf16.mxu0 %v803
      %1044 = vmatmul.mubr.bf16.gmra.mrb[0].mxu0 %v802
      %v1045 = vpop.f32.mrb[0].mxu0
      %v1046 = vadd.f32 0.0, %v1045
      %v1047 = vpop.f32.mrb[0].mxu0
      %v1048 = vpop.f32.mrb[0].mxu0
      %v1049 = vadd.f32 0.0, %v1048
      %v1050 = vpop.f32.mrb[0].mxu0
      %1051 = vmatprep.mubr.bf16.mxu0 %v806
      %1052 = vmatmul.mubr.bf16.gmra.mrb[0].mxu0 %v805
      %v1053 = vpop.f32.mrb[0].mxu0
      %v1054 = vadd.f32 0.0, %v1053
      %v1055 = vpop.f32.mrb[0].mxu0
      %v1056 = vpop.f32.mrb[0].mxu0
      %v1057 = vadd.f32 0.0, %v1056
      %v1058 = vpop.f32.mrb[0].mxu0
      %1059 = vmatprep.mubr.bf16.mxu0 %v809
      %1060 = vmatmul.mubr.bf16.gmra.mrb[0].mxu0 %v808
      %v1061 = vpop.f32.mrb[0].mxu0
      %v1062 = vadd.f32 0.0, %v1061
      %v1063 = vpop.f32.mrb[0].mxu0
      %v1064 = vpop.f32.mrb[0].mxu0
      %v1065 = vadd.f32 0.0, %v1064
      %v1066 = vpop.f32.mrb[0].mxu0
      %1067 = vdwg.mxu0
      %1068 = vmatprep.subr.bf16.mxu0 0
      %1069 = vmatpush1.bf16.msra.mxu0 %v971
      %1070 = vmatprep.subr.bf16.mxu0 0
      %1071 = vmatpush1.bf16.msra.mxu0 %v972
      %1072 = vmatprep.subr.bf16.mxu0 0
      %1073 = vmatpush1.bf16.msra.mxu0 %v973
      %1074 = vmatprep.subr.bf16.mxu0 0
      %1075 = vmatpush1.bf16.msra.mxu0 %v974
      %1076 = vmatprep.subr.bf16.mxu0 0
      %1077 = vmatpush1.bf16.msra.mxu0 %v975
      %1078 = vmatprep.subr.bf16.mxu0 0
      %1079 = vmatpush1.bf16.msra.mxu0 %v976
      %1080 = vmatprep.subr.bf16.mxu0 0
      %1081 = vmatpush1.bf16.msra.mxu0 %v977
      %1082 = vmatprep.subr.bf16.mxu0 0
      %1083 = vmatpush1.bf16.msra.mxu0 %v978
      %1084 = vmatprep.subr.bf16.mxu0 0
      %1085 = vmatpush1.bf16.msra.mxu0 0
      %1086 = vmatprep.subr.bf16.mxu0 0
      %1087 = vmatpush1.bf16.msra.mxu0 0
      %1088 = vmatprep.subr.bf16.mxu0 0
      %1089 = vmatpush1.bf16.msra.mxu0 0
      %1090 = vmatprep.subr.bf16.mxu0 0
      %1091 = vmatpush1.bf16.msra.mxu0 0
      %1092 = vmatprep.subr.bf16.mxu0 0
      %1093 = vmatpush1.bf16.msra.mxu0 0
      %1094 = vmatprep.subr.bf16.mxu0 0
      %1095 = vmatpush1.bf16.msra.mxu0 0
      %1096 = vmatprep.subr.bf16.mxu0 0
      %1097 = vmatpush1.bf16.msra.mxu0 0
      %1098 = vmatprep.subr.bf16.mxu0 0
      %1099 = vmatpush1.bf16.msra.mxu0 0
      %1100 = vmatprep.mubr.bf16.mxu0 0
      %1101 = vmatmul.mubr.bf16.gmra.mrb[0].mxu0 %v801
      %v1102 = vpop.f32.mrb[0].mxu0
      %v1103 = vadd.f32 %v1038, %v1102
      %v1104 = vpop.f32.mrb[0].mxu0
      %v1105 = vpop.f32.mrb[0].mxu0
      %v1106 = vadd.f32 %v1041, %v1105
      %v1107 = vpop.f32.mrb[0].mxu0
      %1108 = vmatprep.mubr.bf16.mxu0 0
      %1109 = vmatmul.mubr.bf16.gmra.mrb[0].mxu0 %v804
      %v1110 = vpop.f32.mrb[0].mxu0
      %v1111 = vadd.f32 %v1046, %v1110
      %v1112 = vpop.f32.mrb[0].mxu0
      %v1113 = vpop.f32.mrb[0].mxu0
      %v1114 = vadd.f32 %v1049, %v1113
      %v1115 = vpop.f32.mrb[0].mxu0
      %1116 = vmatprep.mubr.bf16.mxu0 0
      %1117 = vmatmul.mubr.bf16.gmra.mrb[0].mxu0 %v807
      %v1118 = vpop.f32.mrb[0].mxu0
      %v1119 = vadd.f32 %v1054, %v1118
      %v1120 = vpop.f32.mrb[0].mxu0
      %v1121 = vpop.f32.mrb[0].mxu0
      %v1122 = vadd.f32 %v1057, %v1121
      %v1123 = vpop.f32.mrb[0].mxu0
      %1124 = vmatprep.mubr.bf16.mxu0 0
      %1125 = vmatmul.mubr.bf16.gmra.mrb[0].mxu0 %v810
      %v1126 = vpop.f32.mrb[0].mxu0
      %v1127 = vadd.f32 %v1062, %v1126
      %v1128 = vpop.f32.mrb[0].mxu0
      %v1129 = vpop.f32.mrb[0].mxu0
      %v1130 = vadd.f32 %v1065, %v1129
      %v1131 = vpop.f32.mrb[0].mxu0
      %1132 = vdwg.mxu0
      %v1133 = vld [vmem:[%s2] sm:$0x1]
      %v1135 = vlaneseq
      %v1136 = vshrl.u32 %v1135, 7
      %v1137 = vsub.s32 0, %v1136
      %v1138 = vrot.slane %v1133, %v1137
      %v1140 = vmul.f32 %v1103, %v1138
      %v1141 = vmul.f32 %v1106, %v1138
      %v1142 = vmul.f32 %v1111, %v1138
      %v1143 = vmul.f32 %v1114, %v1138
      %v1144 = vmul.f32 %v1119, %v1138
      %v1145 = vmul.f32 %v1122, %v1138
      %v1146 = vmul.f32 %v1127, %v1138
      %v1147 = vmul.f32 %v1130, %v1138
      %v1148 = vld [vmem:[%s3] sm:$0x1]
      %v1150 = vlaneseq
      %v1151 = vshrl.u32 %v1150, 7
      %v1152 = vsub.s32 0, %v1151
      %v1153 = vrot.slane %v1148, %v1152
      %v1155 = vadd.f32 %v1140, %v1153
      %v1156 = vadd.f32 %v1141, %v1153
      %v1157 = vadd.f32 %v1142, %v1153
      %v1158 = vadd.f32 %v1143, %v1153
      %v1159 = vadd.f32 %v1144, %v1153
      %v1160 = vadd.f32 %v1145, %v1153
      %v1161 = vadd.f32 %v1146, %v1153
      %v1162 = vadd.f32 %v1147, %v1153
      %v1163 = vmax.f32 %v1155, 0.0
      %v1164 = vmax.f32 %v1156, 0.0
      %v1165 = vmax.f32 %v1157, 0.0
      %v1166 = vmax.f32 %v1158, 0.0
      %v1167 = vmax.f32 %v1159, 0.0
      %v1168 = vmax.f32 %v1160, 0.0
      %v1169 = vmax.f32 %v1161, 0.0
      %v1170 = vmax.f32 %v1162, 0.0
      %v1171 = vrot.slane %v1163, 7
      %v1172 = vrot.slane %v1164, 7
      %v1173 = vrot.slane %v1165, 7
      %v1174 = vrot.slane %v1166, 7
      %v1175 = vrot.slane %v1167, 7
      %v1176 = vrot.slane %v1168, 7
      %v1177 = vrot.slane %v1169, 7
      %v1178 = vrot.slane %v1170, 7
      %v1179 = vsel %vm757, %v1177, %v1178
      %v1180 = vsel %vm757, %v1176, %v1177
      %v1181 = vsel %vm757, %v1175, %v1176
      %v1182 = vsel %vm757, %v1174, %v1175
      %v1183 = vsel %vm757, %v1173, %v1174
      %v1184 = vsel %vm757, %v1172, %v1173
      %v1185 = vsel %vm757, %v1171, %v1172
      %v1186 = vsel %vm757, %v1178, %v1171
      %v1187 = vsel %vm733, 0.0, %v1186
      %v1188 = vsel %vm734, 0.0, %v1185
      %v1189 = vsel %vm735, 0.0, %v1184
      %v1190 = vsel %vm736, 0.0, %v1183
      %v1191 = vsel %vm737, 0.0, %v1182
      %v1192 = vsel %vm738, 0.0, %v1181
      %v1193 = vsel %vm739, 0.0, %v1180
      %v1194 = vsel %vm740, 0.0, %v1179
      %v1195 = vrot.slane %v1163, 1
      %v1196 = vrot.slane %v1164, 1
      %v1197 = vrot.slane %v1165, 1
      %v1198 = vrot.slane %v1166, 1
      %v1199 = vrot.slane %v1167, 1
      %v1200 = vrot.slane %v1168, 1
      %v1201 = vrot.slane %v1169, 1
      %v1202 = vrot.slane %v1170, 1
      %v1203 = vsel %vm782, %v1201, %v1202
      %v1204 = vsel %vm782, %v1200, %v1201
      %v1205 = vsel %vm782, %v1199, %v1200
      %v1206 = vsel %vm782, %v1198, %v1199
      %v1207 = vsel %vm782, %v1197, %v1198
      %v1208 = vsel %vm782, %v1196, %v1197
      %v1209 = vsel %vm782, %v1195, %v1196
      %v1210 = vsel %vm782, %v1202, %v1195
      %v1211 = vsel %vm741, 0.0, %v1209
      %v1212 = vsel %vm742, 0.0, %v1208
      %v1213 = vsel %vm743, 0.0, %v1207
      %v1214 = vsel %vm744, 0.0, %v1206
      %v1215 = vsel %vm745, 0.0, %v1205
      %v1216 = vsel %vm746, 0.0, %v1204
      %v1217 = vsel %vm747, 0.0, %v1203
      %v1218 = vsel %vm748, 0.0, %v1210
      %v1219 = vpack.c.bf16 %v1188, %v1187
      %v1220 = vpack.c.bf16 %v1164, %v1163
      %v1221 = vpack.c.bf16 %v1212, %v1211
      %v1222 = vpack.c.bf16 %v1190, %v1189
      %v1223 = vpack.c.bf16 %v1166, %v1165
      %v1224 = vpack.c.bf16 %v1214, %v1213
      %v1225 = vpack.c.bf16 %v1192, %v1191
      %v1226 = vpack.c.bf16 %v1168, %v1167
      %v1227 = vpack.c.bf16 %v1216, %v1215
      %v1228 = vpack.c.bf16 %v1194, %v1193
      %v1229 = vpack.c.bf16 %v1170, %v1169
      %v1230 = vpack.c.bf16 %v1218, %v1217
      %v1231 = vld [vmem:[%s4] sm:$0xf]
      %v1232 = vld [vmem:[%s4 + $0x4] sm:$0xf]
      %v1233 = vld [vmem:[%s4 + $0x8] sm:$0xf]
      %v1234 = vld [vmem:[%s4 + $0xc] sm:$0xf]
      %v1235 = vld [vmem:[%s4 + $0x10] sm:$0xf]
      %v1236 = vld [vmem:[%s4 + $0x14] sm:$0xf]
      %v1237 = vld [vmem:[%s4 + $0x18] sm:$0xf]
      %v1238 = vld [vmem:[%s4 + $0x1c] sm:$0xf]
      %v1239 = vld [vmem:[%s4 + $0x20] sm:$0xf]
      %v1240 = vld [vmem:[%s4 + $0x24] sm:$0xf]
      %v1241 = vld [vmem:[%s4 + $0x28] sm:$0xf]
      %v1242 = vld [vmem:[%s4 + $0x2c] sm:$0xf]
      %v1243 = vld [vmem:[%s4 + $0x30] sm:$0xf]
      %v1244 = vld [vmem:[%s4 + $0x34] sm:$0xf]
      %v1245 = vld [vmem:[%s4 + $0x38] sm:$0xf]
      %v1246 = vld [vmem:[%s4 + $0x3c] sm:$0xf]
      %v1247 = vld [vmem:[%s4 + $0x40] sm:$0xf]
      %v1248 = vld [vmem:[%s4 + $0x44] sm:$0xf]
      %v1249 = vld [vmem:[%s4 + $0x48] sm:$0xf]
      %v1250 = vld [vmem:[%s4 + $0x4c] sm:$0xf]
      %v1251 = vld [vmem:[%s4 + $0x50] sm:$0xf]
      %v1252 = vld [vmem:[%s4 + $0x54] sm:$0xf]
      %v1253 = vld [vmem:[%s4 + $0x58] sm:$0xf]
      %v1254 = vld [vmem:[%s4 + $0x5c] sm:$0xf]
      %v1255 = vld [vmem:[%s4 + $0x60] sm:$0xf]
      %v1256 = vld [vmem:[%s4 + $0x64] sm:$0xf]
      %v1257 = vld [vmem:[%s4 + $0x68] sm:$0xf]
      %v1258 = vld [vmem:[%s4 + $0x6c] sm:$0xf]
      %v1259 = vld [vmem:[%s4 + $0x70] sm:$0xf]
      %v1260 = vld [vmem:[%s4 + $0x74] sm:$0xf]
      %v1261 = vld [vmem:[%s4 + $0x78] sm:$0xf]
      %v1262 = vld [vmem:[%s4 + $0x7c] sm:$0xf]
      %v1263 = vld [vmem:[%s4 + $0x80] sm:$0xf]
      %v1264 = vld [vmem:[%s4 + $0x84] sm:$0xf]
      %v1265 = vld [vmem:[%s4 + $0x88] sm:$0xf]
      %v1266 = vld [vmem:[%s4 + $0x8c] sm:$0xf]
      %v1267 = vld [vmem:[%s4 + $0x90] sm:$0xf]
      %v1268 = vld [vmem:[%s4 + $0x94] sm:$0xf]
      %v1269 = vld [vmem:[%s4 + $0x98] sm:$0xf]
      %v1270 = vld [vmem:[%s4 + $0x9c] sm:$0xf]
      %v1271 = vld [vmem:[%s4 + $0xa0] sm:$0xf]
      %v1272 = vld [vmem:[%s4 + $0xa4] sm:$0xf]
      %v1273 = vld [vmem:[%s4 + $0xa8] sm:$0xf]
      %v1274 = vld [vmem:[%s4 + $0xac] sm:$0xf]
      %v1275 = vld [vmem:[%s4 + $0xb0] sm:$0xf]
      %v1276 = vld [vmem:[%s4 + $0xb4] sm:$0xf]
      %v1277 = vld [vmem:[%s4 + $0xb8] sm:$0xf]
      %v1278 = vld [vmem:[%s4 + $0xbc] sm:$0xf]
      %v1327 = vunpack.c.l.b16 %v1231
      %v1328 = vunpack.c.l.b16 %v1232
      %v1329 = vunpack.c.l.b16 %v1233
      %v1330 = vunpack.c.l.b16 %v1234
      %v1331 = vunpack.c.l.b16 %v1235
      %v1332 = vunpack.c.l.b16 %v1236
      %v1333 = vunpack.c.l.b16 %v1237
      %v1334 = vunpack.c.l.b16 %v1238
      %v1335 = vunpack.c.l.b16 %v1239
      %v1336 = vunpack.c.l.b16 %v1240
      %v1337 = vunpack.c.l.b16 %v1241
      %v1338 = vunpack.c.l.b16 %v1242
      %v1339 = vunpack.c.l.b16 %v1243
      %v1340 = vunpack.c.l.b16 %v1244
      %v1341 = vunpack.c.l.b16 %v1245
      %v1342 = vunpack.c.l.b16 %v1246
      %v1343 = vunpack.c.l.b16 %v1247
      %v1344 = vunpack.c.l.b16 %v1248
      %v1345 = vunpack.c.l.b16 %v1249
      %v1346 = vunpack.c.l.b16 %v1250
      %v1347 = vunpack.c.l.b16 %v1251
      %v1348 = vunpack.c.l.b16 %v1252
      %v1349 = vunpack.c.l.b16 %v1253
      %v1350 = vunpack.c.l.b16 %v1254
      %v1351 = vunpack.c.l.b16 %v1255
      %v1352 = vunpack.c.l.b16 %v1256
      %v1353 = vunpack.c.l.b16 %v1257
      %v1354 = vunpack.c.l.b16 %v1258
      %v1355 = vunpack.c.l.b16 %v1259
      %v1356 = vunpack.c.l.b16 %v1260
      %v1357 = vunpack.c.l.b16 %v1261
      %v1358 = vunpack.c.l.b16 %v1262
      %v1359 = vunpack.c.l.b16 %v1263
      %v1360 = vunpack.c.l.b16 %v1264
      %v1361 = vunpack.c.l.b16 %v1265
      %v1362 = vunpack.c.l.b16 %v1266
      %v1363 = vunpack.c.l.b16 %v1267
      %v1364 = vunpack.c.l.b16 %v1268
      %v1365 = vunpack.c.l.b16 %v1269
      %v1366 = vunpack.c.l.b16 %v1270
      %v1367 = vunpack.c.l.b16 %v1271
      %v1368 = vunpack.c.l.b16 %v1272
      %v1369 = vunpack.c.l.b16 %v1273
      %v1370 = vunpack.c.l.b16 %v1274
      %v1371 = vunpack.c.l.b16 %v1275
      %v1372 = vunpack.c.l.b16 %v1276
      %v1373 = vunpack.c.l.b16 %v1277
      %v1374 = vunpack.c.l.b16 %v1278
      %v1375 = vpack.c.b16 %v1328, %v1327
      %v1376 = vpack.c.b16 %v1330, %v1329
      %v1377 = vpack.c.b16 %v1332, %v1331
      %v1378 = vpack.c.b16 %v1334, %v1333
      %v1379 = vpack.c.b16 %v1336, %v1335
      %v1380 = vpack.c.b16 %v1338, %v1337
      %v1381 = vpack.c.b16 %v1340, %v1339
      %v1382 = vpack.c.b16 %v1342, %v1341
      %v1383 = vpack.c.b16 %v1344, %v1343
      %v1384 = vpack.c.b16 %v1346, %v1345
      %v1385 = vpack.c.b16 %v1348, %v1347
      %v1386 = vpack.c.b16 %v1350, %v1349
      %v1387 = vpack.c.b16 %v1352, %v1351
      %v1388 = vpack.c.b16 %v1354, %v1353
      %v1389 = vpack.c.b16 %v1356, %v1355
      %v1390 = vpack.c.b16 %v1358, %v1357
      %v1391 = vpack.c.b16 %v1360, %v1359
      %v1392 = vpack.c.b16 %v1362, %v1361
      %v1393 = vpack.c.b16 %v1364, %v1363
      %v1394 = vpack.c.b16 %v1366, %v1365
      %v1395 = vpack.c.b16 %v1368, %v1367
      %v1396 = vpack.c.b16 %v1370, %v1369
      %v1397 = vpack.c.b16 %v1372, %v1371
      %v1398 = vpack.c.b16 %v1374, %v1373
      %1423 = vmatprep.subr.bf16.mxu0 0
      %1424 = vmatpush1.bf16.msra.mxu0 %v1375
      %1425 = vmatprep.subr.bf16.mxu0 0
      %1426 = vmatpush1.bf16.msra.mxu0 %v1376
      %1427 = vmatprep.subr.bf16.mxu0 0
      %1428 = vmatpush1.bf16.msra.mxu0 %v1377
      %1429 = vmatprep.subr.bf16.mxu0 0
      %1430 = vmatpush1.bf16.msra.mxu0 %v1378
      %1431 = vmatprep.subr.bf16.mxu0 0
      %1432 = vmatpush1.bf16.msra.mxu0 %v1379
      %1433 = vmatprep.subr.bf16.mxu0 0
      %1434 = vmatpush1.bf16.msra.mxu0 %v1380
      %1435 = vmatprep.subr.bf16.mxu0 0
      %1436 = vmatpush1.bf16.msra.mxu0 %v1381
      %1437 = vmatprep.subr.bf16.mxu0 0
      %1438 = vmatpush1.bf16.msra.mxu0 %v1382
      %1439 = vmatprep.subr.bf16.mxu0 0
      %1440 = vmatpush1.bf16.msra.mxu0 %v1383
      %1441 = vmatprep.subr.bf16.mxu0 0
      %1442 = vmatpush1.bf16.msra.mxu0 %v1384
      %1443 = vmatprep.subr.bf16.mxu0 0
      %1444 = vmatpush1.bf16.msra.mxu0 %v1385
      %1445 = vmatprep.subr.bf16.mxu0 0
      %1446 = vmatpush1.bf16.msra.mxu0 %v1386
      %1447 = vmatprep.subr.bf16.mxu0 0
      %1448 = vmatpush1.bf16.msra.mxu0 %v1387
      %1449 = vmatprep.subr.bf16.mxu0 0
      %1450 = vmatpush1.bf16.msra.mxu0 %v1388
      %1451 = vmatprep.subr.bf16.mxu0 0
      %1452 = vmatpush1.bf16.msra.mxu0 %v1389
      %1453 = vmatprep.subr.bf16.mxu0 0
      %1454 = vmatpush1.bf16.msra.mxu0 %v1390
      %1455 = vmatprep.mubr.bf16.mxu0 %v1220
      %1456 = vmatmul.mubr.bf16.gmra.mrb[0].mxu0 %v1219
      %v1457 = vpop.f32.mrb[0].mxu0
      %v1458 = vadd.f32 0.0, %v1457
      %v1459 = vpop.f32.mrb[0].mxu0
      %v1460 = vpop.f32.mrb[0].mxu0
      %v1461 = vadd.f32 0.0, %v1460
      %v1462 = vpop.f32.mrb[0].mxu0
      %1463 = vmatprep.mubr.bf16.mxu0 %v1223
      %1464 = vmatmul.mubr.bf16.gmra.mrb[0].mxu0 %v1222
      %v1465 = vpop.f32.mrb[0].mxu0
      %v1466 = vadd.f32 0.0, %v1465
      %v1467 = vpop.f32.mrb[0].mxu0
      %v1468 = vpop.f32.mrb[0].mxu0
      %v1469 = vadd.f32 0.0, %v1468
      %v1470 = vpop.f32.mrb[0].mxu0
      %1471 = vmatprep.mubr.bf16.mxu0 %v1226
      %1472 = vmatmul.mubr.bf16.gmra.mrb[0].mxu0 %v1225
      %v1473 = vpop.f32.mrb[0].mxu0
      %v1474 = vadd.f32 0.0, %v1473
      %v1475 = vpop.f32.mrb[0].mxu0
      %v1476 = vpop.f32.mrb[0].mxu0
      %v1477 = vadd.f32 0.0, %v1476
      %v1478 = vpop.f32.mrb[0].mxu0
      %1479 = vmatprep.mubr.bf16.mxu0 %v1229
      %1480 = vmatmul.mubr.bf16.gmra.mrb[0].mxu0 %v1228
      %v1481 = vpop.f32.mrb[0].mxu0
      %v1482 = vadd.f32 0.0, %v1481
      %v1483 = vpop.f32.mrb[0].mxu0
      %v1484 = vpop.f32.mrb[0].mxu0
      %v1485 = vadd.f32 0.0, %v1484
      %v1486 = vpop.f32.mrb[0].mxu0
      %1487 = vdwg.mxu0
      %1488 = vmatprep.subr.bf16.mxu0 0
      %1489 = vmatpush1.bf16.msra.mxu0 %v1391
      %1490 = vmatprep.subr.bf16.mxu0 0
      %1491 = vmatpush1.bf16.msra.mxu0 %v1392
      %1492 = vmatprep.subr.bf16.mxu0 0
      %1493 = vmatpush1.bf16.msra.mxu0 %v1393
      %1494 = vmatprep.subr.bf16.mxu0 0
      %1495 = vmatpush1.bf16.msra.mxu0 %v1394
      %1496 = vmatprep.subr.bf16.mxu0 0
      %1497 = vmatpush1.bf16.msra.mxu0 %v1395
      %1498 = vmatprep.subr.bf16.mxu0 0
      %1499 = vmatpush1.bf16.msra.mxu0 %v1396
      %1500 = vmatprep.subr.bf16.mxu0 0
      %1501 = vmatpush1.bf16.msra.mxu0 %v1397
      %1502 = vmatprep.subr.bf16.mxu0 0
      %1503 = vmatpush1.bf16.msra.mxu0 %v1398
      %1504 = vmatprep.subr.bf16.mxu0 0
      %1505 = vmatpush1.bf16.msra.mxu0 0
      %1506 = vmatprep.subr.bf16.mxu0 0
      %1507 = vmatpush1.bf16.msra.mxu0 0
      %1508 = vmatprep.subr.bf16.mxu0 0
      %1509 = vmatpush1.bf16.msra.mxu0 0
      %1510 = vmatprep.subr.bf16.mxu0 0
      %1511 = vmatpush1.bf16.msra.mxu0 0
      %1512 = vmatprep.subr.bf16.mxu0 0
      %1513 = vmatpush1.bf16.msra.mxu0 0
      %1514 = vmatprep.subr.bf16.mxu0 0
      %1515 = vmatpush1.bf16.msra.mxu0 0
      %1516 = vmatprep.subr.bf16.mxu0 0
      %1517 = vmatpush1.bf16.msra.mxu0 0
      %1518 = vmatprep.subr.bf16.mxu0 0
      %1519 = vmatpush1.bf16.msra.mxu0 0
      %1520 = vmatprep.mubr.bf16.mxu0 0
      %1521 = vmatmul.mubr.bf16.gmra.mrb[0].mxu0 %v1221
      %v1522 = vpop.f32.mrb[0].mxu0
      %v1523 = vadd.f32 %v1458, %v1522
      %v1524 = vpop.f32.mrb[0].mxu0
      %v1525 = vpop.f32.mrb[0].mxu0
      %v1526 = vadd.f32 %v1461, %v1525
      %v1527 = vpop.f32.mrb[0].mxu0
      %1528 = vmatprep.mubr.bf16.mxu0 0
      %1529 = vmatmul.mubr.bf16.gmra.mrb[0].mxu0 %v1224
      %v1530 = vpop.f32.mrb[0].mxu0
      %v1531 = vadd.f32 %v1466, %v1530
      %v1532 = vpop.f32.mrb[0].mxu0
      %v1533 = vpop.f32.mrb[0].mxu0
      %v1534 = vadd.f32 %v1469, %v1533
      %v1535 = vpop.f32.mrb[0].mxu0
      %1536 = vmatprep.mubr.bf16.mxu0 0
      %1537 = vmatmul.mubr.bf16.gmra.mrb[0].mxu0 %v1227
      %v1538 = vpop.f32.mrb[0].mxu0
      %v1539 = vadd.f32 %v1474, %v1538
      %v1540 = vpop.f32.mrb[0].mxu0
      %v1541 = vpop.f32.mrb[0].mxu0
      %v1542 = vadd.f32 %v1477, %v1541
      %v1543 = vpop.f32.mrb[0].mxu0
      %1544 = vmatprep.mubr.bf16.mxu0 0
      %1545 = vmatmul.mubr.bf16.gmra.mrb[0].mxu0 %v1230
      %v1546 = vpop.f32.mrb[0].mxu0
      %v1547 = vadd.f32 %v1482, %v1546
      %v1548 = vpop.f32.mrb[0].mxu0
      %v1549 = vpop.f32.mrb[0].mxu0
      %v1550 = vadd.f32 %v1485, %v1549
      %v1551 = vpop.f32.mrb[0].mxu0
      %1552 = vdwg.mxu0
      %v1553 = vld [vmem:[%s5] sm:$0x1]
      %v1555 = vlaneseq
      %v1556 = vshrl.u32 %v1555, 7
      %v1557 = vsub.s32 0, %v1556
      %v1558 = vrot.slane %v1553, %v1557
      %v1560 = vmul.f32 %v1523, %v1558
      %v1561 = vmul.f32 %v1526, %v1558
      %v1562 = vmul.f32 %v1531, %v1558
      %v1563 = vmul.f32 %v1534, %v1558
      %v1564 = vmul.f32 %v1539, %v1558
      %v1565 = vmul.f32 %v1542, %v1558
      %v1566 = vmul.f32 %v1547, %v1558
      %v1567 = vmul.f32 %v1550, %v1558
      %v1568 = vld [vmem:[%s6] sm:$0x1]
      %v1570 = vlaneseq
      %v1571 = vshrl.u32 %v1570, 7
      %v1572 = vsub.s32 0, %v1571
      %v1573 = vrot.slane %v1568, %v1572
      %v1575 = vadd.f32 %v1560, %v1573
      %v1576 = vadd.f32 %v1561, %v1573
      %v1577 = vadd.f32 %v1562, %v1573
      %v1578 = vadd.f32 %v1563, %v1573
      %v1579 = vadd.f32 %v1564, %v1573
      %v1580 = vadd.f32 %v1565, %v1573
      %v1581 = vadd.f32 %v1566, %v1573
      %v1582 = vadd.f32 %v1567, %v1573
      %v1583 = vpack.c.bf16 %v1576, %v1575
      %v1584 = vpack.c.bf16 %v1578, %v1577
      %v1585 = vpack.c.bf16 %v1580, %v1579
      %v1586 = vpack.c.bf16 %v1582, %v1581
      %v1587 = vld [vmem:[%s7] sm:$0xf]
      %v1588 = vld [vmem:[%s7 + $0x4] sm:$0xf]
      %v1589 = vld [vmem:[%s7 + $0x8] sm:$0xf]
      %v1590 = vld [vmem:[%s7 + $0xc] sm:$0xf]
      %v1591 = vld [vmem:[%s7 + $0x10] sm:$0xf]
      %v1592 = vld [vmem:[%s7 + $0x14] sm:$0xf]
      %v1593 = vld [vmem:[%s7 + $0x18] sm:$0xf]
      %v1594 = vld [vmem:[%s7 + $0x1c] sm:$0xf]
      %v1595 = vld [vmem:[%s7 + $0x20] sm:$0xf]
      %v1596 = vld [vmem:[%s7 + $0x24] sm:$0xf]
      %v1597 = vld [vmem:[%s7 + $0x28] sm:$0xf]
      %v1598 = vld [vmem:[%s7 + $0x2c] sm:$0xf]
      %v1599 = vld [vmem:[%s7 + $0x30] sm:$0xf]
      %v1600 = vld [vmem:[%s7 + $0x34] sm:$0xf]
      %v1601 = vld [vmem:[%s7 + $0x38] sm:$0xf]
      %v1602 = vld [vmem:[%s7 + $0x3c] sm:$0xf]
      %v1603 = vld [vmem:[%s8] sm:$0x1]
      %v1605 = vlaneseq
      %v1606 = vshrl.u32 %v1605, 7
      %v1607 = vsub.s32 0, %v1606
      %v1608 = vrot.slane %v1603, %v1607
      %v1626 = vunpack.c.l.b16 %v1587
      %v1627 = vunpack.c.l.b16 %v1588
      %v1628 = vunpack.c.l.b16 %v1589
      %v1629 = vunpack.c.l.b16 %v1590
      %v1630 = vunpack.c.l.b16 %v1591
      %v1631 = vunpack.c.l.b16 %v1592
      %v1632 = vunpack.c.l.b16 %v1593
      %v1633 = vunpack.c.l.b16 %v1594
      %v1634 = vunpack.c.l.b16 %v1595
      %v1635 = vunpack.c.l.b16 %v1596
      %v1636 = vunpack.c.l.b16 %v1597
      %v1637 = vunpack.c.l.b16 %v1598
      %v1638 = vunpack.c.l.b16 %v1599
      %v1639 = vunpack.c.l.b16 %v1600
      %v1640 = vunpack.c.l.b16 %v1601
      %v1641 = vunpack.c.l.b16 %v1602
      %v1642 = vpack.c.b16 %v1627, %v1626
      %v1643 = vpack.c.b16 %v1629, %v1628
      %v1644 = vpack.c.b16 %v1631, %v1630
      %v1645 = vpack.c.b16 %v1633, %v1632
      %v1646 = vpack.c.b16 %v1635, %v1634
      %v1647 = vpack.c.b16 %v1637, %v1636
      %v1648 = vpack.c.b16 %v1639, %v1638
      %v1649 = vpack.c.b16 %v1641, %v1640
      %1658 = vmatprep.subr.bf16.mxu0 0
      %1659 = vmatpush1.bf16.msra.mxu0 %v1642
      %1660 = vmatprep.subr.bf16.mxu0 0
      %1661 = vmatpush1.bf16.msra.mxu0 %v1643
      %1662 = vmatprep.subr.bf16.mxu0 0
      %1663 = vmatpush1.bf16.msra.mxu0 %v1644
      %1664 = vmatprep.subr.bf16.mxu0 0
      %1665 = vmatpush1.bf16.msra.mxu0 %v1645
      %1666 = vmatprep.subr.bf16.mxu0 0
      %1667 = vmatpush1.bf16.msra.mxu0 %v1646
      %1668 = vmatprep.subr.bf16.mxu0 0
      %1669 = vmatpush1.bf16.msra.mxu0 %v1647
      %1670 = vmatprep.subr.bf16.mxu0 0
      %1671 = vmatpush1.bf16.msra.mxu0 %v1648
      %1672 = vmatprep.subr.bf16.mxu0 0
      %1673 = vmatpush1.bf16.msra.mxu0 %v1649
      %1674 = vmatprep.subr.bf16.mxu0 0
      %1675 = vmatpush1.bf16.msra.mxu0 0
      %1676 = vmatprep.subr.bf16.mxu0 0
      %1677 = vmatpush1.bf16.msra.mxu0 0
      %1678 = vmatprep.subr.bf16.mxu0 0
      %1679 = vmatpush1.bf16.msra.mxu0 0
      %1680 = vmatprep.subr.bf16.mxu0 0
      %1681 = vmatpush1.bf16.msra.mxu0 0
      %1682 = vmatprep.subr.bf16.mxu0 0
      %1683 = vmatpush1.bf16.msra.mxu0 0
      %1684 = vmatprep.subr.bf16.mxu0 0
      %1685 = vmatpush1.bf16.msra.mxu0 0
      %1686 = vmatprep.subr.bf16.mxu0 0
      %1687 = vmatpush1.bf16.msra.mxu0 0
      %1688 = vmatprep.subr.bf16.mxu0 0
      %1689 = vmatpush1.bf16.msra.mxu0 0
      %1690 = vmatprep.mubr.bf16.mxu0 0
      %1691 = vmatmul.mubr.bf16.gmra.mrb[0].mxu0 %v1583
      %v1692 = vpop.f32.mrb[0].mxu0
      %v1693 = vadd.f32 %v1608, %v1692
      %v1694 = vpop.f32.mrb[0].mxu0
      %v1695 = vpop.f32.mrb[0].mxu0
      %v1696 = vadd.f32 %v1608, %v1695
      %v1697 = vpop.f32.mrb[0].mxu0
      %1698 = vmatprep.mubr.bf16.mxu0 0
      %1699 = vmatmul.mubr.bf16.gmra.mrb[0].mxu0 %v1584
      %v1700 = vpop.f32.mrb[0].mxu0
      %v1701 = vadd.f32 %v1608, %v1700
      %v1702 = vpop.f32.mrb[0].mxu0
      %v1703 = vpop.f32.mrb[0].mxu0
      %v1704 = vadd.f32 %v1608, %v1703
      %v1705 = vpop.f32.mrb[0].mxu0
      %1706 = vmatprep.mubr.bf16.mxu0 0
      %1707 = vmatmul.mubr.bf16.gmra.mrb[0].mxu0 %v1585
      %v1708 = vpop.f32.mrb[0].mxu0
      %v1709 = vadd.f32 %v1608, %v1708
      %v1710 = vpop.f32.mrb[0].mxu0
      %v1711 = vpop.f32.mrb[0].mxu0
      %v1712 = vadd.f32 %v1608, %v1711
      %v1713 = vpop.f32.mrb[0].mxu0
      %1714 = vmatprep.mubr.bf16.mxu0 0
      %1715 = vmatmul.mubr.bf16.gmra.mrb[0].mxu0 %v1586
      %v1716 = vpop.f32.mrb[0].mxu0
      %v1717 = vadd.f32 %v1608, %v1716
      %v1718 = vpop.f32.mrb[0].mxu0
      %v1719 = vpop.f32.mrb[0].mxu0
      %v1720 = vadd.f32 %v1608, %v1719
      %v1721 = vpop.f32.mrb[0].mxu0
      %1722 = vdwg.mxu0
      %v1723 = vld [vmem:[%s9] sm:$0x1]
      %v1725 = vlaneseq
      %v1726 = vshrl.u32 %v1725, 7
      %v1727 = vsub.s32 0, %v1726
      %v1728 = vrot.slane %v1723, %v1727
      %v1730 = vmul.f32 %v1693, %v1728
      %v1731 = vmul.f32 %v1696, %v1728
      %v1732 = vmul.f32 %v1701, %v1728
      %v1733 = vmul.f32 %v1704, %v1728
      %v1734 = vmul.f32 %v1709, %v1728
      %v1735 = vmul.f32 %v1712, %v1728
      %v1736 = vmul.f32 %v1717, %v1728
      %v1737 = vmul.f32 %v1720, %v1728
      %v1738 = vld [vmem:[%s10] sm:$0x1]
      %v1740 = vlaneseq
      %v1741 = vshrl.u32 %v1740, 7
      %v1742 = vsub.s32 0, %v1741
      %v1743 = vrot.slane %v1738, %v1742
      %v1745 = vadd.f32 %v1730, %v1743
      %v1746 = vadd.f32 %v1731, %v1743
      %v1747 = vadd.f32 %v1732, %v1743
      %v1748 = vadd.f32 %v1733, %v1743
      %v1749 = vadd.f32 %v1734, %v1743
      %v1750 = vadd.f32 %v1735, %v1743
      %v1751 = vadd.f32 %v1736, %v1743
      %v1752 = vadd.f32 %v1737, %v1743
      %v1753 = vadd.f32 %v1745, 3.0
      %v1754 = vadd.f32 %v1746, 3.0
      %v1755 = vadd.f32 %v1747, 3.0
      %v1756 = vadd.f32 %v1748, 3.0
      %v1757 = vadd.f32 %v1749, 3.0
      %v1758 = vadd.f32 %v1750, 3.0
      %v1759 = vadd.f32 %v1751, 3.0
      %v1760 = vadd.f32 %v1752, 3.0
      %v1761 = vmax.f32 %v1753, 0.0
      %v1762 = vmax.f32 %v1754, 0.0
      %v1763 = vmax.f32 %v1755, 0.0
      %v1764 = vmax.f32 %v1756, 0.0
      %v1765 = vmax.f32 %v1757, 0.0
      %v1766 = vmax.f32 %v1758, 0.0
      %v1767 = vmax.f32 %v1759, 0.0
      %v1768 = vmax.f32 %v1760, 0.0
      %v1769 = vmin.f32 %v1761, 6.0
      %v1770 = vmin.f32 %v1762, 6.0
      %v1771 = vmin.f32 %v1763, 6.0
      %v1772 = vmin.f32 %v1764, 6.0
      %v1773 = vmin.f32 %v1765, 6.0
      %v1774 = vmin.f32 %v1766, 6.0
      %v1775 = vmin.f32 %v1767, 6.0
      %v1776 = vmin.f32 %v1768, 6.0
      %v1777 = vmul.f32 %v1769, 0.16666667
      %v1778 = vmul.f32 %v1770, 0.16666667
      %v1779 = vmul.f32 %v1771, 0.16666667
      %v1780 = vmul.f32 %v1772, 0.16666667
      %v1781 = vmul.f32 %v1773, 0.16666667
      %v1782 = vmul.f32 %v1774, 0.16666667
      %v1783 = vmul.f32 %v1775, 0.16666667
      %v1784 = vmul.f32 %v1776, 0.16666667
      %v1785 = vmul.f32 %v1745, %v1777
      %v1786 = vmul.f32 %v1746, %v1778
      %v1787 = vmul.f32 %v1747, %v1779
      %v1788 = vmul.f32 %v1748, %v1780
      %v1789 = vmul.f32 %v1749, %v1781
      %v1790 = vmul.f32 %v1750, %v1782
      %v1791 = vmul.f32 %v1751, %v1783
      %v1792 = vmul.f32 %v1752, %v1784
      %v1793 = vpack.c.bf16 %v1786, %v1785
      %v1794 = vpack.c.bf16 %v1788, %v1787
      %v1795 = vpack.c.bf16 %v1790, %v1789
      %v1796 = vpack.c.bf16 %v1792, %v1791
      %v1797 = vld [vmem:[%s11] sm:$0xf]
      %v1798 = vld [vmem:[%s12] sm:$0x1]
      %v1800 = vlaneseq
      %v1801 = vshrl.u32 %v1800, 7
      %v1802 = vsub.s32 0, %v1801
      %v1803 = vrot.slane %v1798, %v1802
      %vm1805 = vcmask 64512
      %v1807 = vsel %vm1805, %v1793, 0
      %v1810 = vsel %vm1805, %v1794, 0
      %v1813 = vsel %vm1805, %v1795, 0
      %v1816 = vsel %vm1805, %v1796, 0
      %vm1818 = vcmask 1043456
      %v1820 = vsel %vm1818, %v1797, 0
      %1822 = vmatprep.subr.bf16.mxu0 0
      %1823 = vmatpush1.bf16.msra.mxu0 %v1820
      %1824 = vmatprep.subr.bf16.mxu0 0
      %1825 = vmatpush1.bf16.msra.mxu0 0
      %1826 = vmatprep.subr.bf16.mxu0 0
      %1827 = vmatpush1.bf16.msra.mxu0 0
      %1828 = vmatprep.subr.bf16.mxu0 0
      %1829 = vmatpush1.bf16.msra.mxu0 0
      %1830 = vmatprep.subr.bf16.mxu0 0
      %1831 = vmatpush1.bf16.msra.mxu0 0
      %1832 = vmatprep.subr.bf16.mxu0 0
      %1833 = vmatpush1.bf16.msra.mxu0 0
      %1834 = vmatprep.subr.bf16.mxu0 0
      %1835 = vmatpush1.bf16.msra.mxu0 0
      %1836 = vmatprep.subr.bf16.mxu0 0
      %1837 = vmatpush1.bf16.msra.mxu0 0
      %1838 = vmatprep.subr.bf16.mxu0 0
      %1839 = vmatpush1.bf16.msra.mxu0 0
      %1840 = vmatprep.subr.bf16.mxu0 0
      %1841 = vmatpush1.bf16.msra.mxu0 0
      %1842 = vmatprep.subr.bf16.mxu0 0
      %1843 = vmatpush1.bf16.msra.mxu0 0
      %1844 = vmatprep.subr.bf16.mxu0 0
      %1845 = vmatpush1.bf16.msra.mxu0 0
      %1846 = vmatprep.subr.bf16.mxu0 0
      %1847 = vmatpush1.bf16.msra.mxu0 0
      %1848 = vmatprep.subr.bf16.mxu0 0
      %1849 = vmatpush1.bf16.msra.mxu0 0
      %1850 = vmatprep.subr.bf16.mxu0 0
      %1851 = vmatpush1.bf16.msra.mxu0 0
      %1852 = vmatprep.subr.bf16.mxu0 0
      %1853 = vmatpush1.bf16.msra.mxu0 0
      %1854 = vmatprep.mubr.bf16.mxu0 0
      %1855 = vmatmul.mubr.bf16.gmra.mrb[0].mxu0 %v1807
      %v1856 = vpop.f32.mrb[0].mxu0
      %v1857 = vadd.f32 %v1803, %v1856
      %v1858 = vpop.f32.mrb[0].mxu0
      %v1859 = vpop.f32.mrb[0].mxu0
      %v1860 = vadd.f32 %v1803, %v1859
      %v1861 = vpop.f32.mrb[0].mxu0
      %1862 = vmatprep.mubr.bf16.mxu0 0
      %1863 = vmatmul.mubr.bf16.gmra.mrb[0].mxu0 %v1810
      %v1864 = vpop.f32.mrb[0].mxu0
      %v1865 = vadd.f32 %v1803, %v1864
      %v1866 = vpop.f32.mrb[0].mxu0
      %v1867 = vpop.f32.mrb[0].mxu0
      %v1868 = vadd.f32 %v1803, %v1867
      %v1869 = vpop.f32.mrb[0].mxu0
      %1870 = vmatprep.mubr.bf16.mxu0 0
      %1871 = vmatmul.mubr.bf16.gmra.mrb[0].mxu0 %v1813
      %v1872 = vpop.f32.mrb[0].mxu0
      %v1873 = vadd.f32 %v1803, %v1872
      %v1874 = vpop.f32.mrb[0].mxu0
      %v1875 = vpop.f32.mrb[0].mxu0
      %v1876 = vadd.f32 %v1803, %v1875
      %v1877 = vpop.f32.mrb[0].mxu0
      %1878 = vmatprep.mubr.bf16.mxu0 0
      %1879 = vmatmul.mubr.bf16.gmra.mrb[0].mxu0 %v1816
      %v1880 = vpop.f32.mrb[0].mxu0
      %v1881 = vadd.f32 %v1803, %v1880
      %v1882 = vpop.f32.mrb[0].mxu0
      %v1883 = vpop.f32.mrb[0].mxu0
      %v1884 = vadd.f32 %v1803, %v1883
      %v1885 = vpop.f32.mrb[0].mxu0
      %1886 = vdwg.mxu0
      %v1887 = vxor.u32 %v1857, 2147483648
      %v1888 = vxor.u32 %v1860, 2147483648
      %v1889 = vxor.u32 %v1865, 2147483648
      %v1890 = vxor.u32 %v1868, 2147483648
      %v1891 = vxor.u32 %v1873, 2147483648
      %v1892 = vxor.u32 %v1876, 2147483648
      %v1893 = vxor.u32 %v1881, 2147483648
      %v1894 = vxor.u32 %v1884, 2147483648
      %v1895 = vmul.f32 %v1887, 1.442695
      %v1896 = vpow.pop %v1895
      %v1897 = vmul.f32 %v1888, 1.442695
      %v1898 = vpow.pop %v1897
      %v1899 = vmul.f32 %v1889, 1.442695
      %v1900 = vpow.pop %v1899
      %v1901 = vmul.f32 %v1890, 1.442695
      %v1902 = vpow.pop %v1901
      %v1903 = vmul.f32 %v1891, 1.442695
      %v1904 = vpow.pop %v1903
      %v1905 = vmul.f32 %v1892, 1.442695
      %v1906 = vpow.pop %v1905
      %v1907 = vmul.f32 %v1893, 1.442695
      %v1908 = vpow.pop %v1907
      %v1909 = vmul.f32 %v1894, 1.442695
      %v1910 = vpow.pop %v1909
      %v1911 = vadd.f32 %v1896, 1.0
      %v1912 = vadd.f32 %v1898, 1.0
      %v1913 = vadd.f32 %v1900, 1.0
      %v1914 = vadd.f32 %v1902, 1.0
      %v1915 = vadd.f32 %v1904, 1.0
      %v1916 = vadd.f32 %v1906, 1.0
      %v1917 = vadd.f32 %v1908, 1.0
      %v1918 = vadd.f32 %v1910, 1.0
      %v1919 = vrcp.pop %v1911
      %v1920 = vmul.f32 1.0, %v1919
      %v1921 = vrcp.pop %v1912
      %v1922 = vmul.f32 1.0, %v1921
      %v1923 = vrcp.pop %v1913
      %v1924 = vmul.f32 1.0, %v1923
      %v1925 = vrcp.pop %v1914
      %v1926 = vmul.f32 1.0, %v1925
      %v1927 = vrcp.pop %v1915
      %v1928 = vmul.f32 1.0, %v1927
      %v1929 = vrcp.pop %v1916
      %v1930 = vmul.f32 1.0, %v1929
      %v1931 = vrcp.pop %v1917
      %v1932 = vmul.f32 1.0, %v1931
      %v1933 = vrcp.pop %v1918
      %v1934 = vmul.f32 1.0, %v1933
      %v1935 = vadd.f32 %v1575, %v1576
      %v1936 = vrot.slane %v1935, 4
      %v1937 = vadd.f32 %v1935, %v1936
      %v1938 = vrot.slane %v1937, 2
      %v1939 = vadd.f32 %v1937, %v1938
      %v1940 = vrot.slane %v1939, 1
      %v1941 = vadd.f32 %v1939, %v1940
      %v1942 = vadd.f32 %v1577, %v1578
      %v1943 = vrot.slane %v1942, 4
      %v1944 = vadd.f32 %v1942, %v1943
      %v1945 = vrot.slane %v1944, 2
      %v1946 = vadd.f32 %v1944, %v1945
      %v1947 = vrot.slane %v1946, 1
      %v1948 = vadd.f32 %v1946, %v1947
      %v1949 = vadd.f32 %v1579, %v1580
      %v1950 = vrot.slane %v1949, 4
      %v1951 = vadd.f32 %v1949, %v1950
      %v1952 = vrot.slane %v1951, 2
      %v1953 = vadd.f32 %v1951, %v1952
      %v1954 = vrot.slane %v1953, 1
      %v1955 = vadd.f32 %v1953, %v1954
      %v1956 = vadd.f32 %v1581, %v1582
      %v1957 = vrot.slane %v1956, 4
      %v1958 = vadd.f32 %v1956, %v1957
      %v1959 = vrot.slane %v1958, 2
      %v1960 = vadd.f32 %v1958, %v1959
      %v1961 = vrot.slane %v1960, 1
      %v1962 = vadd.f32 %v1960, %v1961
      %v1963 = vrcp.pop 16.0
      %v1964 = vmul.f32 %v1941, %v1963
      %v1965 = vmul.f32 %v1948, %v1963
      %v1966 = vmul.f32 %v1955, %v1963
      %v1967 = vmul.f32 %v1962, %v1963
      %v1968 = vpack.c.bf16 %v1964, %v1964
      %v1969 = vpack.c.bf16 %v1965, %v1965
      %v1970 = vpack.c.bf16 %v1966, %v1966
      %v1971 = vpack.c.bf16 %v1967, %v1967
      %v1972 = vld [vmem:[%s13] sm:$0xf]
      %v1973 = vld [vmem:[%s13 + $0x4] sm:$0xf]
      %v1974 = vld [vmem:[%s13 + $0x8] sm:$0xf]
      %v1975 = vld [vmem:[%s13 + $0xc] sm:$0xf]
      %v1976 = vld [vmem:[%s13 + $0x10] sm:$0xf]
      %v1977 = vld [vmem:[%s13 + $0x14] sm:$0xf]
      %v1978 = vld [vmem:[%s13 + $0x18] sm:$0xf]
      %v1979 = vld [vmem:[%s13 + $0x1c] sm:$0xf]
      %v1980 = vld [vmem:[%s13 + $0x20] sm:$0xf]
      %v1981 = vld [vmem:[%s13 + $0x24] sm:$0xf]
      %v1982 = vld [vmem:[%s13 + $0x28] sm:$0xf]
      %v1983 = vld [vmem:[%s13 + $0x2c] sm:$0xf]
      %v1984 = vld [vmem:[%s13 + $0x30] sm:$0xf]
      %v1985 = vld [vmem:[%s13 + $0x34] sm:$0xf]
      %v1986 = vld [vmem:[%s13 + $0x38] sm:$0xf]
      %v1987 = vld [vmem:[%s13 + $0x3c] sm:$0xf]
      %v1988 = vld [vmem:[%s14] sm:$0x1]
      %v1990 = vlaneseq
      %v1991 = vshrl.u32 %v1990, 7
      %v1992 = vsub.s32 0, %v1991
      %v1993 = vrot.slane %v1988, %v1992
      %v1999 = vunpack.c.l.b16 %v1968
      %v2000 = vunpack.c.l.b16 %v1969
      %v2001 = vunpack.c.l.b16 %v1970
      %v2002 = vunpack.c.l.b16 %v1971
      %vm2003 = vcmask 1041409
      %v2004 = vsel %vm2003, %v2000, %v1999
      %vm2005 = vcmask 1042434
      %v2006 = vsel %vm2005, %v2001, %v2004
      %vm2007 = vcmask 1043459
      %v2008 = vsel %vm2007, %v2002, %v2006
      %v2009 = vpack.c.b16 %v2008, %v2008
      %v2027 = vunpack.c.l.b16 %v1972
      %v2028 = vunpack.c.l.b16 %v1973
      %v2029 = vunpack.c.l.b16 %v1974
      %v2030 = vunpack.c.l.b16 %v1975
      %v2031 = vunpack.c.l.b16 %v1976
      %v2032 = vunpack.c.l.b16 %v1977
      %v2033 = vunpack.c.l.b16 %v1978
      %v2034 = vunpack.c.l.b16 %v1979
      %v2035 = vunpack.c.l.b16 %v1980
      %v2036 = vunpack.c.l.b16 %v1981
      %v2037 = vunpack.c.l.b16 %v1982
      %v2038 = vunpack.c.l.b16 %v1983
      %v2039 = vunpack.c.l.b16 %v1984
      %v2040 = vunpack.c.l.b16 %v1985
      %v2041 = vunpack.c.l.b16 %v1986
      %v2042 = vunpack.c.l.b16 %v1987
      %v2043 = vpack.c.b16 %v2028, %v2027
      %v2044 = vpack.c.b16 %v2030, %v2029
      %v2045 = vpack.c.b16 %v2032, %v2031
      %v2046 = vpack.c.b16 %v2034, %v2033
      %v2047 = vpack.c.b16 %v2036, %v2035
      %v2048 = vpack.c.b16 %v2038, %v2037
      %v2049 = vpack.c.b16 %v2040, %v2039
      %v2050 = vpack.c.b16 %v2042, %v2041
      %2059 = vmatprep.subr.bf16.mxu0 0
      %2060 = vmatpush1.bf16.msra.mxu0 %v2043
      %2061 = vmatprep.subr.bf16.mxu0 0
      %2062 = vmatpush1.bf16.msra.mxu0 %v2044
      %2063 = vmatprep.subr.bf16.mxu0 0
      %2064 = vmatpush1.bf16.msra.mxu0 %v2045
      %2065 = vmatprep.subr.bf16.mxu0 0
      %2066 = vmatpush1.bf16.msra.mxu0 %v2046
      %2067 = vmatprep.subr.bf16.mxu0 0
      %2068 = vmatpush1.bf16.msra.mxu0 %v2047
      %2069 = vmatprep.subr.bf16.mxu0 0
      %2070 = vmatpush1.bf16.msra.mxu0 %v2048
      %2071 = vmatprep.subr.bf16.mxu0 0
      %2072 = vmatpush1.bf16.msra.mxu0 %v2049
      %2073 = vmatprep.subr.bf16.mxu0 0
      %2074 = vmatpush1.bf16.msra.mxu0 %v2050
      %2075 = vmatprep.subr.bf16.mxu0 0
      %2076 = vmatpush1.bf16.msra.mxu0 0
      %2077 = vmatprep.subr.bf16.mxu0 0
      %2078 = vmatpush1.bf16.msra.mxu0 0
      %2079 = vmatprep.subr.bf16.mxu0 0
      %2080 = vmatpush1.bf16.msra.mxu0 0
      %2081 = vmatprep.subr.bf16.mxu0 0
      %2082 = vmatpush1.bf16.msra.mxu0 0
      %2083 = vmatprep.subr.bf16.mxu0 0
      %2084 = vmatpush1.bf16.msra.mxu0 0
      %2085 = vmatprep.subr.bf16.mxu0 0
      %2086 = vmatpush1.bf16.msra.mxu0 0
      %2087 = vmatprep.subr.bf16.mxu0 0
      %2088 = vmatpush1.bf16.msra.mxu0 0
      %2089 = vmatprep.subr.bf16.mxu0 0
      %2090 = vmatpush1.bf16.msra.mxu0 0
      %2091 = vmatprep.mubr.bf16.mxu0 0
      %2092 = vmatmul.mubr.bf16.gmra.mrb[0].mxu0 %v2009
      %v2093 = vpop.f32.mrb[0].mxu0
      %v2094 = vadd.f32 %v1993, %v2093
      %v2095 = vpop.f32.mrb[0].mxu0
      %v2096 = vpop.f32.mrb[0].mxu0
      %v2097 = vpop.f32.mrb[0].mxu0
      %2098 = vdwg.mxu0
      %v2099 = vld [vmem:[%s15] sm:$0x1]
      %v2101 = vlaneseq
      %v2102 = vshrl.u32 %v2101, 7
      %v2103 = vsub.s32 0, %v2102
      %v2104 = vrot.slane %v2099, %v2103
      %v2106 = vmul.f32 %v2094, %v2104
      %v2107 = vld [vmem:[%s16] sm:$0x1]
      %v2109 = vlaneseq
      %v2110 = vshrl.u32 %v2109, 7
      %v2111 = vsub.s32 0, %v2110
      %v2112 = vrot.slane %v2107, %v2111
      %v2114 = vadd.f32 %v2106, %v2112
      %v2115 = vadd.f32 %v2114, 3.0
      %v2116 = vmax.f32 %v2115, 0.0
      %v2117 = vmin.f32 %v2116, 6.0
      %v2118 = vmul.f32 %v2117, 0.16666667
      %v2119 = vmul.f32 %v2114, %v2118
      %v2120 = vpack.c.bf16 %v2119, %v2119
      %v2121 = vld [vmem:[%s17] sm:$0xf]
      %v2122 = vld [vmem:[%s17 + $0x4] sm:$0xf]
      %v2123 = vld [vmem:[%s17 + $0x8] sm:$0xf]
      %v2124 = vld [vmem:[%s17 + $0xc] sm:$0xf]
      %v2125 = vld [vmem:[%s17 + $0x10] sm:$0xf]
      %v2126 = vld [vmem:[%s17 + $0x14] sm:$0xf]
      %v2127 = vld [vmem:[%s17 + $0x18] sm:$0xf]
      %v2128 = vld [vmem:[%s17 + $0x1c] sm:$0xf]
      %v2129 = vld [vmem:[%s17 + $0x20] sm:$0xf]
      %v2130 = vld [vmem:[%s17 + $0x24] sm:$0xf]
      %v2131 = vld [vmem:[%s17 + $0x28] sm:$0xf]
      %v2132 = vld [vmem:[%s17 + $0x2c] sm:$0xf]
      %v2133 = vld [vmem:[%s17 + $0x30] sm:$0xf]
      %v2134 = vld [vmem:[%s17 + $0x34] sm:$0xf]
      %v2135 = vld [vmem:[%s17 + $0x38] sm:$0xf]
      %v2136 = vld [vmem:[%s17 + $0x3c] sm:$0xf]
      %v2137 = vld [vmem:[%s18] sm:$0x1]
      %v2139 = vlaneseq
      %v2140 = vshrl.u32 %v2139, 7
      %v2141 = vsub.s32 0, %v2140
      %v2142 = vrot.slane %v2137, %v2141
      %v2160 = vunpack.c.l.b16 %v2121
      %v2161 = vunpack.c.l.b16 %v2122
      %v2162 = vunpack.c.l.b16 %v2123
      %v2163 = vunpack.c.l.b16 %v2124
      %v2164 = vunpack.c.l.b16 %v2125
      %v2165 = vunpack.c.l.b16 %v2126
      %v2166 = vunpack.c.l.b16 %v2127
      %v2167 = vunpack.c.l.b16 %v2128
      %v2168 = vunpack.c.l.b16 %v2129
      %v2169 = vunpack.c.l.b16 %v2130
      %v2170 = vunpack.c.l.b16 %v2131
      %v2171 = vunpack.c.l.b16 %v2132
      %v2172 = vunpack.c.l.b16 %v2133
      %v2173 = vunpack.c.l.b16 %v2134
      %v2174 = vunpack.c.l.b16 %v2135
      %v2175 = vunpack.c.l.b16 %v2136
      %v2176 = vpack.c.b16 %v2161, %v2160
      %v2177 = vpack.c.b16 %v2163, %v2162
      %v2178 = vpack.c.b16 %v2165, %v2164
      %v2179 = vpack.c.b16 %v2167, %v2166
      %v2180 = vpack.c.b16 %v2169, %v2168
      %v2181 = vpack.c.b16 %v2171, %v2170
      %v2182 = vpack.c.b16 %v2173, %v2172
      %v2183 = vpack.c.b16 %v2175, %v2174
      %2192 = vmatprep.subr.bf16.mxu0 0
      %2193 = vmatpush1.bf16.msra.mxu0 %v2176
      %2194 = vmatprep.subr.bf16.mxu0 0
      %2195 = vmatpush1.bf16.msra.mxu0 %v2177
      %2196 = vmatprep.subr.bf16.mxu0 0
      %2197 = vmatpush1.bf16.msra.mxu0 %v2178
      %2198 = vmatprep.subr.bf16.mxu0 0
      %2199 = vmatpush1.bf16.msra.mxu0 %v2179
      %2200 = vmatprep.subr.bf16.mxu0 0
      %2201 = vmatpush1.bf16.msra.mxu0 %v2180
      %2202 = vmatprep.subr.bf16.mxu0 0
      %2203 = vmatpush1.bf16.msra.mxu0 %v2181
      %2204 = vmatprep.subr.bf16.mxu0 0
      %2205 = vmatpush1.bf16.msra.mxu0 %v2182
      %2206 = vmatprep.subr.bf16.mxu0 0
      %2207 = vmatpush1.bf16.msra.mxu0 %v2183
      %2208 = vmatprep.subr.bf16.mxu0 0
      %2209 = vmatpush1.bf16.msra.mxu0 0
      %2210 = vmatprep.subr.bf16.mxu0 0
      %2211 = vmatpush1.bf16.msra.mxu0 0
      %2212 = vmatprep.subr.bf16.mxu0 0
      %2213 = vmatpush1.bf16.msra.mxu0 0
      %2214 = vmatprep.subr.bf16.mxu0 0
      %2215 = vmatpush1.bf16.msra.mxu0 0
      %2216 = vmatprep.subr.bf16.mxu0 0
      %2217 = vmatpush1.bf16.msra.mxu0 0
      %2218 = vmatprep.subr.bf16.mxu0 0
      %2219 = vmatpush1.bf16.msra.mxu0 0
      %2220 = vmatprep.subr.bf16.mxu0 0
      %2221 = vmatpush1.bf16.msra.mxu0 0
      %2222 = vmatprep.subr.bf16.mxu0 0
      %2223 = vmatpush1.bf16.msra.mxu0 0
      %2224 = vmatprep.mubr.bf16.mxu0 0
      %2225 = vmatmul.mubr.bf16.gmra.mrb[0].mxu0 %v2120
      %v2226 = vpop.f32.mrb[0].mxu0
      %v2227 = vadd.f32 %v2142, %v2226
      %v2228 = vpop.f32.mrb[0].mxu0
      %v2229 = vpop.f32.mrb[0].mxu0
      %v2230 = vpop.f32.mrb[0].mxu0
      %2231 = vdwg.mxu0
      %v2232 = vxor.u32 %v2227, 2147483648
      %v2233 = vmul.f32 %v2232, 1.442695
      %v2234 = vpow.pop %v2233
      %v2235 = vadd.f32 %v2234, 1.0
      %v2236 = vrcp.pop %v2235
      %v2237 = vmul.f32 1.0, %v2236
      %v2238 = vmul.f32 %v1575, %v1920
      %v2239 = vmul.f32 %v1576, %v1922
      %v2240 = vmul.f32 %v1577, %v1924
      %v2241 = vmul.f32 %v1578, %v1926
      %v2242 = vmul.f32 %v1579, %v1928
      %v2243 = vmul.f32 %v1580, %v1930
      %v2244 = vmul.f32 %v1581, %v1932
      %v2245 = vmul.f32 %v1582, %v1934
      %v2248 = vunpack.c.l.s4 1966171168
      %v2249 = vunpack.c.0.s8 %v2248
      %v2250 = vlaneseq
      %v2251 = vshrl.u32 %v2250, 7
      %v2252 = vsub.s32 %v2249, %v2251
      %v2253 = vrot.slane %v2237, %v2252
      %v2254 = vcombine.high %v2253, %v2253
      %v2256 = vunpack.c.l.s4 1966171168
      %v2257 = vunpack.c.0.s8 %v2256
      %v2258 = vlaneseq
      %v2259 = vshrl.u32 %v2258, 7
      %v2260 = vsub.s32 %v2257, %v2259
      %v2261 = vrot.slane %v2253, %v2260
      %v2263 = vunpack.c.l.s4 1966171168
      %v2264 = vunpack.c.0.s8 %v2263
      %v2265 = vlaneseq
      %v2266 = vshrl.u32 %v2265, 7
      %v2267 = vsub.s32 %v2264, %v2266
      %v2268 = vrot.slane %v2254, %v2267
      %v2269 = vcombine.high %v2261, %v2261
      %v2270 = vcombine.high %v2268, %v2268
      %v2271 = vlaneseq
      %v2272 = vshrl.u32 %v2271, 7
      %v2273 = vsub.s32 0, %v2272
      %v2274 = vrot.slane %v2261, %v2273
      %v2275 = vlaneseq
      %v2276 = vshrl.u32 %v2275, 7
      %v2277 = vsub.s32 0, %v2276
      %v2278 = vrot.slane %v2268, %v2277
      %v2279 = vlaneseq
      %v2280 = vshrl.u32 %v2279, 7
      %v2281 = vsub.s32 0, %v2280
      %v2282 = vrot.slane %v2269, %v2281
      %v2283 = vlaneseq
      %v2284 = vshrl.u32 %v2283, 7
      %v2285 = vsub.s32 0, %v2284
      %v2286 = vrot.slane %v2270, %v2285
      %v2291 = vmul.f32 %v2238, %v2274
      %v2292 = vmul.f32 %v2239, %v2274
      %v2293 = vmul.f32 %v2240, %v2278
      %v2294 = vmul.f32 %v2241, %v2278
      %v2295 = vmul.f32 %v2242, %v2282
      %v2296 = vmul.f32 %v2243, %v2282
      %v2297 = vmul.f32 %v2244, %v2286
      %v2298 = vmul.f32 %v2245, %v2286
      %v2299 = vadd.f32 %v2291, %v620
      %v2300 = vadd.f32 %v2292, %v621
      %v2301 = vadd.f32 %v2293, %v622
      %v2302 = vadd.f32 %v2294, %v623
      %v2303 = vadd.f32 %v2295, %v624
      %v2304 = vadd.f32 %v2296, %v625
      %v2305 = vadd.f32 %v2297, %v626
      %v2306 = vadd.f32 %v2298, %v627
      %v2307 = vmax.f32 %v2299, 0.0
      %v2308 = vmax.f32 %v2300, 0.0
      %v2309 = vmax.f32 %v2301, 0.0
      %v2310 = vmax.f32 %v2302, 0.0
      %v2311 = vmax.f32 %v2303, 0.0
      %v2312 = vmax.f32 %v2304, 0.0
      %v2313 = vmax.f32 %v2305, 0.0
      %v2314 = vmax.f32 %v2306, 0.0
      %v2315 = vpack.c.bf16 %v2308, %v2307
      %v2316 = vpack.c.bf16 %v2310, %v2309
      %v2317 = vpack.c.bf16 %v2312, %v2311
      %v2318 = vpack.c.bf16 %v2314, %v2313
      %v2323 = vunpack.c.l.b16 %v2315
      %v2324 = vunpack.c.h.b16 %v2315
      %v2325 = vunpack.c.l.b16 %v2316
      %v2326 = vunpack.c.h.b16 %v2316
      %v2327 = vunpack.c.l.b16 %v2317
      %v2328 = vunpack.c.h.b16 %v2317
      %v2329 = vunpack.c.l.b16 %v2318
      %v2330 = vunpack.c.h.b16 %v2318
      %v2331 = vpack.c.b16 %v2323, %v2323
      %v2332 = vpack.c.b16 %v2324, %v2324
      %v2333 = vpack.c.b16 %v2325, %v2325
      %v2334 = vpack.c.b16 %v2326, %v2326
      %v2335 = vpack.c.b16 %v2327, %v2327
      %v2336 = vpack.c.b16 %v2328, %v2328
      %v2337 = vpack.c.b16 %v2329, %v2329
      %v2338 = vpack.c.b16 %v2330, %v2330
      %2347 = vst [vmem:[%s609] sm:$0xf] %v2331
      %2348 = vst [vmem:[%s609 + $0x4] sm:$0xf] %v2332
      %2349 = vst [vmem:[%s609 + $0x8] sm:$0xf] %v2333
      %2350 = vst [vmem:[%s609 + $0xc] sm:$0xf] %v2334
      %2351 = vst [vmem:[%s609 + $0x10] sm:$0xf] %v2335
      %2352 = vst [vmem:[%s609 + $0x14] sm:$0xf] %v2336
      %2353 = vst [vmem:[%s609 + $0x18] sm:$0xf] %v2337
      %2354 = vst [vmem:[%s609 + $0x1c] sm:$0xf] %v2338
      %s2355 = smul.u32 4, %s30
      %p2356 = scmp.lt.s32.totalorder %s2355, 7
      %s2357 = scalar_select %p2356, %s2355, 7
      %s2358 = smul.addr %s2357, 2
      %s2359 = smul.addr %s2358, 4
      %s2360 = scalar_lea.vmem %s19, %s2359
      // Predicated region
      $region97: #{fwd.1} parent=95 // pred_check
        %p2361 = pneg %p452
      $region98: #{fwd.1} parent=95 // pred_check_branch
        %2363 = sbr.rel (%p2361) target = $region100
      $region99: #{fwd.1} parent=95 // pred_region
        %s2364 = smul.u32 4, %s30
      $region100: #{fwd.1} parent=95 // pred_fallthru
        _
    $region96: #{fwd.1} parent=5 // pred_fallthru
      _
    %p2365 = scmp.le.s32.totalorder 2, %s25
    // Predicated region
    $region101: #{fwd.1} parent=5 // pred_check
      %p2366 = pneg %p2365
    $region102: #{fwd.1} parent=5 // pred_check_branch
      %2368 = sbr.rel (%p2366) target = $region104
    $region103: #{fwd.1} parent=5 // pred_region
      %s2369 = ssub.s32 %s25, 2
      // Predicated region
      $region105: #{fwd.1} parent=103 // pred_check
        %p2370 = pneg %p458
      $region106: #{fwd.1} parent=103 // pred_check_branch
        %2372 = sbr.rel (%p2370) target = $region108
      $region107: #{fwd.1} parent=103 // pred_region
        %s2373 = smul.u32 4, %s31
        %p2374 = scmp.lt.s32.totalorder %s2373, 7
        %s2375 = scalar_select %p2374, %s2373, 7
        %s2376 = smul.addr %s2375, 2
        %s2377 = smul.addr %s2376, 4
        %s2378 = scalar_lea.vmem %s19, %s2377
      $region108: #{fwd.1} parent=103 // pred_fallthru
        _
    $region104: #{fwd.1} parent=5 // pred_fallthru
      _
  $region6: #{fwd.1} parent=0 // loop_footer
    %s29 = sadd.s32 1, %s25
  $region7: #{fwd.1} parent=0 // loop_footer_branch
    %24 = sbr.rel target = $region3
  $region8: #{fwd.1} parent=0 // loop_exit
    _

</llo_original>
